<compile_context>
chip_gen: v5e
topology: v5e:2x2
jax: 0.10.0
libtpu: 0.0.40
codegen_flags: <defaults>
</compile_context>

<pallas_src>
import functools

import jax
import jax.numpy as jnp
from jax.experimental import pallas as pl
from jax.experimental.pallas import tpu as pltpu


def _elu(v):
    # ELU(alpha=1): v if v > 0 else exp(v) - 1   (clamp keeps exp finite)
    return jnp.where(v > 0, v, jnp.exp(jnp.minimum(v, 0.0)) - 1.0)


def _basic_block_kernel(x_ref, w1_ref, b1_ref, w2_ref, b2_ref, o_ref, *,
                        img_rows, img_w):
    """One grid step processes a block of whole images flattened to (M, C).

    img_rows = H*W (pixels per image), img_w = W (pixels per row).
    conv(2x2, pad=1, cropped to HxW):
        out[i, j] = sum_{ki,kj} x[i+ki-1, j+kj-1] @ w[ki, kj]
    realized as one (M, 4C) @ (4C, cout) matmul; shifted taps come from
    pltpu.roll on the flattened-pixel (sublane) axis, with the wrapped first
    row / first column zero-masked.  Rolls wrap across image boundaries
    inside a multi-image block, but the per-image masks (pix % img_rows)
    zero exactly those wrapped rows, so the block may hold several images.
    """
    x = x_ref[...].astype(jnp.float32)                        # (M, C)
    M, C = x.shape

    # Per-pixel boundary masks at (M, 1); broadcast over the lane axis.
    pix = jax.lax.broadcasted_iota(jnp.int32, (M, 1), 0)      # flat pixel id
    not_col0 = (pix % img_w) != 0          # j >= 1: left neighbour valid
    not_row0 = (pix % img_rows) >= img_w   # i >= 1: upper neighbour valid
    m_left = not_col0.astype(jnp.float32)                      # tap (1,0)
    m_up = not_row0.astype(jnp.float32)                        # tap (0,1)
    m_diag = jnp.logical_and(not_col0, not_row0).astype(jnp.float32)  # (0,0)

    def im2col(a):
        # a: (M, C) f32 -> (M, 4C) bf16.  Tap order k = 2*ki + kj matches the
        # host-side weight reshape HWIO (2,2,cin,cout) -> (4*cin, cout).
        t11 = a                                                  # (1,1)
        t10 = pltpu.roll(a, 1, axis=0) * m_left                  # (1,0)
        t01 = pltpu.roll(a, img_w, axis=0) * m_up                # (0,1)
        t00 = pltpu.roll(a, img_w + 1, axis=0) * m_diag          # (0,0)
        cols = jnp.concatenate([t00, t01, t10, t11], axis=1)     # (M, 4C)
        return cols.astype(jnp.bfloat16)

    # out = elu(x)   (inplace ELU -> residual below uses elu(x), not raw x)
    h = _elu(x)

    # conv1 (2x2, pad=1, cropped) + bias, then ELU.  Single K=128 matmul.
    c1 = jnp.dot(im2col(h), w1_ref[...],
                 preferred_element_type=jnp.float32) + b1_ref[...]
    c1 = _elu(c1)

    # conv2: one K=128, N=2C matmul; split the gated-activation halves with a
    # cheap lane slice (much cheaper than a second full MXU pass).
    g = jnp.dot(im2col(c1), w2_ref[...],
                preferred_element_type=jnp.float32) + b2_ref[...]
    g1 = g[:, :C]
    g2 = g[:, C:]

    # gated activation: exp and reciprocal both go to the EUP slot.
    gate = pl.reciprocal(1.0 + jnp.exp(-g2), approx=True)
    out = h + g1 * gate                     # residual uses elu(x) (see NOTE)
    o_ref[...] = out.astype(o_ref.dtype)


def _choose_images_per_block(B, HW, target_rows=4096):
    """Whole-image M tiling.

    Pick the largest whole-image block with at most ~target_rows pixel rows
    that still leaves >= 2 grid steps (so the BlockSpec pipeline can overlap
    HBM DMA with compute and the grid can shard across TensorCores), subject
    to rows % 8 == 0 (sublane constraint) unless the block covers the whole
    array.  Falls back to folding everything into one block.
    """
    candidates = [d for d in range(1, B + 1)
                  if B % d == 0 and ((d * HW) % 8 == 0 or d == B)]
    good = [d for d in candidates if d * HW <= target_rows and B // d >= 2]
    if good:
        return max(good)
    multi = [d for d in candidates if B // d >= 2]
    if multi:
        return min(multi)
    return B


def basic_block(x_nchw, w1, b1, w2, b2, *, images_per_block=None):
    """x_nchw: (B, C, H, W) f32.  w: HWIO (2, 2, cin, cout), b: (cout,)."""
    B, C, H, W = x_nchw.shape
    HW = H * W
    if images_per_block is None:
        images_per_block = _choose_images_per_block(B, HW)
    nb = images_per_block
    assert B % nb == 0, "images_per_block must divide the batch"
    rows = nb * HW                        # matmul M per grid step
    grid = (B // nb,)

    # NCHW -> NHWC -> flatten pixels once in XLA (cheap layout op there):
    # channels on the lane axis, flattened pixels on the sublane axis.
    x2d = jnp.transpose(x_nchw, (0, 2, 3, 1)).reshape(B * HW, C)

    # im2col weights: HWIO (2,2,cin,cout) -> (4*cin, cout), bf16 for the MXU.
    w1f = w1.reshape(4 * C, C).astype(jnp.bfloat16)
    w2f = w2.reshape(4 * C, 2 * C).astype(jnp.bfloat16)
    b1r = b1.reshape(1, C).astype(jnp.float32)
    b2r = b2.reshape(1, 2 * C).astype(jnp.float32)

    kernel = functools.partial(_basic_block_kernel, img_rows=HW, img_w=W)

    # Advisory cost estimate for the XLA scheduler.
    m_total = B * HW
    flops = 2 * m_total * (4 * C) * C + 2 * m_total * (4 * C) * (2 * C)
    transcendentals = 3 * m_total * C            # elu(x), elu(c1), sigmoid
    bytes_accessed = (2 * m_total * C * x_nchw.dtype.itemsize
                      + (4 * C * C + 4 * C * 2 * C) * 2      # bf16 weights
                      + 3 * C * 4)                           # biases

    out2d = pl.pallas_call(
        kernel,
        out_shape=jax.ShapeDtypeStruct((m_total, C), x_nchw.dtype),
        grid_spec=pltpu.PrefetchScalarGridSpec(
            num_scalar_prefetch=0,
            grid=grid,
            in_specs=[
                pl.BlockSpec((rows, C), lambda b: (b, 0)),         # x block
                pl.BlockSpec((4 * C, C), lambda b: (0, 0)),        # w1
                pl.BlockSpec((1, C), lambda b: (0, 0)),            # b1
                pl.BlockSpec((4 * C, 2 * C), lambda b: (0, 0)),    # w2 (merged)
                pl.BlockSpec((1, 2 * C), lambda b: (0, 0)),        # b2
            ],
            out_specs=pl.BlockSpec((rows, C), lambda b: (b, 0)),
        ),
        compiler_params=pltpu.CompilerParams(
            dimension_semantics=("parallel",)),
        cost_estimate=pl.CostEstimate(flops=flops,
                                      transcendentals=transcendentals,
                                      bytes_accessed=bytes_accessed),
    )(x2d, w1f, b1r, w2f, b2r)

    return jnp.transpose(out2d.reshape(B, H, W, C), (0, 3, 1, 2))  # -> NCHW


def reference(x, w1, b1, w2, b2):
    """Pure-JAX reference with PyTorch semantics (NCHW, f32, HIGHEST prec)."""
    def conv(a, w, b):
        y = jax.lax.conv_general_dilated(
            a, w, window_strides=(1, 1), padding=((1, 1), (1, 1)),
            dimension_numbers=('NCHW', 'HWIO', 'NCHW'),
            precision=jax.lax.Precision.HIGHEST)
        y = y + b[None, :, None, None]
        return y[:, :, :a.shape[2], :a.shape[3]]

    C = x.shape[1]
    h = _elu(x)                      # inplace ELU mutates x in PyTorch
    y = conv(h, w1, b1)
    y = _elu(y)
    y = conv(y, w2, b2)
    y1, y2 = y[:, :C], y[:, C:]
    return h + y1 * jax.nn.sigmoid(y2)


if __name__ == "__main__":
    B, C, H, W = 2, 32, 16, 16       # hidden = 32, kernel = 2
    key = jax.random.PRNGKey(0)
    k1, k2, k3, k4, k5 = jax.random.split(key, 5)

    x = jax.random.normal(k1, (B, C, H, W), jnp.float32)
    w1 = jax.random.normal(k2, (2, 2, C, C), jnp.float32) * 0.1      # conv1 HWIO
    b1 = jax.random.normal(k3, (C,), jnp.float32) * 0.1
    w2 = jax.random.normal(k4, (2, 2, C, 2 * C), jnp.float32) * 0.1  # conv2 HWIO
    b2 = jax.random.normal(k5, (2 * C,), jnp.float32) * 0.1

    out = jax.block_until_ready(basic_block(x, w1, b1, w2, b2))

    ref = reference(x, w1, b1, w2, b2)
    err = float(jnp.max(jnp.abs(out - ref)))
    assert err < 5e-2, f"max abs error vs reference: {err}"
    print("KERNEL_OK")
</pallas_src>

<mosaic_0001>
module attributes {stable_mosaic.version = 11 : i64} {
  func.func @_basic_block_kernel(%arg0: i32, %arg1: memref<256x32xf32, #tpu.memory_space<vmem>>, %arg2: memref<128x32xbf16, #tpu.memory_space<vmem>>, %arg3: memref<1x32xf32, #tpu.memory_space<vmem>>, %arg4: memref<128x64xbf16, #tpu.memory_space<vmem>>, %arg5: memref<1x64xf32, #tpu.memory_space<vmem>>, %arg6: memref<256x32xf32, #tpu.memory_space<vmem>>) attributes {dimension_semantics = [#tpu.dimension_semantics<parallel>], iteration_bounds = array<i64: 2>, scalar_prefetch = 0 : i64, scratch_operands = 0 : i64, tpu.core_type = #tpu.core_type<tc>, window_params = [{transform_indices = @transform_0, window_bounds = array<i64: 256, 32>}, {pipeline_mode = #tpu.pipeline_mode<synchronous>, transform_indices = @transform_1, window_bounds = array<i64: 128, 32>}, {pipeline_mode = #tpu.pipeline_mode<synchronous>, transform_indices = @transform_2, window_bounds = array<i64: 1, 32>}, {pipeline_mode = #tpu.pipeline_mode<synchronous>, transform_indices = @transform_3, window_bounds = array<i64: 128, 64>}, {pipeline_mode = #tpu.pipeline_mode<synchronous>, transform_indices = @transform_4, window_bounds = array<i64: 1, 64>}, {transform_indices = @transform_5, window_bounds = array<i64: 256, 32>}]} {
    %c0 = arith.constant 0 : index
    %c0_0 = arith.constant 0 : index
    %0 = vector.load %arg1[%c0, %c0_0] : memref<256x32xf32, #tpu.memory_space<vmem>>, vector<256x32xf32>
    %1 = tpu.iota {dimensions = array<i32: 0>} : vector<256x1xi32>
    %c16_i32 = arith.constant 16 : i32
    %c0_i32 = arith.constant 0 : i32
    %2 = arith.cmpi eq, %c16_i32, %c0_i32 : i32
    %c1_i32 = arith.constant 1 : i32
    %3 = arith.select %2, %c1_i32, %c16_i32 : i32
    %4 = vector.broadcast %3 : i32 to vector<256x1xi32>
    %5 = arith.remsi %1, %4 : vector<256x1xi32>
    %c0_i32_1 = arith.constant 0 : i32
    %6 = vector.broadcast %c0_i32_1 : i32 to vector<256x1xi32>
    %7 = arith.cmpi ne, %5, %6 : vector<256x1xi32>
    %c0_i32_2 = arith.constant 0 : i32
    %8 = vector.broadcast %c0_i32_2 : i32 to vector<256x1xi32>
    %9 = arith.cmpi slt, %5, %8 : vector<256x1xi32>
    %c0_i32_3 = arith.constant 0 : i32
    %10 = arith.cmpi slt, %3, %c0_i32_3 : i32
    %11 = vector.broadcast %10 : i1 to vector<256x1xi1>
    %12 = vector.broadcast %11 : vector<256x1xi1> to vector<256x1xi1>
    %13 = arith.xori %9, %12 : vector<256x1xi1>
    %14 = arith.andi %13, %7 : vector<256x1xi1>
    %15 = vector.broadcast %3 : i32 to vector<256x1xi32>
    %16 = arith.addi %5, %15 : vector<256x1xi32>
    %17 = arith.select %14, %16, %5 : vector<256x1xi1>, vector<256x1xi32>
    %c0_i32_4 = arith.constant 0 : i32
    %18 = vector.broadcast %c0_i32_4 : i32 to vector<256x1xi32>
    %19 = arith.cmpi ne, %17, %18 : vector<256x1xi32>
    %c256_i32 = arith.constant 256 : i32
    %c0_i32_5 = arith.constant 0 : i32
    %20 = arith.cmpi eq, %c256_i32, %c0_i32_5 : i32
    %c1_i32_6 = arith.constant 1 : i32
    %21 = arith.select %20, %c1_i32_6, %c256_i32 : i32
    %22 = vector.broadcast %21 : i32 to vector<256x1xi32>
    %23 = arith.remsi %1, %22 : vector<256x1xi32>
    %c0_i32_7 = arith.constant 0 : i32
    %24 = vector.broadcast %c0_i32_7 : i32 to vector<256x1xi32>
    %25 = arith.cmpi ne, %23, %24 : vector<256x1xi32>
    %c0_i32_8 = arith.constant 0 : i32
    %26 = vector.broadcast %c0_i32_8 : i32 to vector<256x1xi32>
    %27 = arith.cmpi slt, %23, %26 : vector<256x1xi32>
    %c0_i32_9 = arith.constant 0 : i32
    %28 = arith.cmpi slt, %21, %c0_i32_9 : i32
    %29 = vector.broadcast %28 : i1 to vector<256x1xi1>
    %30 = vector.broadcast %29 : vector<256x1xi1> to vector<256x1xi1>
    %31 = arith.xori %27, %30 : vector<256x1xi1>
    %32 = arith.andi %31, %25 : vector<256x1xi1>
    %33 = vector.broadcast %21 : i32 to vector<256x1xi32>
    %34 = arith.addi %23, %33 : vector<256x1xi32>
    %35 = arith.select %32, %34, %23 : vector<256x1xi1>, vector<256x1xi32>
    %c16_i32_10 = arith.constant 16 : i32
    %36 = vector.broadcast %c16_i32_10 : i32 to vector<256x1xi32>
    %37 = arith.cmpi sge, %35, %36 : vector<256x1xi32>
    %38 = arith.extui %19 : vector<256x1xi1> to vector<256x1xi32>
    %39 = arith.sitofp %38 : vector<256x1xi32> to vector<256x1xf32>
    %40 = arith.extui %37 : vector<256x1xi1> to vector<256x1xi32>
    %41 = arith.sitofp %40 : vector<256x1xi32> to vector<256x1xf32>
    %42 = arith.andi %19, %37 : vector<256x1xi1>
    %43 = arith.extui %42 : vector<256x1xi1> to vector<256x1xi32>
    %44 = arith.sitofp %43 : vector<256x1xi32> to vector<256x1xf32>
    %cst = arith.constant 0.000000e+00 : f32
    %45 = vector.broadcast %cst : f32 to vector<256x32xf32>
    %46 = arith.cmpf ogt, %0, %45 : vector<256x32xf32>
    %cst_11 = arith.constant 0.000000e+00 : f32
    %47 = vector.broadcast %cst_11 : f32 to vector<256x32xf32>
    %48 = arith.minimumf %0, %47 : vector<256x32xf32>
    %49 = math.exp %48 : vector<256x32xf32>
    %cst_12 = arith.constant 1.000000e+00 : f32
    %50 = vector.broadcast %cst_12 : f32 to vector<256x32xf32>
    %51 = arith.subf %49, %50 : vector<256x32xf32>
    %52 = arith.select %46, %0, %51 : vector<256x32xi1>, vector<256x32xf32>
    %c1_i32_13 = arith.constant 1 : i32
    %53 = tpu.dynamic_rotate %52 by %c1_i32_13 dim 0 : vector<256x32xf32>, i32 -> vector<256x32xf32>
    %54 = vector.broadcast %39 : vector<256x1xf32> to vector<256x32xf32>
    %55 = arith.mulf %53, %54 : vector<256x32xf32>
    %c16_i32_14 = arith.constant 16 : i32
    %56 = tpu.dynamic_rotate %52 by %c16_i32_14 dim 0 : vector<256x32xf32>, i32 -> vector<256x32xf32>
    %57 = vector.broadcast %41 : vector<256x1xf32> to vector<256x32xf32>
    %58 = arith.mulf %56, %57 : vector<256x32xf32>
    %c17_i32 = arith.constant 17 : i32
    %59 = tpu.dynamic_rotate %52 by %c17_i32 dim 0 : vector<256x32xf32>, i32 -> vector<256x32xf32>
    %60 = vector.broadcast %44 : vector<256x1xf32> to vector<256x32xf32>
    %61 = arith.mulf %59, %60 : vector<256x32xf32>
    %62 = tpu.concatenate %61, %58, %55, %52 in 1 : vector<256x32xf32>, vector<256x32xf32>, vector<256x32xf32>, vector<256x32xf32> -> vector<256x128xf32>
    %63 = arith.truncf %62 : vector<256x128xf32> to vector<256x128xbf16>
    %c0_15 = arith.constant 0 : index
    %c0_16 = arith.constant 0 : index
    %64 = vector.load %arg2[%c0_15, %c0_16] : memref<128x32xbf16, #tpu.memory_space<vmem>>, vector<128x32xbf16>
    %cst_17 = arith.constant dense<0.000000e+00> : vector<256x32xf32>
    %65 = tpu.matmul %63, %64, %cst_17 {dimension_numbers = #tpu.dot_dimension_numbers<[1], [0], [0], [1], [0, 0, 1, 1], [], []>} : vector<256x128xbf16>, vector<128x32xbf16>, vector<256x32xf32> -> vector<256x32xf32>
    %c0_18 = arith.constant 0 : index
    %c0_19 = arith.constant 0 : index
    %66 = vector.load %arg3[%c0_18, %c0_19] : memref<1x32xf32, #tpu.memory_space<vmem>>, vector<1x32xf32>
    %67 = vector.broadcast %66 : vector<1x32xf32> to vector<256x32xf32>
    %68 = arith.addf %65, %67 : vector<256x32xf32>
    %cst_20 = arith.constant 0.000000e+00 : f32
    %69 = vector.broadcast %cst_20 : f32 to vector<256x32xf32>
    %70 = arith.cmpf ogt, %68, %69 : vector<256x32xf32>
    %cst_21 = arith.constant 0.000000e+00 : f32
    %71 = vector.broadcast %cst_21 : f32 to vector<256x32xf32>
    %72 = arith.minimumf %68, %71 : vector<256x32xf32>
    %73 = math.exp %72 : vector<256x32xf32>
    %cst_22 = arith.constant 1.000000e+00 : f32
    %74 = vector.broadcast %cst_22 : f32 to vector<256x32xf32>
    %75 = arith.subf %73, %74 : vector<256x32xf32>
    %76 = arith.select %70, %68, %75 : vector<256x32xi1>, vector<256x32xf32>
    %c1_i32_23 = arith.constant 1 : i32
    %77 = tpu.dynamic_rotate %76 by %c1_i32_23 dim 0 : vector<256x32xf32>, i32 -> vector<256x32xf32>
    %78 = vector.broadcast %39 : vector<256x1xf32> to vector<256x32xf32>
    %79 = arith.mulf %77, %78 : vector<256x32xf32>
    %c16_i32_24 = arith.constant 16 : i32
    %80 = tpu.dynamic_rotate %76 by %c16_i32_24 dim 0 : vector<256x32xf32>, i32 -> vector<256x32xf32>
    %81 = vector.broadcast %41 : vector<256x1xf32> to vector<256x32xf32>
    %82 = arith.mulf %80, %81 : vector<256x32xf32>
    %c17_i32_25 = arith.constant 17 : i32
    %83 = tpu.dynamic_rotate %76 by %c17_i32_25 dim 0 : vector<256x32xf32>, i32 -> vector<256x32xf32>
    %84 = vector.broadcast %44 : vector<256x1xf32> to vector<256x32xf32>
    %85 = arith.mulf %83, %84 : vector<256x32xf32>
    %86 = tpu.concatenate %85, %82, %79, %76 in 1 : vector<256x32xf32>, vector<256x32xf32>, vector<256x32xf32>, vector<256x32xf32> -> vector<256x128xf32>
    %87 = arith.truncf %86 : vector<256x128xf32> to vector<256x128xbf16>
    %c0_26 = arith.constant 0 : index
    %c0_27 = arith.constant 0 : index
    %88 = vector.load %arg4[%c0_26, %c0_27] : memref<128x64xbf16, #tpu.memory_space<vmem>>, vector<128x64xbf16>
    %cst_28 = arith.constant dense<0.000000e+00> : vector<256x64xf32>
    %89 = tpu.matmul %87, %88, %cst_28 {dimension_numbers = #tpu.dot_dimension_numbers<[1], [0], [0], [1], [0, 0, 1, 1], [], []>} : vector<256x128xbf16>, vector<128x64xbf16>, vector<256x64xf32> -> vector<256x64xf32>
    %c0_29 = arith.constant 0 : index
    %c0_30 = arith.constant 0 : index
    %90 = vector.load %arg5[%c0_29, %c0_30] : memref<1x64xf32, #tpu.memory_space<vmem>>, vector<1x64xf32>
    %91 = vector.broadcast %90 : vector<1x64xf32> to vector<256x64xf32>
    %92 = arith.addf %89, %91 : vector<256x64xf32>
    %93 = vector.extract_strided_slice %92 {offsets = [0, 0], sizes = [256, 32], strides = [1, 1]} : vector<256x64xf32> to vector<256x32xf32>
    %94 = vector.extract_strided_slice %92 {offsets = [0, 32], sizes = [256, 32], strides = [1, 1]} : vector<256x64xf32> to vector<256x32xf32>
    %cst_31 = arith.constant 0.000000e+00 : f32
    %95 = vector.broadcast %cst_31 : f32 to vector<256x32xf32>
    %96 = arith.subf %95, %94 : vector<256x32xf32>
    %97 = math.exp %96 : vector<256x32xf32>
    %cst_32 = arith.constant 1.000000e+00 : f32
    %98 = vector.broadcast %cst_32 : f32 to vector<256x32xf32>
    %99 = arith.addf %98, %97 : vector<256x32xf32>
    %100 = tpu.reciprocal %99 {approx = true} : vector<256x32xf32> -> vector<256x32xf32>
    %101 = arith.mulf %93, %100 : vector<256x32xf32>
    %102 = arith.addf %52, %101 : vector<256x32xf32>
    %c0_33 = arith.constant 0 : index
    %c0_34 = arith.constant 0 : index
    %103 = vector.load %arg6[%c0_33, %c0_34] : memref<256x32xf32, #tpu.memory_space<vmem>>, vector<256x32xf32>
    tpu.vector_store %arg6[%c0_33, %c0_34], %102 {strides = array<i32>} : memref<256x32xf32, #tpu.memory_space<vmem>>, vector<256x32xf32>,
    return
  }
  func.func @transform_0(%arg0: i32) -> (i32, i32) {
    %c0_i32 = arith.constant 0 : i32
    %c0_i32_0 = arith.constant 0 : i32
    return %arg0, %c0_i32 : i32, i32
  }
  func.func @transform_1(%arg0: i32) -> (i32, i32) {
    %c0_i32 = arith.constant 0 : i32
    %c0_i32_0 = arith.constant 0 : i32
    %c0_i32_1 = arith.constant 0 : i32
    return %c0_i32, %c0_i32_0 : i32, i32
  }
  func.func @transform_2(%arg0: i32) -> (i32, i32) {
    %c0_i32 = arith.constant 0 : i32
    %c0_i32_0 = arith.constant 0 : i32
    %c0_i32_1 = arith.constant 0 : i32
    return %c0_i32, %c0_i32_0 : i32, i32
  }
  func.func @transform_3(%arg0: i32) -> (i32, i32) {
    %c0_i32 = arith.constant 0 : i32
    %c0_i32_0 = arith.constant 0 : i32
    %c0_i32_1 = arith.constant 0 : i32
    return %c0_i32, %c0_i32_0 : i32, i32
  }
  func.func @transform_4(%arg0: i32) -> (i32, i32) {
    %c0_i32 = arith.constant 0 : i32
    %c0_i32_0 = arith.constant 0 : i32
    %c0_i32_1 = arith.constant 0 : i32
    return %c0_i32, %c0_i32_0 : i32, i32
  }
  func.func @transform_5(%arg0: i32) -> (i32, i32) {
    %c0_i32 = arith.constant 0 : i32
    %c0_i32_0 = arith.constant 0 : i32
    return %arg0, %c0_i32 : i32, i32
  }
}

</mosaic_0001>

<llo_original>
// kernel: tpu_custom_call.1
$region0: #{tpu_custom_call.1}
  #allocation0 [shape = 'u32[]', space=smem, size = 0x4, offset = 0x4, fixed_abs, tag = 'smem constant byte address 0x4 - core index']
  #allocation1 [shape = 'u32[72,128]{1,0:T(1,128)}', space=vmem, size = 0x9000, scoped, tag = 'internal scratch']
  %s0 = inlined_call_operand.vmem [shape: f32[512,32], index: 0, kind: input, shape index: {}]
  %s1 = inlined_call_operand.vmem [shape: bf16[128,32], index: 1, kind: input, shape index: {}]
  %s2 = inlined_call_operand.vmem [shape: f32[1,32], index: 2, kind: input, shape index: {}]
  %s3 = inlined_call_operand.vmem [shape: bf16[128,64], index: 3, kind: input, shape index: {}]
  %s4 = inlined_call_operand.vmem [shape: f32[1,64], index: 4, kind: input, shape index: {}]
  %s5 = inlined_call_operand.vmem [shape: f32[512,32], index: 5, kind: output, shape index: {}]
  %s6 = sld [smem:[#allocation0]]
  $region53: #{tpu_custom_call.1} parent=0
    _
  %s8 = ssub.s32 1, %s6
  %s9 = scalar_select 0, %s8, %s6
  loop: start=0, step=1, limit=4
  $region2: #{tpu_custom_call.1} parent=0 // loop_pre_header
    _
  $region3: #{tpu_custom_call.1} parent=0 // loop_header
    %s11 = sphi 0, %s15
    %p12 = scmp.ge.s32.totalorder %s11, 4
    %s21 = sphi 0, %s23
    %s24 = sphi 0, %s21
    %s25 = sphi 0, %s24
    %s41 = sphi 0, %s25
    %s45 = sphi 0, %s45
    %s47 = sphi 0, %s45
    %s48 = sphi 0, %s47
    %s62 = sphi 0, %s48
    %s66 = sphi 0, %s66
    %s68 = sphi 0, %s66
    %s69 = sphi 0, %s68
    %s83 = sphi 0, %s69
    %s87 = sphi 0, %s87
    %s89 = sphi 0, %s87
    %s90 = sphi 0, %s89
    %s104 = sphi 0, %s90
    %s108 = sphi 0, %s108
    %s110 = sphi 0, %s108
    %s111 = sphi 0, %s110
    %s125 = sphi 0, %s111
    %s131 = sphi 0, %s133
    %s134 = sphi 0, %s131
    %s135 = sphi 0, %s134
    %s151 = sphi 0, %s135
  $region4: #{tpu_custom_call.1} parent=0 // loop_header_branch
    %14 = sbr.rel (%p12) target = $region8
  $region5: #{tpu_custom_call.1} parent=0 // loop_body
    %s16 = ssub.s32 %s11, 1
    %s17 = ssub.s32 %s11, 2
    %s18 = sadd.s32 %s11, 1
    %s19 = ssub.s32 %s11, %s18
    %p20 = scmp.eq.s32.totalorder %s19, 0
    %s22 = sadd.s32 %s21, 1
    %s23 = scalar_select %p20, %s21, %s22
    %p26 = pneg %p20
    %p27 = scmp.eq.s32.totalorder %s11, 1
    %p28 = por %p26, %p27
    %p29 = scmp.ne.s32.totalorder %s21, %s24
    %p30 = scmp.eq.s32.totalorder %s11, 0
    %p31 = por %p29, %p30
    %p32 = scmp.ne.s32.totalorder %s21, %s24
    %p33 = scmp.eq.s32.totalorder %s16, 1
    %p34 = por %p32, %p33
    %p35 = scmp.ne.s32.totalorder %s24, %s25
    %p36 = scmp.eq.s32.totalorder %s16, 0
    %p37 = por %p35, %p36
    %p38 = scmp.ne.s32.totalorder %s24, %s25
    %p39 = scmp.eq.s32.totalorder %s17, 1
    %p40 = por %p38, %p39
    %p42 = scmp.ne.s32.totalorder %s25, %s41
    %p43 = scmp.eq.s32.totalorder %s17, 0
    %p44 = por %p42, %p43
    %s46 = sadd.s32 %s45, 1
    %p49 = scmp.eq.s32.totalorder %s11, 1
    %p50 = scmp.ne.s32.totalorder %s45, %s47
    %p51 = scmp.eq.s32.totalorder %s11, 0
    %p52 = por %p50, %p51
    %p53 = scmp.ne.s32.totalorder %s45, %s47
    %p54 = scmp.eq.s32.totalorder %s16, 1
    %p55 = por %p53, %p54
    %p56 = scmp.ne.s32.totalorder %s47, %s48
    %p57 = scmp.eq.s32.totalorder %s16, 0
    %p58 = por %p56, %p57
    %p59 = scmp.ne.s32.totalorder %s47, %s48
    %p60 = scmp.eq.s32.totalorder %s17, 1
    %p61 = por %p59, %p60
    %p63 = scmp.ne.s32.totalorder %s48, %s62
    %p64 = scmp.eq.s32.totalorder %s17, 0
    %p65 = por %p63, %p64
    %s67 = sadd.s32 %s66, 1
    %p70 = scmp.eq.s32.totalorder %s11, 1
    %p71 = scmp.ne.s32.totalorder %s66, %s68
    %p72 = scmp.eq.s32.totalorder %s11, 0
    %p73 = por %p71, %p72
    %p74 = scmp.ne.s32.totalorder %s66, %s68
    %p75 = scmp.eq.s32.totalorder %s16, 1
    %p76 = por %p74, %p75
    %p77 = scmp.ne.s32.totalorder %s68, %s69
    %p78 = scmp.eq.s32.totalorder %s16, 0
    %p79 = por %p77, %p78
    %p80 = scmp.ne.s32.totalorder %s68, %s69
    %p81 = scmp.eq.s32.totalorder %s17, 1
    %p82 = por %p80, %p81
    %p84 = scmp.ne.s32.totalorder %s69, %s83
    %p85 = scmp.eq.s32.totalorder %s17, 0
    %p86 = por %p84, %p85
    %s88 = sadd.s32 %s87, 1
    %p91 = scmp.eq.s32.totalorder %s11, 1
    %p92 = scmp.ne.s32.totalorder %s87, %s89
    %p93 = scmp.eq.s32.totalorder %s11, 0
    %p94 = por %p92, %p93
    %p95 = scmp.ne.s32.totalorder %s87, %s89
    %p96 = scmp.eq.s32.totalorder %s16, 1
    %p97 = por %p95, %p96
    %p98 = scmp.ne.s32.totalorder %s89, %s90
    %p99 = scmp.eq.s32.totalorder %s16, 0
    %p100 = por %p98, %p99
    %p101 = scmp.ne.s32.totalorder %s89, %s90
    %p102 = scmp.eq.s32.totalorder %s17, 1
    %p103 = por %p101, %p102
    %p105 = scmp.ne.s32.totalorder %s90, %s104
    %p106 = scmp.eq.s32.totalorder %s17, 0
    %p107 = por %p105, %p106
    %s109 = sadd.s32 %s108, 1
    %p112 = scmp.eq.s32.totalorder %s11, 1
    %p113 = scmp.ne.s32.totalorder %s108, %s110
    %p114 = scmp.eq.s32.totalorder %s11, 0
    %p115 = por %p113, %p114
    %p116 = scmp.ne.s32.totalorder %s108, %s110
    %p117 = scmp.eq.s32.totalorder %s16, 1
    %p118 = por %p116, %p117
    %p119 = scmp.ne.s32.totalorder %s110, %s111
    %p120 = scmp.eq.s32.totalorder %s16, 0
    %p121 = por %p119, %p120
    %p122 = scmp.ne.s32.totalorder %s110, %s111
    %p123 = scmp.eq.s32.totalorder %s17, 1
    %p124 = por %p122, %p123
    %p126 = scmp.ne.s32.totalorder %s111, %s125
    %p127 = scmp.eq.s32.totalorder %s17, 0
    %p128 = por %p126, %p127
    %s129 = ssub.s32 %s11, %s18
    %p130 = scmp.eq.s32.totalorder %s129, 0
    %s132 = sadd.s32 %s131, 1
    %s133 = scalar_select %p130, %s131, %s132
    %p136 = pneg %p130
    %p137 = scmp.eq.s32.totalorder %s11, 1
    %p138 = por %p136, %p137
    %p139 = scmp.ne.s32.totalorder %s131, %s134
    %p140 = scmp.eq.s32.totalorder %s11, 0
    %p141 = por %p139, %p140
    %p142 = scmp.ne.s32.totalorder %s131, %s134
    %p143 = scmp.eq.s32.totalorder %s16, 1
    %p144 = por %p142, %p143
    %p145 = scmp.ne.s32.totalorder %s134, %s135
    %p146 = scmp.eq.s32.totalorder %s16, 0
    %p147 = por %p145, %p146
    %p148 = scmp.ne.s32.totalorder %s134, %s135
    %p149 = scmp.eq.s32.totalorder %s17, 1
    %p150 = por %p148, %p149
    %p152 = scmp.ne.s32.totalorder %s135, %s151
    %p153 = scmp.eq.s32.totalorder %s17, 0
    %p154 = por %p152, %p153
    %p155 = scmp.le.s32.totalorder 1, %s11
    %p156 = scmp.lt.s32.totalorder %s11, 3
    %p157 = pnand %p155, %p156
    %p158 = pneg %p157
    // Predicated region
    $region9: #{tpu_custom_call.1} parent=5 // pred_check
      _
    $region10: #{tpu_custom_call.1} parent=5 // pred_check_branch
      %160 = sbr.rel (%p157) target = $region12
    $region11: #{tpu_custom_call.1} parent=5 // pred_region
      %s161 = ssub.s32 %s11, 1
      // Predicated region
      $region13: #{tpu_custom_call.1} parent=11 // pred_check
        %p162 = pneg %p58
      $region14: #{tpu_custom_call.1} parent=11 // pred_check_branch
        %164 = sbr.rel (%p162) target = $region16
      $region15: #{tpu_custom_call.1} parent=11 // pred_region
        _
      $region16: #{tpu_custom_call.1} parent=11 // pred_fallthru
        _
      // Predicated region
      $region17: #{tpu_custom_call.1} parent=11 // pred_check
        %p165 = pneg %p79
      $region18: #{tpu_custom_call.1} parent=11 // pred_check_branch
        %167 = sbr.rel (%p165) target = $region20
      $region19: #{tpu_custom_call.1} parent=11 // pred_region
        _
      $region20: #{tpu_custom_call.1} parent=11 // pred_fallthru
        _
      // Predicated region
      $region21: #{tpu_custom_call.1} parent=11 // pred_check
        %p168 = pneg %p100
      $region22: #{tpu_custom_call.1} parent=11 // pred_check_branch
        %170 = sbr.rel (%p168) target = $region24
      $region23: #{tpu_custom_call.1} parent=11 // pred_region
        _
      $region24: #{tpu_custom_call.1} parent=11 // pred_fallthru
        _
      // Predicated region
      $region25: #{tpu_custom_call.1} parent=11 // pred_check
        %p171 = pneg %p121
      $region26: #{tpu_custom_call.1} parent=11 // pred_check_branch
        %173 = sbr.rel (%p171) target = $region28
      $region27: #{tpu_custom_call.1} parent=11 // pred_region
        _
      $region28: #{tpu_custom_call.1} parent=11 // pred_fallthru
        _
    $region12: #{tpu_custom_call.1} parent=5 // pred_fallthru
      _
    %p174 = scmp.lt.s32.totalorder %s11, 2
    // Predicated region
    $region29: #{tpu_custom_call.1} parent=5 // pred_check
      %p175 = pneg %p174
    $region30: #{tpu_custom_call.1} parent=5 // pred_check_branch
      %177 = sbr.rel (%p175) target = $region32
    $region31: #{tpu_custom_call.1} parent=5 // pred_region
      // Predicated region
      $region33: #{tpu_custom_call.1} parent=31 // pred_check
        %p178 = pneg %p31
      $region34: #{tpu_custom_call.1} parent=31 // pred_check_branch
        %180 = sbr.rel (%p178) target = $region36
      $region35: #{tpu_custom_call.1} parent=31 // pred_region
        %s181 = smul.u32 32, %s11
        %p182 = scmp.lt.s32.totalorder %s181, 63
        %s183 = scalar_select %p182, %s181, 63
        %s184 = smul.addr %s183, 8
        %s185 = scalar_lea.vmem %s0, %s184
        %s186 = smul.u32 32, %s11
      $region36: #{tpu_custom_call.1} parent=31 // pred_fallthru
        _
    $region32: #{tpu_custom_call.1} parent=5 // pred_fallthru
      _
    %p187 = scmp.le.s32.totalorder 1, %s11
    %p188 = scmp.lt.s32.totalorder %s11, 3
    %p189 = pnand %p187, %p188
    %p190 = pneg %p189
    // Predicated region
    $region37: #{tpu_custom_call.1} parent=5 // pred_check
      _
    $region38: #{tpu_custom_call.1} parent=5 // pred_check_branch
      %192 = sbr.rel (%p189) target = $region40
    $region39: #{tpu_custom_call.1} parent=5 // pred_region
      %s193 = ssub.s32 %s11, 1
      %s194 = smul.u32 32, %s16
      %p195 = scmp.lt.s32.totalorder %s194, 63
      %s196 = scalar_select %p195, %s194, 63
      %s197 = smul.addr %s196, 8
      %s198 = scalar_lea.vmem %s0, %s197
      %p199 = pneg %p37
      %p200 = pneg %p34
      %p201 = pneg %p58
      %p202 = pneg %p55
      %p203 = pneg %p79
      %p204 = pneg %p76
      %p205 = pneg %p100
      %p206 = pneg %p97
      %p207 = pneg %p121
      %p208 = pneg %p118
      %p209 = pneg %p147
      %p210 = pneg %p144
      %s211 = smul.u32 32, %s16
      %p212 = scmp.lt.s32.totalorder %s211, 63
      %s213 = scalar_select %p212, %s211, 63
      %s214 = smul.addr %s213, 8
      %s215 = scalar_lea.vmem %s5, %s214
      %s216 = smul.u32 32, %s16
      %p217 = scmp.lt.s32.totalorder %s216, 63
      %s218 = scalar_select %p217, %s216, 63
      %s219 = smul.addr %s218, 8
      %s220 = scalar_lea.vmem %s0, %s219
      %s221 = smul.u32 32, %s16
      %s222 = smul.u32 32, %s16
      %p223 = scmp.lt.s32.totalorder %s222, 63
      %s224 = scalar_select %p223, %s222, 63
      %s225 = smul.addr %s224, 8
      %s226 = scalar_lea.vmem %s5, %s225
      %s227 = smul.u32 32, %s16
      %v228 = vld [vmem:[%s220] sm:$0xff]
      %v229 = vld [vmem:[%s220 + $0x8] sm:$0xff]
      %v230 = vld [vmem:[%s220 + $0x10] sm:$0xff]
      %v231 = vld [vmem:[%s220 + $0x18] sm:$0xff]
      %v232 = vld [vmem:[%s220 + $0x20] sm:$0xff]
      %v233 = vld [vmem:[%s220 + $0x28] sm:$0xff]
      %v234 = vld [vmem:[%s220 + $0x30] sm:$0xff]
      %v235 = vld [vmem:[%s220 + $0x38] sm:$0xff]
      %v236 = vld [vmem:[%s220 + $0x40] sm:$0xff]
      %v237 = vld [vmem:[%s220 + $0x48] sm:$0xff]
      %v238 = vld [vmem:[%s220 + $0x50] sm:$0xff]
      %v239 = vld [vmem:[%s220 + $0x58] sm:$0xff]
      %v240 = vld [vmem:[%s220 + $0x60] sm:$0xff]
      %v241 = vld [vmem:[%s220 + $0x68] sm:$0xff]
      %v242 = vld [vmem:[%s220 + $0x70] sm:$0xff]
      %v243 = vld [vmem:[%s220 + $0x78] sm:$0xff]
      %v244 = vld [vmem:[%s220 + $0x80] sm:$0xff]
      %v245 = vld [vmem:[%s220 + $0x88] sm:$0xff]
      %v246 = vld [vmem:[%s220 + $0x90] sm:$0xff]
      %v247 = vld [vmem:[%s220 + $0x98] sm:$0xff]
      %v248 = vld [vmem:[%s220 + $0xa0] sm:$0xff]
      %v249 = vld [vmem:[%s220 + $0xa8] sm:$0xff]
      %v250 = vld [vmem:[%s220 + $0xb0] sm:$0xff]
      %v251 = vld [vmem:[%s220 + $0xb8] sm:$0xff]
      %v252 = vld [vmem:[%s220 + $0xc0] sm:$0xff]
      %v253 = vld [vmem:[%s220 + $0xc8] sm:$0xff]
      %v254 = vld [vmem:[%s220 + $0xd0] sm:$0xff]
      %v255 = vld [vmem:[%s220 + $0xd8] sm:$0xff]
      %v256 = vld [vmem:[%s220 + $0xe0] sm:$0xff]
      %v257 = vld [vmem:[%s220 + $0xe8] sm:$0xff]
      %v258 = vld [vmem:[%s220 + $0xf0] sm:$0xff]
      %v259 = vld [vmem:[%s220 + $0xf8] sm:$0xff]
      %v260 = vlaneseq
      %v261 = vshrl.u32 %v260, 7
      %v262 = vadd.s32 %v261, 8
      %v263 = vadd.s32 %v261, 16
      %v264 = vadd.s32 %v261, 24
      %v265 = vadd.s32 %v261, 32
      %v266 = vadd.s32 %v261, 40
      %v267 = vadd.s32 %v261, 48
      %v268 = vadd.s32 %v261, 56
      %v269 = vadd.s32 %v261, 64
      %v270 = vadd.s32 %v261, 72
      %v271 = vadd.s32 %v261, 80
      %v272 = vadd.s32 %v261, 88
      %v273 = vadd.s32 %v261, 96
      %v274 = vadd.s32 %v261, 104
      %v275 = vadd.s32 %v261, 112
      %v276 = vadd.s32 %v261, 120
      %v277 = vadd.s32 %v261, 128
      %v278 = vadd.s32 %v261, 136
      %v279 = vadd.s32 %v261, 144
      %v280 = vadd.s32 %v261, 152
      %v281 = vadd.s32 %v261, 160
      %v282 = vadd.s32 %v261, 168
      %v283 = vadd.s32 %v261, 176
      %v284 = vadd.s32 %v261, 184
      %v285 = vadd.s32 %v261, 192
      %v286 = vadd.s32 %v261, 200
      %v287 = vadd.s32 %v261, 208
      %v288 = vadd.s32 %v261, 216
      %v289 = vadd.s32 %v261, 224
      %v290 = vadd.s32 %v261, 232
      %v291 = vadd.s32 %v261, 240
      %v292 = vadd.s32 %v261, 248
      %vm293 = vcmp.lt.s32.totalorder %v261, 0
      %v294 = vsub.s32 0, %v261
      %v295 = vsel %vm293, %v294, %v261
      %v296 = vshrl.u32 %v295, 4
      %v297 = vand.u32 %v295, 15
      %v298 = vsub.s32 0, %v297
      %v299 = vsel %vm293, %v298, %v297
      %vm300 = vcmp.lt.s32.totalorder %v262, 0
      %v301 = vsub.s32 0, %v262
      %v302 = vsel %vm300, %v301, %v262
      %v303 = vshrl.u32 %v302, 4
      %v304 = vand.u32 %v302, 15
      %v305 = vsub.s32 0, %v304
      %v306 = vsel %vm300, %v305, %v304
      %vm307 = vcmp.lt.s32.totalorder %v263, 0
      %v308 = vsub.s32 0, %v263
      %v309 = vsel %vm307, %v308, %v263
      %v310 = vshrl.u32 %v309, 4
      %v311 = vand.u32 %v309, 15
      %v312 = vsub.s32 0, %v311
      %v313 = vsel %vm307, %v312, %v311
      %vm314 = vcmp.lt.s32.totalorder %v264, 0
      %v315 = vsub.s32 0, %v264
      %v316 = vsel %vm314, %v315, %v264
      %v317 = vshrl.u32 %v316, 4
      %v318 = vand.u32 %v316, 15
      %v319 = vsub.s32 0, %v318
      %v320 = vsel %vm314, %v319, %v318
      %vm321 = vcmp.lt.s32.totalorder %v265, 0
      %v322 = vsub.s32 0, %v265
      %v323 = vsel %vm321, %v322, %v265
      %v324 = vshrl.u32 %v323, 4
      %v325 = vand.u32 %v323, 15
      %v326 = vsub.s32 0, %v325
      %v327 = vsel %vm321, %v326, %v325
      %vm328 = vcmp.lt.s32.totalorder %v266, 0
      %v329 = vsub.s32 0, %v266
      %v330 = vsel %vm328, %v329, %v266
      %v331 = vshrl.u32 %v330, 4
      %v332 = vand.u32 %v330, 15
      %v333 = vsub.s32 0, %v332
      %v334 = vsel %vm328, %v333, %v332
      %vm335 = vcmp.lt.s32.totalorder %v267, 0
      %v336 = vsub.s32 0, %v267
      %v337 = vsel %vm335, %v336, %v267
      %v338 = vshrl.u32 %v337, 4
      %v339 = vand.u32 %v337, 15
      %v340 = vsub.s32 0, %v339
      %v341 = vsel %vm335, %v340, %v339
      %vm342 = vcmp.lt.s32.totalorder %v268, 0
      %v343 = vsub.s32 0, %v268
      %v344 = vsel %vm342, %v343, %v268
      %v345 = vshrl.u32 %v344, 4
      %v346 = vand.u32 %v344, 15
      %v347 = vsub.s32 0, %v346
      %v348 = vsel %vm342, %v347, %v346
      %vm349 = vcmp.lt.s32.totalorder %v269, 0
      %v350 = vsub.s32 0, %v269
      %v351 = vsel %vm349, %v350, %v269
      %v352 = vshrl.u32 %v351, 4
      %v353 = vand.u32 %v351, 15
      %v354 = vsub.s32 0, %v353
      %v355 = vsel %vm349, %v354, %v353
      %vm356 = vcmp.lt.s32.totalorder %v270, 0
      %v357 = vsub.s32 0, %v270
      %v358 = vsel %vm356, %v357, %v270
      %v359 = vshrl.u32 %v358, 4
      %v360 = vand.u32 %v358, 15
      %v361 = vsub.s32 0, %v360
      %v362 = vsel %vm356, %v361, %v360
      %vm363 = vcmp.lt.s32.totalorder %v271, 0
      %v364 = vsub.s32 0, %v271
      %v365 = vsel %vm363, %v364, %v271
      %v366 = vshrl.u32 %v365, 4
      %v367 = vand.u32 %v365, 15
      %v368 = vsub.s32 0, %v367
      %v369 = vsel %vm363, %v368, %v367
      %vm370 = vcmp.lt.s32.totalorder %v272, 0
      %v371 = vsub.s32 0, %v272
      %v372 = vsel %vm370, %v371, %v272
      %v373 = vshrl.u32 %v372, 4
      %v374 = vand.u32 %v372, 15
      %v375 = vsub.s32 0, %v374
      %v376 = vsel %vm370, %v375, %v374
      %vm377 = vcmp.lt.s32.totalorder %v273, 0
      %v378 = vsub.s32 0, %v273
      %v379 = vsel %vm377, %v378, %v273
      %v380 = vshrl.u32 %v379, 4
      %v381 = vand.u32 %v379, 15
      %v382 = vsub.s32 0, %v381
      %v383 = vsel %vm377, %v382, %v381
      %vm384 = vcmp.lt.s32.totalorder %v274, 0
      %v385 = vsub.s32 0, %v274
      %v386 = vsel %vm384, %v385, %v274
      %v387 = vshrl.u32 %v386, 4
      %v388 = vand.u32 %v386, 15
      %v389 = vsub.s32 0, %v388
      %v390 = vsel %vm384, %v389, %v388
      %vm391 = vcmp.lt.s32.totalorder %v275, 0
      %v392 = vsub.s32 0, %v275
      %v393 = vsel %vm391, %v392, %v275
      %v394 = vshrl.u32 %v393, 4
      %v395 = vand.u32 %v393, 15
      %v396 = vsub.s32 0, %v395
      %v397 = vsel %vm391, %v396, %v395
      %vm398 = vcmp.lt.s32.totalorder %v276, 0
      %v399 = vsub.s32 0, %v276
      %v400 = vsel %vm398, %v399, %v276
      %v401 = vshrl.u32 %v400, 4
      %v402 = vand.u32 %v400, 15
      %v403 = vsub.s32 0, %v402
      %v404 = vsel %vm398, %v403, %v402
      %vm405 = vcmp.lt.s32.totalorder %v277, 0
      %v406 = vsub.s32 0, %v277
      %v407 = vsel %vm405, %v406, %v277
      %v408 = vshrl.u32 %v407, 4
      %v409 = vand.u32 %v407, 15
      %v410 = vsub.s32 0, %v409
      %v411 = vsel %vm405, %v410, %v409
      %vm412 = vcmp.lt.s32.totalorder %v278, 0
      %v413 = vsub.s32 0, %v278
      %v414 = vsel %vm412, %v413, %v278
      %v415 = vshrl.u32 %v414, 4
      %v416 = vand.u32 %v414, 15
      %v417 = vsub.s32 0, %v416
      %v418 = vsel %vm412, %v417, %v416
      %vm419 = vcmp.lt.s32.totalorder %v279, 0
      %v420 = vsub.s32 0, %v279
      %v421 = vsel %vm419, %v420, %v279
      %v422 = vshrl.u32 %v421, 4
      %v423 = vand.u32 %v421, 15
      %v424 = vsub.s32 0, %v423
      %v425 = vsel %vm419, %v424, %v423
      %vm426 = vcmp.lt.s32.totalorder %v280, 0
      %v427 = vsub.s32 0, %v280
      %v428 = vsel %vm426, %v427, %v280
      %v429 = vshrl.u32 %v428, 4
      %v430 = vand.u32 %v428, 15
      %v431 = vsub.s32 0, %v430
      %v432 = vsel %vm426, %v431, %v430
      %vm433 = vcmp.lt.s32.totalorder %v281, 0
      %v434 = vsub.s32 0, %v281
      %v435 = vsel %vm433, %v434, %v281
      %v436 = vshrl.u32 %v435, 4
      %v437 = vand.u32 %v435, 15
      %v438 = vsub.s32 0, %v437
      %v439 = vsel %vm433, %v438, %v437
      %vm440 = vcmp.lt.s32.totalorder %v282, 0
      %v441 = vsub.s32 0, %v282
      %v442 = vsel %vm440, %v441, %v282
      %v443 = vshrl.u32 %v442, 4
      %v444 = vand.u32 %v442, 15
      %v445 = vsub.s32 0, %v444
      %v446 = vsel %vm440, %v445, %v444
      %vm447 = vcmp.lt.s32.totalorder %v283, 0
      %v448 = vsub.s32 0, %v283
      %v449 = vsel %vm447, %v448, %v283
      %v450 = vshrl.u32 %v449, 4
      %v451 = vand.u32 %v449, 15
      %v452 = vsub.s32 0, %v451
      %v453 = vsel %vm447, %v452, %v451
      %vm454 = vcmp.lt.s32.totalorder %v284, 0
      %v455 = vsub.s32 0, %v284
      %v456 = vsel %vm454, %v455, %v284
      %v457 = vshrl.u32 %v456, 4
      %v458 = vand.u32 %v456, 15
      %v459 = vsub.s32 0, %v458
      %v460 = vsel %vm454, %v459, %v458
      %vm461 = vcmp.lt.s32.totalorder %v285, 0
      %v462 = vsub.s32 0, %v285
      %v463 = vsel %vm461, %v462, %v285
      %v464 = vshrl.u32 %v463, 4
      %v465 = vand.u32 %v463, 15
      %v466 = vsub.s32 0, %v465
      %v467 = vsel %vm461, %v466, %v465
      %vm468 = vcmp.lt.s32.totalorder %v286, 0
      %v469 = vsub.s32 0, %v286
      %v470 = vsel %vm468, %v469, %v286
      %v471 = vshrl.u32 %v470, 4
      %v472 = vand.u32 %v470, 15
      %v473 = vsub.s32 0, %v472
      %v474 = vsel %vm468, %v473, %v472
      %vm475 = vcmp.lt.s32.totalorder %v287, 0
      %v476 = vsub.s32 0, %v287
      %v477 = vsel %vm475, %v476, %v287
      %v478 = vshrl.u32 %v477, 4
      %v479 = vand.u32 %v477, 15
      %v480 = vsub.s32 0, %v479
      %v481 = vsel %vm475, %v480, %v479
      %vm482 = vcmp.lt.s32.totalorder %v288, 0
      %v483 = vsub.s32 0, %v288
      %v484 = vsel %vm482, %v483, %v288
      %v485 = vshrl.u32 %v484, 4
      %v486 = vand.u32 %v484, 15
      %v487 = vsub.s32 0, %v486
      %v488 = vsel %vm482, %v487, %v486
      %vm489 = vcmp.lt.s32.totalorder %v289, 0
      %v490 = vsub.s32 0, %v289
      %v491 = vsel %vm489, %v490, %v289
      %v492 = vshrl.u32 %v491, 4
      %v493 = vand.u32 %v491, 15
      %v494 = vsub.s32 0, %v493
      %v495 = vsel %vm489, %v494, %v493
      %vm496 = vcmp.lt.s32.totalorder %v290, 0
      %v497 = vsub.s32 0, %v290
      %v498 = vsel %vm496, %v497, %v290
      %v499 = vshrl.u32 %v498, 4
      %v500 = vand.u32 %v498, 15
      %v501 = vsub.s32 0, %v500
      %v502 = vsel %vm496, %v501, %v500
      %vm503 = vcmp.lt.s32.totalorder %v291, 0
      %v504 = vsub.s32 0, %v291
      %v505 = vsel %vm503, %v504, %v291
      %v506 = vshrl.u32 %v505, 4
      %v507 = vand.u32 %v505, 15
      %v508 = vsub.s32 0, %v507
      %v509 = vsel %vm503, %v508, %v507
      %vm510 = vcmp.lt.s32.totalorder %v292, 0
      %v511 = vsub.s32 0, %v292
      %v512 = vsel %vm510, %v511, %v292
      %v513 = vshrl.u32 %v512, 4
      %v514 = vand.u32 %v512, 15
      %v515 = vsub.s32 0, %v514
      %v516 = vsel %vm510, %v515, %v514
      %vm517 = vcmp.ne.s32.totalorder %v299, 0
      %vm518 = vcmp.ne.s32.totalorder %v306, 0
      %vm519 = vcmp.ne.s32.totalorder %v313, 0
      %vm520 = vcmp.ne.s32.totalorder %v320, 0
      %vm521 = vcmp.ne.s32.totalorder %v327, 0
      %vm522 = vcmp.ne.s32.totalorder %v334, 0
      %vm523 = vcmp.ne.s32.totalorder %v341, 0
      %vm524 = vcmp.ne.s32.totalorder %v348, 0
      %vm525 = vcmp.ne.s32.totalorder %v355, 0
      %vm526 = vcmp.ne.s32.totalorder %v362, 0
      %vm527 = vcmp.ne.s32.totalorder %v369, 0
      %vm528 = vcmp.ne.s32.totalorder %v376, 0
      %vm529 = vcmp.ne.s32.totalorder %v383, 0
      %vm530 = vcmp.ne.s32.totalorder %v390, 0
      %vm531 = vcmp.ne.s32.totalorder %v397, 0
      %vm532 = vcmp.ne.s32.totalorder %v404, 0
      %vm533 = vcmp.ne.s32.totalorder %v411, 0
      %vm534 = vcmp.ne.s32.totalorder %v418, 0
      %vm535 = vcmp.ne.s32.totalorder %v425, 0
      %vm536 = vcmp.ne.s32.totalorder %v432, 0
      %vm537 = vcmp.ne.s32.totalorder %v439, 0
      %vm538 = vcmp.ne.s32.totalorder %v446, 0
      %vm539 = vcmp.ne.s32.totalorder %v453, 0
      %vm540 = vcmp.ne.s32.totalorder %v460, 0
      %vm541 = vcmp.ne.s32.totalorder %v467, 0
      %vm542 = vcmp.ne.s32.totalorder %v474, 0
      %vm543 = vcmp.ne.s32.totalorder %v481, 0
      %vm544 = vcmp.ne.s32.totalorder %v488, 0
      %vm545 = vcmp.ne.s32.totalorder %v495, 0
      %vm546 = vcmp.ne.s32.totalorder %v502, 0
      %vm547 = vcmp.ne.s32.totalorder %v509, 0
      %vm548 = vcmp.ne.s32.totalorder %v516, 0
      %vm549 = vcmp.lt.s32.totalorder %v299, 0
      %vm550 = vcmp.lt.s32.totalorder %v306, 0
      %vm551 = vcmp.lt.s32.totalorder %v313, 0
      %vm552 = vcmp.lt.s32.totalorder %v320, 0
      %vm553 = vcmp.lt.s32.totalorder %v327, 0
      %vm554 = vcmp.lt.s32.totalorder %v334, 0
      %vm555 = vcmp.lt.s32.totalorder %v341, 0
      %vm556 = vcmp.lt.s32.totalorder %v348, 0
      %vm557 = vcmp.lt.s32.totalorder %v355, 0
      %vm558 = vcmp.lt.s32.totalorder %v362, 0
      %vm559 = vcmp.lt.s32.totalorder %v369, 0
      %vm560 = vcmp.lt.s32.totalorder %v376, 0
      %vm561 = vcmp.lt.s32.totalorder %v383, 0
      %vm562 = vcmp.lt.s32.totalorder %v390, 0
      %vm563 = vcmp.lt.s32.totalorder %v397, 0
      %vm564 = vcmp.lt.s32.totalorder %v404, 0
      %vm565 = vcmp.lt.s32.totalorder %v411, 0
      %vm566 = vcmp.lt.s32.totalorder %v418, 0
      %vm567 = vcmp.lt.s32.totalorder %v425, 0
      %vm568 = vcmp.lt.s32.totalorder %v432, 0
      %vm569 = vcmp.lt.s32.totalorder %v439, 0
      %vm570 = vcmp.lt.s32.totalorder %v446, 0
      %vm571 = vcmp.lt.s32.totalorder %v453, 0
      %vm572 = vcmp.lt.s32.totalorder %v460, 0
      %vm573 = vcmp.lt.s32.totalorder %v467, 0
      %vm574 = vcmp.lt.s32.totalorder %v474, 0
      %vm575 = vcmp.lt.s32.totalorder %v481, 0
      %vm576 = vcmp.lt.s32.totalorder %v488, 0
      %vm577 = vcmp.lt.s32.totalorder %v495, 0
      %vm578 = vcmp.lt.s32.totalorder %v502, 0
      %vm579 = vcmp.lt.s32.totalorder %v509, 0
      %vm580 = vcmp.lt.s32.totalorder %v516, 0
      %vm581 = vmand %vm549, %vm517
      %vm582 = vmand %vm550, %vm518
      %vm583 = vmand %vm551, %vm519
      %vm584 = vmand %vm552, %vm520
      %vm585 = vmand %vm553, %vm521
      %vm586 = vmand %vm554, %vm522
      %vm587 = vmand %vm555, %vm523
      %vm588 = vmand %vm556, %vm524
      %vm589 = vmand %vm557, %vm525
      %vm590 = vmand %vm558, %vm526
      %vm591 = vmand %vm559, %vm527
      %vm592 = vmand %vm560, %vm528
      %vm593 = vmand %vm561, %vm529
      %vm594 = vmand %vm562, %vm530
      %vm595 = vmand %vm563, %vm531
      %vm596 = vmand %vm564, %vm532
      %vm597 = vmand %vm565, %vm533
      %vm598 = vmand %vm566, %vm534
      %vm599 = vmand %vm567, %vm535
      %vm600 = vmand %vm568, %vm536
      %vm601 = vmand %vm569, %vm537
      %vm602 = vmand %vm570, %vm538
      %vm603 = vmand %vm571, %vm539
      %vm604 = vmand %vm572, %vm540
      %vm605 = vmand %vm573, %vm541
      %vm606 = vmand %vm574, %vm542
      %vm607 = vmand %vm575, %vm543
      %vm608 = vmand %vm576, %vm544
      %vm609 = vmand %vm577, %vm545
      %vm610 = vmand %vm578, %vm546
      %vm611 = vmand %vm579, %vm547
      %vm612 = vmand %vm580, %vm548
      %v613 = vadd.s32 %v299, 16
      %v614 = vadd.s32 %v306, 16
      %v615 = vadd.s32 %v313, 16
      %v616 = vadd.s32 %v320, 16
      %v617 = vadd.s32 %v327, 16
      %v618 = vadd.s32 %v334, 16
      %v619 = vadd.s32 %v341, 16
      %v620 = vadd.s32 %v348, 16
      %v621 = vadd.s32 %v355, 16
      %v622 = vadd.s32 %v362, 16
      %v623 = vadd.s32 %v369, 16
      %v624 = vadd.s32 %v376, 16
      %v625 = vadd.s32 %v383, 16
      %v626 = vadd.s32 %v390, 16
      %v627 = vadd.s32 %v397, 16
      %v628 = vadd.s32 %v404, 16
      %v629 = vadd.s32 %v411, 16
      %v630 = vadd.s32 %v418, 16
      %v631 = vadd.s32 %v425, 16
      %v632 = vadd.s32 %v432, 16
      %v633 = vadd.s32 %v439, 16
      %v634 = vadd.s32 %v446, 16
      %v635 = vadd.s32 %v453, 16
      %v636 = vadd.s32 %v460, 16
      %v637 = vadd.s32 %v467, 16
      %v638 = vadd.s32 %v474, 16
      %v639 = vadd.s32 %v481, 16
      %v640 = vadd.s32 %v488, 16
      %v641 = vadd.s32 %v495, 16
      %v642 = vadd.s32 %v502, 16
      %v643 = vadd.s32 %v509, 16
      %v644 = vadd.s32 %v516, 16
      %v645 = vsel %vm581, %v613, %v299
      %v646 = vsel %vm582, %v614, %v306
      %v647 = vsel %vm583, %v615, %v313
      %v648 = vsel %vm584, %v616, %v320
      %v649 = vsel %vm585, %v617, %v327
      %v650 = vsel %vm586, %v618, %v334
      %v651 = vsel %vm587, %v619, %v341
      %v652 = vsel %vm588, %v620, %v348
      %v653 = vsel %vm589, %v621, %v355
      %v654 = vsel %vm590, %v622, %v362
      %v655 = vsel %vm591, %v623, %v369
      %v656 = vsel %vm592, %v624, %v376
      %v657 = vsel %vm593, %v625, %v383
      %v658 = vsel %vm594, %v626, %v390
      %v659 = vsel %vm595, %v627, %v397
      %v660 = vsel %vm596, %v628, %v404
      %v661 = vsel %vm597, %v629, %v411
      %v662 = vsel %vm598, %v630, %v418
      %v663 = vsel %vm599, %v631, %v425
      %v664 = vsel %vm600, %v632, %v432
      %v665 = vsel %vm601, %v633, %v439
      %v666 = vsel %vm602, %v634, %v446
      %v667 = vsel %vm603, %v635, %v453
      %v668 = vsel %vm604, %v636, %v460
      %v669 = vsel %vm605, %v637, %v467
      %v670 = vsel %vm606, %v638, %v474
      %v671 = vsel %vm607, %v639, %v481
      %v672 = vsel %vm608, %v640, %v488
      %v673 = vsel %vm609, %v641, %v495
      %v674 = vsel %vm610, %v642, %v502
      %v675 = vsel %vm611, %v643, %v509
      %v676 = vsel %vm612, %v644, %v516
      %vm677 = vcmp.ne.s32.totalorder %v645, 0
      %vm678 = vcmp.ne.s32.totalorder %v646, 0
      %vm679 = vcmp.ne.s32.totalorder %v647, 0
      %vm680 = vcmp.ne.s32.totalorder %v648, 0
      %vm681 = vcmp.ne.s32.totalorder %v649, 0
      %vm682 = vcmp.ne.s32.totalorder %v650, 0
      %vm683 = vcmp.ne.s32.totalorder %v651, 0
      %vm684 = vcmp.ne.s32.totalorder %v652, 0
      %vm685 = vcmp.ne.s32.totalorder %v653, 0
      %vm686 = vcmp.ne.s32.totalorder %v654, 0
      %vm687 = vcmp.ne.s32.totalorder %v655, 0
      %vm688 = vcmp.ne.s32.totalorder %v656, 0
      %vm689 = vcmp.ne.s32.totalorder %v657, 0
      %vm690 = vcmp.ne.s32.totalorder %v658, 0
      %vm691 = vcmp.ne.s32.totalorder %v659, 0
      %vm692 = vcmp.ne.s32.totalorder %v660, 0
      %vm693 = vcmp.ne.s32.totalorder %v661, 0
      %vm694 = vcmp.ne.s32.totalorder %v662, 0
      %vm695 = vcmp.ne.s32.totalorder %v663, 0
      %vm696 = vcmp.ne.s32.totalorder %v664, 0
      %vm697 = vcmp.ne.s32.totalorder %v665, 0
      %vm698 = vcmp.ne.s32.totalorder %v666, 0
      %vm699 = vcmp.ne.s32.totalorder %v667, 0
      %vm700 = vcmp.ne.s32.totalorder %v668, 0
      %vm701 = vcmp.ne.s32.totalorder %v669, 0
      %vm702 = vcmp.ne.s32.totalorder %v670, 0
      %vm703 = vcmp.ne.s32.totalorder %v671, 0
      %vm704 = vcmp.ne.s32.totalorder %v672, 0
      %vm705 = vcmp.ne.s32.totalorder %v673, 0
      %vm706 = vcmp.ne.s32.totalorder %v674, 0
      %vm707 = vcmp.ne.s32.totalorder %v675, 0
      %vm708 = vcmp.ne.s32.totalorder %v676, 0
      %vm709 = vcmp.lt.s32.totalorder %v261, 0
      %v710 = vsub.s32 0, %v261
      %v711 = vsel %vm709, %v710, %v261
      %v712 = vshrl.u32 %v711, 8
      %v713 = vand.u32 %v711, 255
      %v714 = vsub.s32 0, %v713
      %v715 = vsel %vm709, %v714, %v713
      %vm716 = vcmp.lt.s32.totalorder %v262, 0
      %v717 = vsub.s32 0, %v262
      %v718 = vsel %vm716, %v717, %v262
      %v719 = vshrl.u32 %v718, 8
      %v720 = vand.u32 %v718, 255
      %v721 = vsub.s32 0, %v720
      %v722 = vsel %vm716, %v721, %v720
      %vm723 = vcmp.lt.s32.totalorder %v263, 0
      %v724 = vsub.s32 0, %v263
      %v725 = vsel %vm723, %v724, %v263
      %v726 = vshrl.u32 %v725, 8
      %v727 = vand.u32 %v725, 255
      %v728 = vsub.s32 0, %v727
      %v729 = vsel %vm723, %v728, %v727
      %vm730 = vcmp.lt.s32.totalorder %v264, 0
      %v731 = vsub.s32 0, %v264
      %v732 = vsel %vm730, %v731, %v264
      %v733 = vshrl.u32 %v732, 8
      %v734 = vand.u32 %v732, 255
      %v735 = vsub.s32 0, %v734
      %v736 = vsel %vm730, %v735, %v734
      %vm737 = vcmp.lt.s32.totalorder %v265, 0
      %v738 = vsub.s32 0, %v265
      %v739 = vsel %vm737, %v738, %v265
      %v740 = vshrl.u32 %v739, 8
      %v741 = vand.u32 %v739, 255
      %v742 = vsub.s32 0, %v741
      %v743 = vsel %vm737, %v742, %v741
      %vm744 = vcmp.lt.s32.totalorder %v266, 0
      %v745 = vsub.s32 0, %v266
      %v746 = vsel %vm744, %v745, %v266
      %v747 = vshrl.u32 %v746, 8
      %v748 = vand.u32 %v746, 255
      %v749 = vsub.s32 0, %v748
      %v750 = vsel %vm744, %v749, %v748
      %vm751 = vcmp.lt.s32.totalorder %v267, 0
      %v752 = vsub.s32 0, %v267
      %v753 = vsel %vm751, %v752, %v267
      %v754 = vshrl.u32 %v753, 8
      %v755 = vand.u32 %v753, 255
      %v756 = vsub.s32 0, %v755
      %v757 = vsel %vm751, %v756, %v755
      %vm758 = vcmp.lt.s32.totalorder %v268, 0
      %v759 = vsub.s32 0, %v268
      %v760 = vsel %vm758, %v759, %v268
      %v761 = vshrl.u32 %v760, 8
      %v762 = vand.u32 %v760, 255
      %v763 = vsub.s32 0, %v762
      %v764 = vsel %vm758, %v763, %v762
      %vm765 = vcmp.lt.s32.totalorder %v269, 0
      %v766 = vsub.s32 0, %v269
      %v767 = vsel %vm765, %v766, %v269
      %v768 = vshrl.u32 %v767, 8
      %v769 = vand.u32 %v767, 255
      %v770 = vsub.s32 0, %v769
      %v771 = vsel %vm765, %v770, %v769
      %vm772 = vcmp.lt.s32.totalorder %v270, 0
      %v773 = vsub.s32 0, %v270
      %v774 = vsel %vm772, %v773, %v270
      %v775 = vshrl.u32 %v774, 8
      %v776 = vand.u32 %v774, 255
      %v777 = vsub.s32 0, %v776
      %v778 = vsel %vm772, %v777, %v776
      %vm779 = vcmp.lt.s32.totalorder %v271, 0
      %v780 = vsub.s32 0, %v271
      %v781 = vsel %vm779, %v780, %v271
      %v782 = vshrl.u32 %v781, 8
      %v783 = vand.u32 %v781, 255
      %v784 = vsub.s32 0, %v783
      %v785 = vsel %vm779, %v784, %v783
      %vm786 = vcmp.lt.s32.totalorder %v272, 0
      %v787 = vsub.s32 0, %v272
      %v788 = vsel %vm786, %v787, %v272
      %v789 = vshrl.u32 %v788, 8
      %v790 = vand.u32 %v788, 255
      %v791 = vsub.s32 0, %v790
      %v792 = vsel %vm786, %v791, %v790
      %vm793 = vcmp.lt.s32.totalorder %v273, 0
      %v794 = vsub.s32 0, %v273
      %v795 = vsel %vm793, %v794, %v273
      %v796 = vshrl.u32 %v795, 8
      %v797 = vand.u32 %v795, 255
      %v798 = vsub.s32 0, %v797
      %v799 = vsel %vm793, %v798, %v797
      %vm800 = vcmp.lt.s32.totalorder %v274, 0
      %v801 = vsub.s32 0, %v274
      %v802 = vsel %vm800, %v801, %v274
      %v803 = vshrl.u32 %v802, 8
      %v804 = vand.u32 %v802, 255
      %v805 = vsub.s32 0, %v804
      %v806 = vsel %vm800, %v805, %v804
      %vm807 = vcmp.lt.s32.totalorder %v275, 0
      %v808 = vsub.s32 0, %v275
      %v809 = vsel %vm807, %v808, %v275
      %v810 = vshrl.u32 %v809, 8
      %v811 = vand.u32 %v809, 255
      %v812 = vsub.s32 0, %v811
      %v813 = vsel %vm807, %v812, %v811
      %vm814 = vcmp.lt.s32.totalorder %v276, 0
      %v815 = vsub.s32 0, %v276
      %v816 = vsel %vm814, %v815, %v276
      %v817 = vshrl.u32 %v816, 8
      %v818 = vand.u32 %v816, 255
      %v819 = vsub.s32 0, %v818
      %v820 = vsel %vm814, %v819, %v818
      %vm821 = vcmp.lt.s32.totalorder %v277, 0
      %v822 = vsub.s32 0, %v277
      %v823 = vsel %vm821, %v822, %v277
      %v824 = vshrl.u32 %v823, 8
      %v825 = vand.u32 %v823, 255
      %v826 = vsub.s32 0, %v825
      %v827 = vsel %vm821, %v826, %v825
      %vm828 = vcmp.lt.s32.totalorder %v278, 0
      %v829 = vsub.s32 0, %v278
      %v830 = vsel %vm828, %v829, %v278
      %v831 = vshrl.u32 %v830, 8
      %v832 = vand.u32 %v830, 255
      %v833 = vsub.s32 0, %v832
      %v834 = vsel %vm828, %v833, %v832
      %vm835 = vcmp.lt.s32.totalorder %v279, 0
      %v836 = vsub.s32 0, %v279
      %v837 = vsel %vm835, %v836, %v279
      %v838 = vshrl.u32 %v837, 8
      %v839 = vand.u32 %v837, 255
      %v840 = vsub.s32 0, %v839
      %v841 = vsel %vm835, %v840, %v839
      %vm842 = vcmp.lt.s32.totalorder %v280, 0
      %v843 = vsub.s32 0, %v280
      %v844 = vsel %vm842, %v843, %v280
      %v845 = vshrl.u32 %v844, 8
      %v846 = vand.u32 %v844, 255
      %v847 = vsub.s32 0, %v846
      %v848 = vsel %vm842, %v847, %v846
      %vm849 = vcmp.lt.s32.totalorder %v281, 0
      %v850 = vsub.s32 0, %v281
      %v851 = vsel %vm849, %v850, %v281
      %v852 = vshrl.u32 %v851, 8
      %v853 = vand.u32 %v851, 255
      %v854 = vsub.s32 0, %v853
      %v855 = vsel %vm849, %v854, %v853
      %vm856 = vcmp.lt.s32.totalorder %v282, 0
      %v857 = vsub.s32 0, %v282
      %v858 = vsel %vm856, %v857, %v282
      %v859 = vshrl.u32 %v858, 8
      %v860 = vand.u32 %v858, 255
      %v861 = vsub.s32 0, %v860
      %v862 = vsel %vm856, %v861, %v860
      %vm863 = vcmp.lt.s32.totalorder %v283, 0
      %v864 = vsub.s32 0, %v283
      %v865 = vsel %vm863, %v864, %v283
      %v866 = vshrl.u32 %v865, 8
      %v867 = vand.u32 %v865, 255
      %v868 = vsub.s32 0, %v867
      %v869 = vsel %vm863, %v868, %v867
      %vm870 = vcmp.lt.s32.totalorder %v284, 0
      %v871 = vsub.s32 0, %v284
      %v872 = vsel %vm870, %v871, %v284
      %v873 = vshrl.u32 %v872, 8
      %v874 = vand.u32 %v872, 255
      %v875 = vsub.s32 0, %v874
      %v876 = vsel %vm870, %v875, %v874
      %vm877 = vcmp.lt.s32.totalorder %v285, 0
      %v878 = vsub.s32 0, %v285
      %v879 = vsel %vm877, %v878, %v285
      %v880 = vshrl.u32 %v879, 8
      %v881 = vand.u32 %v879, 255
      %v882 = vsub.s32 0, %v881
      %v883 = vsel %vm877, %v882, %v881
      %vm884 = vcmp.lt.s32.totalorder %v286, 0
      %v885 = vsub.s32 0, %v286
      %v886 = vsel %vm884, %v885, %v286
      %v887 = vshrl.u32 %v886, 8
      %v888 = vand.u32 %v886, 255
      %v889 = vsub.s32 0, %v888
      %v890 = vsel %vm884, %v889, %v888
      %vm891 = vcmp.lt.s32.totalorder %v287, 0
      %v892 = vsub.s32 0, %v287
      %v893 = vsel %vm891, %v892, %v287
      %v894 = vshrl.u32 %v893, 8
      %v895 = vand.u32 %v893, 255
      %v896 = vsub.s32 0, %v895
      %v897 = vsel %vm891, %v896, %v895
      %vm898 = vcmp.lt.s32.totalorder %v288, 0
      %v899 = vsub.s32 0, %v288
      %v900 = vsel %vm898, %v899, %v288
      %v901 = vshrl.u32 %v900, 8
      %v902 = vand.u32 %v900, 255
      %v903 = vsub.s32 0, %v902
      %v904 = vsel %vm898, %v903, %v902
      %vm905 = vcmp.lt.s32.totalorder %v289, 0
      %v906 = vsub.s32 0, %v289
      %v907 = vsel %vm905, %v906, %v289
      %v908 = vshrl.u32 %v907, 8
      %v909 = vand.u32 %v907, 255
      %v910 = vsub.s32 0, %v909
      %v911 = vsel %vm905, %v910, %v909
      %vm912 = vcmp.lt.s32.totalorder %v290, 0
      %v913 = vsub.s32 0, %v290
      %v914 = vsel %vm912, %v913, %v290
      %v915 = vshrl.u32 %v914, 8
      %v916 = vand.u32 %v914, 255
      %v917 = vsub.s32 0, %v916
      %v918 = vsel %vm912, %v917, %v916
      %vm919 = vcmp.lt.s32.totalorder %v291, 0
      %v920 = vsub.s32 0, %v291
      %v921 = vsel %vm919, %v920, %v291
      %v922 = vshrl.u32 %v921, 8
      %v923 = vand.u32 %v921, 255
      %v924 = vsub.s32 0, %v923
      %v925 = vsel %vm919, %v924, %v923
      %vm926 = vcmp.lt.s32.totalorder %v292, 0
      %v927 = vsub.s32 0, %v292
      %v928 = vsel %vm926, %v927, %v292
      %v929 = vshrl.u32 %v928, 8
      %v930 = vand.u32 %v928, 255
      %v931 = vsub.s32 0, %v930
      %v932 = vsel %vm926, %v931, %v930
      %vm933 = vcmp.ne.s32.totalorder %v715, 0
      %vm934 = vcmp.ne.s32.totalorder %v722, 0
      %vm935 = vcmp.ne.s32.totalorder %v729, 0
      %vm936 = vcmp.ne.s32.totalorder %v736, 0
      %vm937 = vcmp.ne.s32.totalorder %v743, 0
      %vm938 = vcmp.ne.s32.totalorder %v750, 0
      %vm939 = vcmp.ne.s32.totalorder %v757, 0
      %vm940 = vcmp.ne.s32.totalorder %v764, 0
      %vm941 = vcmp.ne.s32.totalorder %v771, 0
      %vm942 = vcmp.ne.s32.totalorder %v778, 0
      %vm943 = vcmp.ne.s32.totalorder %v785, 0
      %vm944 = vcmp.ne.s32.totalorder %v792, 0
      %vm945 = vcmp.ne.s32.totalorder %v799, 0
      %vm946 = vcmp.ne.s32.totalorder %v806, 0
      %vm947 = vcmp.ne.s32.totalorder %v813, 0
      %vm948 = vcmp.ne.s32.totalorder %v820, 0
      %vm949 = vcmp.ne.s32.totalorder %v827, 0
      %vm950 = vcmp.ne.s32.totalorder %v834, 0
      %vm951 = vcmp.ne.s32.totalorder %v841, 0
      %vm952 = vcmp.ne.s32.totalorder %v848, 0
      %vm953 = vcmp.ne.s32.totalorder %v855, 0
      %vm954 = vcmp.ne.s32.totalorder %v862, 0
      %vm955 = vcmp.ne.s32.totalorder %v869, 0
      %vm956 = vcmp.ne.s32.totalorder %v876, 0
      %vm957 = vcmp.ne.s32.totalorder %v883, 0
      %vm958 = vcmp.ne.s32.totalorder %v890, 0
      %vm959 = vcmp.ne.s32.totalorder %v897, 0
      %vm960 = vcmp.ne.s32.totalorder %v904, 0
      %vm961 = vcmp.ne.s32.totalorder %v911, 0
      %vm962 = vcmp.ne.s32.totalorder %v918, 0
      %vm963 = vcmp.ne.s32.totalorder %v925, 0
      %vm964 = vcmp.ne.s32.totalorder %v932, 0
      %vm965 = vcmp.lt.s32.totalorder %v715, 0
      %vm966 = vcmp.lt.s32.totalorder %v722, 0
      %vm967 = vcmp.lt.s32.totalorder %v729, 0
      %vm968 = vcmp.lt.s32.totalorder %v736, 0
      %vm969 = vcmp.lt.s32.totalorder %v743, 0
      %vm970 = vcmp.lt.s32.totalorder %v750, 0
      %vm971 = vcmp.lt.s32.totalorder %v757, 0
      %vm972 = vcmp.lt.s32.totalorder %v764, 0
      %vm973 = vcmp.lt.s32.totalorder %v771, 0
      %vm974 = vcmp.lt.s32.totalorder %v778, 0
      %vm975 = vcmp.lt.s32.totalorder %v785, 0
      %vm976 = vcmp.lt.s32.totalorder %v792, 0
      %vm977 = vcmp.lt.s32.totalorder %v799, 0
      %vm978 = vcmp.lt.s32.totalorder %v806, 0
      %vm979 = vcmp.lt.s32.totalorder %v813, 0
      %vm980 = vcmp.lt.s32.totalorder %v820, 0
      %vm981 = vcmp.lt.s32.totalorder %v827, 0
      %vm982 = vcmp.lt.s32.totalorder %v834, 0
      %vm983 = vcmp.lt.s32.totalorder %v841, 0
      %vm984 = vcmp.lt.s32.totalorder %v848, 0
      %vm985 = vcmp.lt.s32.totalorder %v855, 0
      %vm986 = vcmp.lt.s32.totalorder %v862, 0
      %vm987 = vcmp.lt.s32.totalorder %v869, 0
      %vm988 = vcmp.lt.s32.totalorder %v876, 0
      %vm989 = vcmp.lt.s32.totalorder %v883, 0
      %vm990 = vcmp.lt.s32.totalorder %v890, 0
      %vm991 = vcmp.lt.s32.totalorder %v897, 0
      %vm992 = vcmp.lt.s32.totalorder %v904, 0
      %vm993 = vcmp.lt.s32.totalorder %v911, 0
      %vm994 = vcmp.lt.s32.totalorder %v918, 0
      %vm995 = vcmp.lt.s32.totalorder %v925, 0
      %vm996 = vcmp.lt.s32.totalorder %v932, 0
      %vm997 = vmand %vm965, %vm933
      %vm998 = vmand %vm966, %vm934
      %vm999 = vmand %vm967, %vm935
      %vm1000 = vmand %vm968, %vm936
      %vm1001 = vmand %vm969, %vm937
      %vm1002 = vmand %vm970, %vm938
      %vm1003 = vmand %vm971, %vm939
      %vm1004 = vmand %vm972, %vm940
      %vm1005 = vmand %vm973, %vm941
      %vm1006 = vmand %vm974, %vm942
      %vm1007 = vmand %vm975, %vm943
      %vm1008 = vmand %vm976, %vm944
      %vm1009 = vmand %vm977, %vm945
      %vm1010 = vmand %vm978, %vm946
      %vm1011 = vmand %vm979, %vm947
      %vm1012 = vmand %vm980, %vm948
      %vm1013 = vmand %vm981, %vm949
      %vm1014 = vmand %vm982, %vm950
      %vm1015 = vmand %vm983, %vm951
      %vm1016 = vmand %vm984, %vm952
      %vm1017 = vmand %vm985, %vm953
      %vm1018 = vmand %vm986, %vm954
      %vm1019 = vmand %vm987, %vm955
      %vm1020 = vmand %vm988, %vm956
      %vm1021 = vmand %vm989, %vm957
      %vm1022 = vmand %vm990, %vm958
      %vm1023 = vmand %vm991, %vm959
      %vm1024 = vmand %vm992, %vm960
      %vm1025 = vmand %vm993, %vm961
      %vm1026 = vmand %vm994, %vm962
      %vm1027 = vmand %vm995, %vm963
      %vm1028 = vmand %vm996, %vm964
      %v1029 = vadd.s32 %v715, 256
      %v1030 = vadd.s32 %v722, 256
      %v1031 = vadd.s32 %v729, 256
      %v1032 = vadd.s32 %v736, 256
      %v1033 = vadd.s32 %v743, 256
      %v1034 = vadd.s32 %v750, 256
      %v1035 = vadd.s32 %v757, 256
      %v1036 = vadd.s32 %v764, 256
      %v1037 = vadd.s32 %v771, 256
      %v1038 = vadd.s32 %v778, 256
      %v1039 = vadd.s32 %v785, 256
      %v1040 = vadd.s32 %v792, 256
      %v1041 = vadd.s32 %v799, 256
      %v1042 = vadd.s32 %v806, 256
      %v1043 = vadd.s32 %v813, 256
      %v1044 = vadd.s32 %v820, 256
      %v1045 = vadd.s32 %v827, 256
      %v1046 = vadd.s32 %v834, 256
      %v1047 = vadd.s32 %v841, 256
      %v1048 = vadd.s32 %v848, 256
      %v1049 = vadd.s32 %v855, 256
      %v1050 = vadd.s32 %v862, 256
      %v1051 = vadd.s32 %v869, 256
      %v1052 = vadd.s32 %v876, 256
      %v1053 = vadd.s32 %v883, 256
      %v1054 = vadd.s32 %v890, 256
      %v1055 = vadd.s32 %v897, 256
      %v1056 = vadd.s32 %v904, 256
      %v1057 = vadd.s32 %v911, 256
      %v1058 = vadd.s32 %v918, 256
      %v1059 = vadd.s32 %v925, 256
      %v1060 = vadd.s32 %v932, 256
      %v1061 = vsel %vm997, %v1029, %v715
      %v1062 = vsel %vm998, %v1030, %v722
      %v1063 = vsel %vm999, %v1031, %v729
      %v1064 = vsel %vm1000, %v1032, %v736
      %v1065 = vsel %vm1001, %v1033, %v743
      %v1066 = vsel %vm1002, %v1034, %v750
      %v1067 = vsel %vm1003, %v1035, %v757
      %v1068 = vsel %vm1004, %v1036, %v764
      %v1069 = vsel %vm1005, %v1037, %v771
      %v1070 = vsel %vm1006, %v1038, %v778
      %v1071 = vsel %vm1007, %v1039, %v785
      %v1072 = vsel %vm1008, %v1040, %v792
      %v1073 = vsel %vm1009, %v1041, %v799
      %v1074 = vsel %vm1010, %v1042, %v806
      %v1075 = vsel %vm1011, %v1043, %v813
      %v1076 = vsel %vm1012, %v1044, %v820
      %v1077 = vsel %vm1013, %v1045, %v827
      %v1078 = vsel %vm1014, %v1046, %v834
      %v1079 = vsel %vm1015, %v1047, %v841
      %v1080 = vsel %vm1016, %v1048, %v848
      %v1081 = vsel %vm1017, %v1049, %v855
      %v1082 = vsel %vm1018, %v1050, %v862
      %v1083 = vsel %vm1019, %v1051, %v869
      %v1084 = vsel %vm1020, %v1052, %v876
      %v1085 = vsel %vm1021, %v1053, %v883
      %v1086 = vsel %vm1022, %v1054, %v890
      %v1087 = vsel %vm1023, %v1055, %v897
      %v1088 = vsel %vm1024, %v1056, %v904
      %v1089 = vsel %vm1025, %v1057, %v911
      %v1090 = vsel %vm1026, %v1058, %v918
      %v1091 = vsel %vm1027, %v1059, %v925
      %v1092 = vsel %vm1028, %v1060, %v932
      %vm1093 = vcmp.ge.s32.totalorder %v1061, 16
      %vm1094 = vcmp.ge.s32.totalorder %v1062, 16
      %vm1095 = vcmp.ge.s32.totalorder %v1063, 16
      %vm1096 = vcmp.ge.s32.totalorder %v1064, 16
      %vm1097 = vcmp.ge.s32.totalorder %v1065, 16
      %vm1098 = vcmp.ge.s32.totalorder %v1066, 16
      %vm1099 = vcmp.ge.s32.totalorder %v1067, 16
      %vm1100 = vcmp.ge.s32.totalorder %v1068, 16
      %vm1101 = vcmp.ge.s32.totalorder %v1069, 16
      %vm1102 = vcmp.ge.s32.totalorder %v1070, 16
      %vm1103 = vcmp.ge.s32.totalorder %v1071, 16
      %vm1104 = vcmp.ge.s32.totalorder %v1072, 16
      %vm1105 = vcmp.ge.s32.totalorder %v1073, 16
      %vm1106 = vcmp.ge.s32.totalorder %v1074, 16
      %vm1107 = vcmp.ge.s32.totalorder %v1075, 16
      %vm1108 = vcmp.ge.s32.totalorder %v1076, 16
      %vm1109 = vcmp.ge.s32.totalorder %v1077, 16
      %vm1110 = vcmp.ge.s32.totalorder %v1078, 16
      %vm1111 = vcmp.ge.s32.totalorder %v1079, 16
      %vm1112 = vcmp.ge.s32.totalorder %v1080, 16
      %vm1113 = vcmp.ge.s32.totalorder %v1081, 16
      %vm1114 = vcmp.ge.s32.totalorder %v1082, 16
      %vm1115 = vcmp.ge.s32.totalorder %v1083, 16
      %vm1116 = vcmp.ge.s32.totalorder %v1084, 16
      %vm1117 = vcmp.ge.s32.totalorder %v1085, 16
      %vm1118 = vcmp.ge.s32.totalorder %v1086, 16
      %vm1119 = vcmp.ge.s32.totalorder %v1087, 16
      %vm1120 = vcmp.ge.s32.totalorder %v1088, 16
      %vm1121 = vcmp.ge.s32.totalorder %v1089, 16
      %vm1122 = vcmp.ge.s32.totalorder %v1090, 16
      %vm1123 = vcmp.ge.s32.totalorder %v1091, 16
      %vm1124 = vcmp.ge.s32.totalorder %v1092, 16
      %v1125 = vsel %vm677, 1, 0
      %v1126 = vsel %vm678, 1, 0
      %v1127 = vsel %vm679, 1, 0
      %v1128 = vsel %vm680, 1, 0
      %v1129 = vsel %vm681, 1, 0
      %v1130 = vsel %vm682, 1, 0
      %v1131 = vsel %vm683, 1, 0
      %v1132 = vsel %vm684, 1, 0
      %v1133 = vsel %vm685, 1, 0
      %v1134 = vsel %vm686, 1, 0
      %v1135 = vsel %vm687, 1, 0
      %v1136 = vsel %vm688, 1, 0
      %v1137 = vsel %vm689, 1, 0
      %v1138 = vsel %vm690, 1, 0
      %v1139 = vsel %vm691, 1, 0
      %v1140 = vsel %vm692, 1, 0
      %v1141 = vsel %vm693, 1, 0
      %v1142 = vsel %vm694, 1, 0
      %v1143 = vsel %vm695, 1, 0
      %v1144 = vsel %vm696, 1, 0
      %v1145 = vsel %vm697, 1, 0
      %v1146 = vsel %vm698, 1, 0
      %v1147 = vsel %vm699, 1, 0
      %v1148 = vsel %vm700, 1, 0
      %v1149 = vsel %vm701, 1, 0
      %v1150 = vsel %vm702, 1, 0
      %v1151 = vsel %vm703, 1, 0
      %v1152 = vsel %vm704, 1, 0
      %v1153 = vsel %vm705, 1, 0
      %v1154 = vsel %vm706, 1, 0
      %v1155 = vsel %vm707, 1, 0
      %v1156 = vsel %vm708, 1, 0
      %v1157 = vcvt.s32.f32 %v1125
      %v1158 = vcvt.s32.f32 %v1126
      %v1159 = vcvt.s32.f32 %v1127
      %v1160 = vcvt.s32.f32 %v1128
      %v1161 = vcvt.s32.f32 %v1129
      %v1162 = vcvt.s32.f32 %v1130
      %v1163 = vcvt.s32.f32 %v1131
      %v1164 = vcvt.s32.f32 %v1132
      %v1165 = vcvt.s32.f32 %v1133
      %v1166 = vcvt.s32.f32 %v1134
      %v1167 = vcvt.s32.f32 %v1135
      %v1168 = vcvt.s32.f32 %v1136
      %v1169 = vcvt.s32.f32 %v1137
      %v1170 = vcvt.s32.f32 %v1138
      %v1171 = vcvt.s32.f32 %v1139
      %v1172 = vcvt.s32.f32 %v1140
      %v1173 = vcvt.s32.f32 %v1141
      %v1174 = vcvt.s32.f32 %v1142
      %v1175 = vcvt.s32.f32 %v1143
      %v1176 = vcvt.s32.f32 %v1144
      %v1177 = vcvt.s32.f32 %v1145
      %v1178 = vcvt.s32.f32 %v1146
      %v1179 = vcvt.s32.f32 %v1147
      %v1180 = vcvt.s32.f32 %v1148
      %v1181 = vcvt.s32.f32 %v1149
      %v1182 = vcvt.s32.f32 %v1150
      %v1183 = vcvt.s32.f32 %v1151
      %v1184 = vcvt.s32.f32 %v1152
      %v1185 = vcvt.s32.f32 %v1153
      %v1186 = vcvt.s32.f32 %v1154
      %v1187 = vcvt.s32.f32 %v1155
      %v1188 = vcvt.s32.f32 %v1156
      %v1189 = vsel %vm1093, 1, 0
      %v1190 = vsel %vm1094, 1, 0
      %v1191 = vsel %vm1095, 1, 0
      %v1192 = vsel %vm1096, 1, 0
      %v1193 = vsel %vm1097, 1, 0
      %v1194 = vsel %vm1098, 1, 0
      %v1195 = vsel %vm1099, 1, 0
      %v1196 = vsel %vm1100, 1, 0
      %v1197 = vsel %vm1101, 1, 0
      %v1198 = vsel %vm1102, 1, 0
      %v1199 = vsel %vm1103, 1, 0
      %v1200 = vsel %vm1104, 1, 0
      %v1201 = vsel %vm1105, 1, 0
      %v1202 = vsel %vm1106, 1, 0
      %v1203 = vsel %vm1107, 1, 0
      %v1204 = vsel %vm1108, 1, 0
      %v1205 = vsel %vm1109, 1, 0
      %v1206 = vsel %vm1110, 1, 0
      %v1207 = vsel %vm1111, 1, 0
      %v1208 = vsel %vm1112, 1, 0
      %v1209 = vsel %vm1113, 1, 0
      %v1210 = vsel %vm1114, 1, 0
      %v1211 = vsel %vm1115, 1, 0
      %v1212 = vsel %vm1116, 1, 0
      %v1213 = vsel %vm1117, 1, 0
      %v1214 = vsel %vm1118, 1, 0
      %v1215 = vsel %vm1119, 1, 0
      %v1216 = vsel %vm1120, 1, 0
      %v1217 = vsel %vm1121, 1, 0
      %v1218 = vsel %vm1122, 1, 0
      %v1219 = vsel %vm1123, 1, 0
      %v1220 = vsel %vm1124, 1, 0
      %v1221 = vcvt.s32.f32 %v1189
      %v1222 = vcvt.s32.f32 %v1190
      %v1223 = vcvt.s32.f32 %v1191
      %v1224 = vcvt.s32.f32 %v1192
      %v1225 = vcvt.s32.f32 %v1193
      %v1226 = vcvt.s32.f32 %v1194
      %v1227 = vcvt.s32.f32 %v1195
      %v1228 = vcvt.s32.f32 %v1196
      %v1229 = vcvt.s32.f32 %v1197
      %v1230 = vcvt.s32.f32 %v1198
      %v1231 = vcvt.s32.f32 %v1199
      %v1232 = vcvt.s32.f32 %v1200
      %v1233 = vcvt.s32.f32 %v1201
      %v1234 = vcvt.s32.f32 %v1202
      %v1235 = vcvt.s32.f32 %v1203
      %v1236 = vcvt.s32.f32 %v1204
      %v1237 = vcvt.s32.f32 %v1205
      %v1238 = vcvt.s32.f32 %v1206
      %v1239 = vcvt.s32.f32 %v1207
      %v1240 = vcvt.s32.f32 %v1208
      %v1241 = vcvt.s32.f32 %v1209
      %v1242 = vcvt.s32.f32 %v1210
      %v1243 = vcvt.s32.f32 %v1211
      %v1244 = vcvt.s32.f32 %v1212
      %v1245 = vcvt.s32.f32 %v1213
      %v1246 = vcvt.s32.f32 %v1214
      %v1247 = vcvt.s32.f32 %v1215
      %v1248 = vcvt.s32.f32 %v1216
      %v1249 = vcvt.s32.f32 %v1217
      %v1250 = vcvt.s32.f32 %v1218
      %v1251 = vcvt.s32.f32 %v1219
      %v1252 = vcvt.s32.f32 %v1220
      %vm1253 = vmand %vm677, %vm1093
      %vm1254 = vmand %vm678, %vm1094
      %vm1255 = vmand %vm679, %vm1095
      %vm1256 = vmand %vm680, %vm1096
      %vm1257 = vmand %vm681, %vm1097
      %vm1258 = vmand %vm682, %vm1098
      %vm1259 = vmand %vm683, %vm1099
      %vm1260 = vmand %vm684, %vm1100
      %vm1261 = vmand %vm685, %vm1101
      %vm1262 = vmand %vm686, %vm1102
      %vm1263 = vmand %vm687, %vm1103
      %vm1264 = vmand %vm688, %vm1104
      %vm1265 = vmand %vm689, %vm1105
      %vm1266 = vmand %vm690, %vm1106
      %vm1267 = vmand %vm691, %vm1107
      %vm1268 = vmand %vm692, %vm1108
      %vm1269 = vmand %vm693, %vm1109
      %vm1270 = vmand %vm694, %vm1110
      %vm1271 = vmand %vm695, %vm1111
      %vm1272 = vmand %vm696, %vm1112
      %vm1273 = vmand %vm697, %vm1113
      %vm1274 = vmand %vm698, %vm1114
      %vm1275 = vmand %vm699, %vm1115
      %vm1276 = vmand %vm700, %vm1116
      %vm1277 = vmand %vm701, %vm1117
      %vm1278 = vmand %vm702, %vm1118
      %vm1279 = vmand %vm703, %vm1119
      %vm1280 = vmand %vm704, %vm1120
      %vm1281 = vmand %vm705, %vm1121
      %vm1282 = vmand %vm706, %vm1122
      %vm1283 = vmand %vm707, %vm1123
      %vm1284 = vmand %vm708, %vm1124
      %v1285 = vsel %vm1253, 1, 0
      %v1286 = vsel %vm1254, 1, 0
      %v1287 = vsel %vm1255, 1, 0
      %v1288 = vsel %vm1256, 1, 0
      %v1289 = vsel %vm1257, 1, 0
      %v1290 = vsel %vm1258, 1, 0
      %v1291 = vsel %vm1259, 1, 0
      %v1292 = vsel %vm1260, 1, 0
      %v1293 = vsel %vm1261, 1, 0
      %v1294 = vsel %vm1262, 1, 0
      %v1295 = vsel %vm1263, 1, 0
      %v1296 = vsel %vm1264, 1, 0
      %v1297 = vsel %vm1265, 1, 0
      %v1298 = vsel %vm1266, 1, 0
      %v1299 = vsel %vm1267, 1, 0
      %v1300 = vsel %vm1268, 1, 0
      %v1301 = vsel %vm1269, 1, 0
      %v1302 = vsel %vm1270, 1, 0
      %v1303 = vsel %vm1271, 1, 0
      %v1304 = vsel %vm1272, 1, 0
      %v1305 = vsel %vm1273, 1, 0
      %v1306 = vsel %vm1274, 1, 0
      %v1307 = vsel %vm1275, 1, 0
      %v1308 = vsel %vm1276, 1, 0
      %v1309 = vsel %vm1277, 1, 0
      %v1310 = vsel %vm1278, 1, 0
      %v1311 = vsel %vm1279, 1, 0
      %v1312 = vsel %vm1280, 1, 0
      %v1313 = vsel %vm1281, 1, 0
      %v1314 = vsel %vm1282, 1, 0
      %v1315 = vsel %vm1283, 1, 0
      %v1316 = vsel %vm1284, 1, 0
      %v1317 = vcvt.s32.f32 %v1285
      %v1318 = vcvt.s32.f32 %v1286
      %v1319 = vcvt.s32.f32 %v1287
      %v1320 = vcvt.s32.f32 %v1288
      %v1321 = vcvt.s32.f32 %v1289
      %v1322 = vcvt.s32.f32 %v1290
      %v1323 = vcvt.s32.f32 %v1291
      %v1324 = vcvt.s32.f32 %v1292
      %v1325 = vcvt.s32.f32 %v1293
      %v1326 = vcvt.s32.f32 %v1294
      %v1327 = vcvt.s32.f32 %v1295
      %v1328 = vcvt.s32.f32 %v1296
      %v1329 = vcvt.s32.f32 %v1297
      %v1330 = vcvt.s32.f32 %v1298
      %v1331 = vcvt.s32.f32 %v1299
      %v1332 = vcvt.s32.f32 %v1300
      %v1333 = vcvt.s32.f32 %v1301
      %v1334 = vcvt.s32.f32 %v1302
      %v1335 = vcvt.s32.f32 %v1303
      %v1336 = vcvt.s32.f32 %v1304
      %v1337 = vcvt.s32.f32 %v1305
      %v1338 = vcvt.s32.f32 %v1306
      %v1339 = vcvt.s32.f32 %v1307
      %v1340 = vcvt.s32.f32 %v1308
      %v1341 = vcvt.s32.f32 %v1309
      %v1342 = vcvt.s32.f32 %v1310
      %v1343 = vcvt.s32.f32 %v1311
      %v1344 = vcvt.s32.f32 %v1312
      %v1345 = vcvt.s32.f32 %v1313
      %v1346 = vcvt.s32.f32 %v1314
      %v1347 = vcvt.s32.f32 %v1315
      %v1348 = vcvt.s32.f32 %v1316
      %vm1349 = vcmp.gt.f32.partialorder %v228, 0.0
      %vm1350 = vcmp.gt.f32.partialorder %v229, 0.0
      %vm1351 = vcmp.gt.f32.partialorder %v230, 0.0
      %vm1352 = vcmp.gt.f32.partialorder %v231, 0.0
      %vm1353 = vcmp.gt.f32.partialorder %v232, 0.0
      %vm1354 = vcmp.gt.f32.partialorder %v233, 0.0
      %vm1355 = vcmp.gt.f32.partialorder %v234, 0.0
      %vm1356 = vcmp.gt.f32.partialorder %v235, 0.0
      %vm1357 = vcmp.gt.f32.partialorder %v236, 0.0
      %vm1358 = vcmp.gt.f32.partialorder %v237, 0.0
      %vm1359 = vcmp.gt.f32.partialorder %v238, 0.0
      %vm1360 = vcmp.gt.f32.partialorder %v239, 0.0
      %vm1361 = vcmp.gt.f32.partialorder %v240, 0.0
      %vm1362 = vcmp.gt.f32.partialorder %v241, 0.0
      %vm1363 = vcmp.gt.f32.partialorder %v242, 0.0
      %vm1364 = vcmp.gt.f32.partialorder %v243, 0.0
      %vm1365 = vcmp.gt.f32.partialorder %v244, 0.0
      %vm1366 = vcmp.gt.f32.partialorder %v245, 0.0
      %vm1367 = vcmp.gt.f32.partialorder %v246, 0.0
      %vm1368 = vcmp.gt.f32.partialorder %v247, 0.0
      %vm1369 = vcmp.gt.f32.partialorder %v248, 0.0
      %vm1370 = vcmp.gt.f32.partialorder %v249, 0.0
      %vm1371 = vcmp.gt.f32.partialorder %v250, 0.0
      %vm1372 = vcmp.gt.f32.partialorder %v251, 0.0
      %vm1373 = vcmp.gt.f32.partialorder %v252, 0.0
      %vm1374 = vcmp.gt.f32.partialorder %v253, 0.0
      %vm1375 = vcmp.gt.f32.partialorder %v254, 0.0
      %vm1376 = vcmp.gt.f32.partialorder %v255, 0.0
      %vm1377 = vcmp.gt.f32.partialorder %v256, 0.0
      %vm1378 = vcmp.gt.f32.partialorder %v257, 0.0
      %vm1379 = vcmp.gt.f32.partialorder %v258, 0.0
      %vm1380 = vcmp.gt.f32.partialorder %v259, 0.0
      %v1381 = vmin.f32 %v228, 0.0
      %v1382 = vmin.f32 %v229, 0.0
      %v1383 = vmin.f32 %v230, 0.0
      %v1384 = vmin.f32 %v231, 0.0
      %v1385 = vmin.f32 %v232, 0.0
      %v1386 = vmin.f32 %v233, 0.0
      %v1387 = vmin.f32 %v234, 0.0
      %v1388 = vmin.f32 %v235, 0.0
      %v1389 = vmin.f32 %v236, 0.0
      %v1390 = vmin.f32 %v237, 0.0
      %v1391 = vmin.f32 %v238, 0.0
      %v1392 = vmin.f32 %v239, 0.0
      %v1393 = vmin.f32 %v240, 0.0
      %v1394 = vmin.f32 %v241, 0.0
      %v1395 = vmin.f32 %v242, 0.0
      %v1396 = vmin.f32 %v243, 0.0
      %v1397 = vmin.f32 %v244, 0.0
      %v1398 = vmin.f32 %v245, 0.0
      %v1399 = vmin.f32 %v246, 0.0
      %v1400 = vmin.f32 %v247, 0.0
      %v1401 = vmin.f32 %v248, 0.0
      %v1402 = vmin.f32 %v249, 0.0
      %v1403 = vmin.f32 %v250, 0.0
      %v1404 = vmin.f32 %v251, 0.0
      %v1405 = vmin.f32 %v252, 0.0
      %v1406 = vmin.f32 %v253, 0.0
      %v1407 = vmin.f32 %v254, 0.0
      %v1408 = vmin.f32 %v255, 0.0
      %v1409 = vmin.f32 %v256, 0.0
      %v1410 = vmin.f32 %v257, 0.0
      %v1411 = vmin.f32 %v258, 0.0
      %v1412 = vmin.f32 %v259, 0.0
      %v1413 = vmul.f32 %v1381, 1.442695
      %v1414 = vpow.pop %v1413
      %v1415 = vmul.f32 %v1382, 1.442695
      %v1416 = vpow.pop %v1415
      %v1417 = vmul.f32 %v1383, 1.442695
      %v1418 = vpow.pop %v1417
      %v1419 = vmul.f32 %v1384, 1.442695
      %v1420 = vpow.pop %v1419
      %v1421 = vmul.f32 %v1385, 1.442695
      %v1422 = vpow.pop %v1421
      %v1423 = vmul.f32 %v1386, 1.442695
      %v1424 = vpow.pop %v1423
      %v1425 = vmul.f32 %v1387, 1.442695
      %v1426 = vpow.pop %v1425
      %v1427 = vmul.f32 %v1388, 1.442695
      %v1428 = vpow.pop %v1427
      %v1429 = vmul.f32 %v1389, 1.442695
      %v1430 = vpow.pop %v1429
      %v1431 = vmul.f32 %v1390, 1.442695
      %v1432 = vpow.pop %v1431
      %v1433 = vmul.f32 %v1391, 1.442695
      %v1434 = vpow.pop %v1433
      %v1435 = vmul.f32 %v1392, 1.442695
      %v1436 = vpow.pop %v1435
      %v1437 = vmul.f32 %v1393, 1.442695
      %v1438 = vpow.pop %v1437
      %v1439 = vmul.f32 %v1394, 1.442695
      %v1440 = vpow.pop %v1439
      %v1441 = vmul.f32 %v1395, 1.442695
      %v1442 = vpow.pop %v1441
      %v1443 = vmul.f32 %v1396, 1.442695
      %v1444 = vpow.pop %v1443
      %v1445 = vmul.f32 %v1397, 1.442695
      %v1446 = vpow.pop %v1445
      %v1447 = vmul.f32 %v1398, 1.442695
      %v1448 = vpow.pop %v1447
      %v1449 = vmul.f32 %v1399, 1.442695
      %v1450 = vpow.pop %v1449
      %v1451 = vmul.f32 %v1400, 1.442695
      %v1452 = vpow.pop %v1451
      %v1453 = vmul.f32 %v1401, 1.442695
      %v1454 = vpow.pop %v1453
      %v1455 = vmul.f32 %v1402, 1.442695
      %v1456 = vpow.pop %v1455
      %v1457 = vmul.f32 %v1403, 1.442695
      %v1458 = vpow.pop %v1457
      %v1459 = vmul.f32 %v1404, 1.442695
      %v1460 = vpow.pop %v1459
      %v1461 = vmul.f32 %v1405, 1.442695
      %v1462 = vpow.pop %v1461
      %v1463 = vmul.f32 %v1406, 1.442695
      %v1464 = vpow.pop %v1463
      %v1465 = vmul.f32 %v1407, 1.442695
      %v1466 = vpow.pop %v1465
      %v1467 = vmul.f32 %v1408, 1.442695
      %v1468 = vpow.pop %v1467
      %v1469 = vmul.f32 %v1409, 1.442695
      %v1470 = vpow.pop %v1469
      %v1471 = vmul.f32 %v1410, 1.442695
      %v1472 = vpow.pop %v1471
      %v1473 = vmul.f32 %v1411, 1.442695
      %v1474 = vpow.pop %v1473
      %v1475 = vmul.f32 %v1412, 1.442695
      %v1476 = vpow.pop %v1475
      %v1477 = vsub.f32 %v1414, 1.0
      %v1478 = vsub.f32 %v1416, 1.0
      %v1479 = vsub.f32 %v1418, 1.0
      %v1480 = vsub.f32 %v1420, 1.0
      %v1481 = vsub.f32 %v1422, 1.0
      %v1482 = vsub.f32 %v1424, 1.0
      %v1483 = vsub.f32 %v1426, 1.0
      %v1484 = vsub.f32 %v1428, 1.0
      %v1485 = vsub.f32 %v1430, 1.0
      %v1486 = vsub.f32 %v1432, 1.0
      %v1487 = vsub.f32 %v1434, 1.0
      %v1488 = vsub.f32 %v1436, 1.0
      %v1489 = vsub.f32 %v1438, 1.0
      %v1490 = vsub.f32 %v1440, 1.0
      %v1491 = vsub.f32 %v1442, 1.0
      %v1492 = vsub.f32 %v1444, 1.0
      %v1493 = vsub.f32 %v1446, 1.0
      %v1494 = vsub.f32 %v1448, 1.0
      %v1495 = vsub.f32 %v1450, 1.0
      %v1496 = vsub.f32 %v1452, 1.0
      %v1497 = vsub.f32 %v1454, 1.0
      %v1498 = vsub.f32 %v1456, 1.0
      %v1499 = vsub.f32 %v1458, 1.0
      %v1500 = vsub.f32 %v1460, 1.0
      %v1501 = vsub.f32 %v1462, 1.0
      %v1502 = vsub.f32 %v1464, 1.0
      %v1503 = vsub.f32 %v1466, 1.0
      %v1504 = vsub.f32 %v1468, 1.0
      %v1505 = vsub.f32 %v1470, 1.0
      %v1506 = vsub.f32 %v1472, 1.0
      %v1507 = vsub.f32 %v1474, 1.0
      %v1508 = vsub.f32 %v1476, 1.0
      %v1509 = vsel %vm1349, %v228, %v1477
      %v1510 = vsel %vm1350, %v229, %v1478
      %v1511 = vsel %vm1351, %v230, %v1479
      %v1512 = vsel %vm1352, %v231, %v1480
      %v1513 = vsel %vm1353, %v232, %v1481
      %v1514 = vsel %vm1354, %v233, %v1482
      %v1515 = vsel %vm1355, %v234, %v1483
      %v1516 = vsel %vm1356, %v235, %v1484
      %v1517 = vsel %vm1357, %v236, %v1485
      %v1518 = vsel %vm1358, %v237, %v1486
      %v1519 = vsel %vm1359, %v238, %v1487
      %v1520 = vsel %vm1360, %v239, %v1488
      %v1521 = vsel %vm1361, %v240, %v1489
      %v1522 = vsel %vm1362, %v241, %v1490
      %v1523 = vsel %vm1363, %v242, %v1491
      %v1524 = vsel %vm1364, %v243, %v1492
      %v1525 = vsel %vm1365, %v244, %v1493
      %v1526 = vsel %vm1366, %v245, %v1494
      %v1527 = vsel %vm1367, %v246, %v1495
      %v1528 = vsel %vm1368, %v247, %v1496
      %v1529 = vsel %vm1369, %v248, %v1497
      %v1530 = vsel %vm1370, %v249, %v1498
      %v1531 = vsel %vm1371, %v250, %v1499
      %v1532 = vsel %vm1372, %v251, %v1500
      %v1533 = vsel %vm1373, %v252, %v1501
      %v1534 = vsel %vm1374, %v253, %v1502
      %v1535 = vsel %vm1375, %v254, %v1503
      %v1536 = vsel %vm1376, %v255, %v1504
      %v1537 = vsel %vm1377, %v256, %v1505
      %v1538 = vsel %vm1378, %v257, %v1506
      %v1539 = vsel %vm1379, %v258, %v1507
      %v1540 = vsel %vm1380, %v259, %v1508
      %v1541 = vrot.slane %v1509, 7
      %v1542 = vrot.slane %v1510, 7
      %v1543 = vrot.slane %v1511, 7
      %v1544 = vrot.slane %v1512, 7
      %v1545 = vrot.slane %v1513, 7
      %v1546 = vrot.slane %v1514, 7
      %v1547 = vrot.slane %v1515, 7
      %v1548 = vrot.slane %v1516, 7
      %v1549 = vrot.slane %v1517, 7
      %v1550 = vrot.slane %v1518, 7
      %v1551 = vrot.slane %v1519, 7
      %v1552 = vrot.slane %v1520, 7
      %v1553 = vrot.slane %v1521, 7
      %v1554 = vrot.slane %v1522, 7
      %v1555 = vrot.slane %v1523, 7
      %v1556 = vrot.slane %v1524, 7
      %v1557 = vrot.slane %v1525, 7
      %v1558 = vrot.slane %v1526, 7
      %v1559 = vrot.slane %v1527, 7
      %v1560 = vrot.slane %v1528, 7
      %v1561 = vrot.slane %v1529, 7
      %v1562 = vrot.slane %v1530, 7
      %v1563 = vrot.slane %v1531, 7
      %v1564 = vrot.slane %v1532, 7
      %v1565 = vrot.slane %v1533, 7
      %v1566 = vrot.slane %v1534, 7
      %v1567 = vrot.slane %v1535, 7
      %v1568 = vrot.slane %v1536, 7
      %v1569 = vrot.slane %v1537, 7
      %v1570 = vrot.slane %v1538, 7
      %v1571 = vrot.slane %v1539, 7
      %v1572 = vrot.slane %v1540, 7
      %vm1573 = vcmp.lt.s32.totalorder %v261, 1
      %v1574 = vsel %vm1573, %v1571, %v1572
      %v1575 = vsel %vm1573, %v1570, %v1571
      %v1576 = vsel %vm1573, %v1569, %v1570
      %v1577 = vsel %vm1573, %v1568, %v1569
      %v1578 = vsel %vm1573, %v1567, %v1568
      %v1579 = vsel %vm1573, %v1566, %v1567
      %v1580 = vsel %vm1573, %v1565, %v1566
      %v1581 = vsel %vm1573, %v1564, %v1565
      %v1582 = vsel %vm1573, %v1563, %v1564
      %v1583 = vsel %vm1573, %v1562, %v1563
      %v1584 = vsel %vm1573, %v1561, %v1562
      %v1585 = vsel %vm1573, %v1560, %v1561
      %v1586 = vsel %vm1573, %v1559, %v1560
      %v1587 = vsel %vm1573, %v1558, %v1559
      %v1588 = vsel %vm1573, %v1557, %v1558
      %v1589 = vsel %vm1573, %v1556, %v1557
      %v1590 = vsel %vm1573, %v1555, %v1556
      %v1591 = vsel %vm1573, %v1554, %v1555
      %v1592 = vsel %vm1573, %v1553, %v1554
      %v1593 = vsel %vm1573, %v1552, %v1553
      %v1594 = vsel %vm1573, %v1551, %v1552
      %v1595 = vsel %vm1573, %v1550, %v1551
      %v1596 = vsel %vm1573, %v1549, %v1550
      %v1597 = vsel %vm1573, %v1548, %v1549
      %v1598 = vsel %vm1573, %v1547, %v1548
      %v1599 = vsel %vm1573, %v1546, %v1547
      %v1600 = vsel %vm1573, %v1545, %v1546
      %v1601 = vsel %vm1573, %v1544, %v1545
      %v1602 = vsel %vm1573, %v1543, %v1544
      %v1603 = vsel %vm1573, %v1542, %v1543
      %v1604 = vsel %vm1573, %v1541, %v1542
      %v1605 = vsel %vm1573, %v1572, %v1541
      %v1606 = vmul.f32 %v1605, %v1157
      %v1607 = vmul.f32 %v1604, %v1158
      %v1608 = vmul.f32 %v1603, %v1159
      %v1609 = vmul.f32 %v1602, %v1160
      %v1610 = vmul.f32 %v1601, %v1161
      %v1611 = vmul.f32 %v1600, %v1162
      %v1612 = vmul.f32 %v1599, %v1163
      %v1613 = vmul.f32 %v1598, %v1164
      %v1614 = vmul.f32 %v1597, %v1165
      %v1615 = vmul.f32 %v1596, %v1166
      %v1616 = vmul.f32 %v1595, %v1167
      %v1617 = vmul.f32 %v1594, %v1168
      %v1618 = vmul.f32 %v1593, %v1169
      %v1619 = vmul.f32 %v1592, %v1170
      %v1620 = vmul.f32 %v1591, %v1171
      %v1621 = vmul.f32 %v1590, %v1172
      %v1622 = vmul.f32 %v1589, %v1173
      %v1623 = vmul.f32 %v1588, %v1174
      %v1624 = vmul.f32 %v1587, %v1175
      %v1625 = vmul.f32 %v1586, %v1176
      %v1626 = vmul.f32 %v1585, %v1177
      %v1627 = vmul.f32 %v1584, %v1178
      %v1628 = vmul.f32 %v1583, %v1179
      %v1629 = vmul.f32 %v1582, %v1180
      %v1630 = vmul.f32 %v1581, %v1181
      %v1631 = vmul.f32 %v1580, %v1182
      %v1632 = vmul.f32 %v1579, %v1183
      %v1633 = vmul.f32 %v1578, %v1184
      %v1634 = vmul.f32 %v1577, %v1185
      %v1635 = vmul.f32 %v1576, %v1186
      %v1636 = vmul.f32 %v1575, %v1187
      %v1637 = vmul.f32 %v1574, %v1188
      %v1638 = vmul.f32 %v1539, %v1221
      %v1639 = vmul.f32 %v1540, %v1222
      %v1640 = vmul.f32 %v1509, %v1223
      %v1641 = vmul.f32 %v1510, %v1224
      %v1642 = vmul.f32 %v1511, %v1225
      %v1643 = vmul.f32 %v1512, %v1226
      %v1644 = vmul.f32 %v1513, %v1227
      %v1645 = vmul.f32 %v1514, %v1228
      %v1646 = vmul.f32 %v1515, %v1229
      %v1647 = vmul.f32 %v1516, %v1230
      %v1648 = vmul.f32 %v1517, %v1231
      %v1649 = vmul.f32 %v1518, %v1232
      %v1650 = vmul.f32 %v1519, %v1233
      %v1651 = vmul.f32 %v1520, %v1234
      %v1652 = vmul.f32 %v1521, %v1235
      %v1653 = vmul.f32 %v1522, %v1236
      %v1654 = vmul.f32 %v1523, %v1237
      %v1655 = vmul.f32 %v1524, %v1238
      %v1656 = vmul.f32 %v1525, %v1239
      %v1657 = vmul.f32 %v1526, %v1240
      %v1658 = vmul.f32 %v1527, %v1241
      %v1659 = vmul.f32 %v1528, %v1242
      %v1660 = vmul.f32 %v1529, %v1243
      %v1661 = vmul.f32 %v1530, %v1244
      %v1662 = vmul.f32 %v1531, %v1245
      %v1663 = vmul.f32 %v1532, %v1246
      %v1664 = vmul.f32 %v1533, %v1247
      %v1665 = vmul.f32 %v1534, %v1248
      %v1666 = vmul.f32 %v1535, %v1249
      %v1667 = vmul.f32 %v1536, %v1250
      %v1668 = vmul.f32 %v1537, %v1251
      %v1669 = vmul.f32 %v1538, %v1252
      %v1670 = vmul.f32 %v1575, %v1317
      %v1671 = vmul.f32 %v1574, %v1318
      %v1672 = vmul.f32 %v1605, %v1319
      %v1673 = vmul.f32 %v1604, %v1320
      %v1674 = vmul.f32 %v1603, %v1321
      %v1675 = vmul.f32 %v1602, %v1322
      %v1676 = vmul.f32 %v1601, %v1323
      %v1677 = vmul.f32 %v1600, %v1324
      %v1678 = vmul.f32 %v1599, %v1325
      %v1679 = vmul.f32 %v1598, %v1326
      %v1680 = vmul.f32 %v1597, %v1327
      %v1681 = vmul.f32 %v1596, %v1328
      %v1682 = vmul.f32 %v1595, %v1329
      %v1683 = vmul.f32 %v1594, %v1330
      %v1684 = vmul.f32 %v1593, %v1331
      %v1685 = vmul.f32 %v1592, %v1332
      %v1686 = vmul.f32 %v1591, %v1333
      %v1687 = vmul.f32 %v1590, %v1334
      %v1688 = vmul.f32 %v1589, %v1335
      %v1689 = vmul.f32 %v1588, %v1336
      %v1690 = vmul.f32 %v1587, %v1337
      %v1691 = vmul.f32 %v1586, %v1338
      %v1692 = vmul.f32 %v1585, %v1339
      %v1693 = vmul.f32 %v1584, %v1340
      %v1694 = vmul.f32 %v1583, %v1341
      %v1695 = vmul.f32 %v1582, %v1342
      %v1696 = vmul.f32 %v1581, %v1343
      %v1697 = vmul.f32 %v1580, %v1344
      %v1698 = vmul.f32 %v1579, %v1345
      %v1699 = vmul.f32 %v1578, %v1346
      %v1700 = vmul.f32 %v1577, %v1347
      %v1701 = vmul.f32 %v1576, %v1348
      %1734 = vrot.lane.b32.xlu0 %v1638, 32
      %v1735 = vpop.permute.xlu0 %1734
      %1736 = vrot.lane.b32.xlu0 %v1639, 32
      %v1737 = vpop.permute.xlu0 %1736
      %1738 = vrot.lane.b32.xlu0 %v1640, 32
      %v1739 = vpop.permute.xlu0 %1738
      %1740 = vrot.lane.b32.xlu0 %v1641, 32
      %v1741 = vpop.permute.xlu0 %1740
      %1742 = vrot.lane.b32.xlu0 %v1642, 32
      %v1743 = vpop.permute.xlu0 %1742
      %1744 = vrot.lane.b32.xlu0 %v1643, 32
      %v1745 = vpop.permute.xlu0 %1744
      %1746 = vrot.lane.b32.xlu0 %v1644, 32
      %v1747 = vpop.permute.xlu0 %1746
      %1748 = vrot.lane.b32.xlu0 %v1645, 32
      %v1749 = vpop.permute.xlu0 %1748
      %1750 = vrot.lane.b32.xlu0 %v1646, 32
      %v1751 = vpop.permute.xlu0 %1750
      %1752 = vrot.lane.b32.xlu0 %v1647, 32
      %v1753 = vpop.permute.xlu0 %1752
      %1754 = vrot.lane.b32.xlu0 %v1648, 32
      %v1755 = vpop.permute.xlu0 %1754
      %1756 = vrot.lane.b32.xlu0 %v1649, 32
      %v1757 = vpop.permute.xlu0 %1756
      %1758 = vrot.lane.b32.xlu0 %v1650, 32
      %v1759 = vpop.permute.xlu0 %1758
      %1760 = vrot.lane.b32.xlu0 %v1651, 32
      %v1761 = vpop.permute.xlu0 %1760
      %1762 = vrot.lane.b32.xlu0 %v1652, 32
      %v1763 = vpop.permute.xlu0 %1762
      %1764 = vrot.lane.b32.xlu0 %v1653, 32
      %v1765 = vpop.permute.xlu0 %1764
      %1766 = vrot.lane.b32.xlu0 %v1654, 32
      %v1767 = vpop.permute.xlu0 %1766
      %1768 = vrot.lane.b32.xlu0 %v1655, 32
      %v1769 = vpop.permute.xlu0 %1768
      %1770 = vrot.lane.b32.xlu0 %v1656, 32
      %v1771 = vpop.permute.xlu0 %1770
      %1772 = vrot.lane.b32.xlu0 %v1657, 32
      %v1773 = vpop.permute.xlu0 %1772
      %1774 = vrot.lane.b32.xlu0 %v1658, 32
      %v1775 = vpop.permute.xlu0 %1774
      %1776 = vrot.lane.b32.xlu0 %v1659, 32
      %v1777 = vpop.permute.xlu0 %1776
      %1778 = vrot.lane.b32.xlu0 %v1660, 32
      %v1779 = vpop.permute.xlu0 %1778
      %1780 = vrot.lane.b32.xlu0 %v1661, 32
      %v1781 = vpop.permute.xlu0 %1780
      %1782 = vrot.lane.b32.xlu0 %v1662, 32
      %v1783 = vpop.permute.xlu0 %1782
      %1784 = vrot.lane.b32.xlu0 %v1663, 32
      %v1785 = vpop.permute.xlu0 %1784
      %1786 = vrot.lane.b32.xlu0 %v1664, 32
      %v1787 = vpop.permute.xlu0 %1786
      %1788 = vrot.lane.b32.xlu0 %v1665, 32
      %v1789 = vpop.permute.xlu0 %1788
      %1790 = vrot.lane.b32.xlu0 %v1666, 32
      %v1791 = vpop.permute.xlu0 %1790
      %1792 = vrot.lane.b32.xlu0 %v1667, 32
      %v1793 = vpop.permute.xlu0 %1792
      %1794 = vrot.lane.b32.xlu0 %v1668, 32
      %v1795 = vpop.permute.xlu0 %1794
      %1796 = vrot.lane.b32.xlu0 %v1669, 32
      %v1797 = vpop.permute.xlu0 %1796
      %1862 = vrot.lane.b32.xlu0 %v1606, 64
      %v1863 = vpop.permute.xlu0 %1862
      %1864 = vrot.lane.b32.xlu0 %v1607, 64
      %v1865 = vpop.permute.xlu0 %1864
      %1866 = vrot.lane.b32.xlu0 %v1608, 64
      %v1867 = vpop.permute.xlu0 %1866
      %1868 = vrot.lane.b32.xlu0 %v1609, 64
      %v1869 = vpop.permute.xlu0 %1868
      %1870 = vrot.lane.b32.xlu0 %v1610, 64
      %v1871 = vpop.permute.xlu0 %1870
      %1872 = vrot.lane.b32.xlu0 %v1611, 64
      %v1873 = vpop.permute.xlu0 %1872
      %1874 = vrot.lane.b32.xlu0 %v1612, 64
      %v1875 = vpop.permute.xlu0 %1874
      %1876 = vrot.lane.b32.xlu0 %v1613, 64
      %v1877 = vpop.permute.xlu0 %1876
      %1878 = vrot.lane.b32.xlu0 %v1614, 64
      %v1879 = vpop.permute.xlu0 %1878
      %1880 = vrot.lane.b32.xlu0 %v1615, 64
      %v1881 = vpop.permute.xlu0 %1880
      %1882 = vrot.lane.b32.xlu0 %v1616, 64
      %v1883 = vpop.permute.xlu0 %1882
      %1884 = vrot.lane.b32.xlu0 %v1617, 64
      %v1885 = vpop.permute.xlu0 %1884
      %1886 = vrot.lane.b32.xlu0 %v1618, 64
      %v1887 = vpop.permute.xlu0 %1886
      %1888 = vrot.lane.b32.xlu0 %v1619, 64
      %v1889 = vpop.permute.xlu0 %1888
      %1890 = vrot.lane.b32.xlu0 %v1620, 64
      %v1891 = vpop.permute.xlu0 %1890
      %1892 = vrot.lane.b32.xlu0 %v1621, 64
      %v1893 = vpop.permute.xlu0 %1892
      %1894 = vrot.lane.b32.xlu0 %v1622, 64
      %v1895 = vpop.permute.xlu0 %1894
      %1896 = vrot.lane.b32.xlu0 %v1623, 64
      %v1897 = vpop.permute.xlu0 %1896
      %1898 = vrot.lane.b32.xlu0 %v1624, 64
      %v1899 = vpop.permute.xlu0 %1898
      %1900 = vrot.lane.b32.xlu0 %v1625, 64
      %v1901 = vpop.permute.xlu0 %1900
      %1902 = vrot.lane.b32.xlu0 %v1626, 64
      %v1903 = vpop.permute.xlu0 %1902
      %1904 = vrot.lane.b32.xlu0 %v1627, 64
      %v1905 = vpop.permute.xlu0 %1904
      %1906 = vrot.lane.b32.xlu0 %v1628, 64
      %v1907 = vpop.permute.xlu0 %1906
      %1908 = vrot.lane.b32.xlu0 %v1629, 64
      %v1909 = vpop.permute.xlu0 %1908
      %1910 = vrot.lane.b32.xlu0 %v1630, 64
      %v1911 = vpop.permute.xlu0 %1910
      %1912 = vrot.lane.b32.xlu0 %v1631, 64
      %v1913 = vpop.permute.xlu0 %1912
      %1914 = vrot.lane.b32.xlu0 %v1632, 64
      %v1915 = vpop.permute.xlu0 %1914
      %1916 = vrot.lane.b32.xlu0 %v1633, 64
      %v1917 = vpop.permute.xlu0 %1916
      %1918 = vrot.lane.b32.xlu0 %v1634, 64
      %v1919 = vpop.permute.xlu0 %1918
      %1920 = vrot.lane.b32.xlu0 %v1635, 64
      %v1921 = vpop.permute.xlu0 %1920
      %1922 = vrot.lane.b32.xlu0 %v1636, 64
      %v1923 = vpop.permute.xlu0 %1922
      %1924 = vrot.lane.b32.xlu0 %v1637, 64
      %v1925 = vpop.permute.xlu0 %1924
      %1990 = vrot.lane.b32.xlu0 %v1509, 96
      %v1991 = vpop.permute.xlu0 %1990
      %1992 = vrot.lane.b32.xlu0 %v1510, 96
      %v1993 = vpop.permute.xlu0 %1992
      %1994 = vrot.lane.b32.xlu0 %v1511, 96
      %v1995 = vpop.permute.xlu0 %1994
      %1996 = vrot.lane.b32.xlu0 %v1512, 96
      %v1997 = vpop.permute.xlu0 %1996
      %1998 = vrot.lane.b32.xlu0 %v1513, 96
      %v1999 = vpop.permute.xlu0 %1998
      %2000 = vrot.lane.b32.xlu0 %v1514, 96
      %v2001 = vpop.permute.xlu0 %2000
      %2002 = vrot.lane.b32.xlu0 %v1515, 96
      %v2003 = vpop.permute.xlu0 %2002
      %2004 = vrot.lane.b32.xlu0 %v1516, 96
      %v2005 = vpop.permute.xlu0 %2004
      %2006 = vrot.lane.b32.xlu0 %v1517, 96
      %v2007 = vpop.permute.xlu0 %2006
      %2008 = vrot.lane.b32.xlu0 %v1518, 96
      %v2009 = vpop.permute.xlu0 %2008
      %2010 = vrot.lane.b32.xlu0 %v1519, 96
      %v2011 = vpop.permute.xlu0 %2010
      %2012 = vrot.lane.b32.xlu0 %v1520, 96
      %v2013 = vpop.permute.xlu0 %2012
      %2014 = vrot.lane.b32.xlu0 %v1521, 96
      %v2015 = vpop.permute.xlu0 %2014
      %2016 = vrot.lane.b32.xlu0 %v1522, 96
      %v2017 = vpop.permute.xlu0 %2016
      %2018 = vrot.lane.b32.xlu0 %v1523, 96
      %v2019 = vpop.permute.xlu0 %2018
      %2020 = vrot.lane.b32.xlu0 %v1524, 96
      %v2021 = vpop.permute.xlu0 %2020
      %2022 = vrot.lane.b32.xlu0 %v1525, 96
      %v2023 = vpop.permute.xlu0 %2022
      %2024 = vrot.lane.b32.xlu0 %v1526, 96
      %v2025 = vpop.permute.xlu0 %2024
      %2026 = vrot.lane.b32.xlu0 %v1527, 96
      %v2027 = vpop.permute.xlu0 %2026
      %2028 = vrot.lane.b32.xlu0 %v1528, 96
      %v2029 = vpop.permute.xlu0 %2028
      %2030 = vrot.lane.b32.xlu0 %v1529, 96
      %v2031 = vpop.permute.xlu0 %2030
      %2032 = vrot.lane.b32.xlu0 %v1530, 96
      %v2033 = vpop.permute.xlu0 %2032
      %2034 = vrot.lane.b32.xlu0 %v1531, 96
      %v2035 = vpop.permute.xlu0 %2034
      %2036 = vrot.lane.b32.xlu0 %v1532, 96
      %v2037 = vpop.permute.xlu0 %2036
      %2038 = vrot.lane.b32.xlu0 %v1533, 96
      %v2039 = vpop.permute.xlu0 %2038
      %2040 = vrot.lane.b32.xlu0 %v1534, 96
      %v2041 = vpop.permute.xlu0 %2040
      %2042 = vrot.lane.b32.xlu0 %v1535, 96
      %v2043 = vpop.permute.xlu0 %2042
      %2044 = vrot.lane.b32.xlu0 %v1536, 96
      %v2045 = vpop.permute.xlu0 %2044
      %2046 = vrot.lane.b32.xlu0 %v1537, 96
      %v2047 = vpop.permute.xlu0 %2046
      %2048 = vrot.lane.b32.xlu0 %v1538, 96
      %v2049 = vpop.permute.xlu0 %2048
      %2050 = vrot.lane.b32.xlu0 %v1539, 96
      %v2051 = vpop.permute.xlu0 %2050
      %2052 = vrot.lane.b32.xlu0 %v1540, 96
      %v2053 = vpop.permute.xlu0 %2052
      %vm2086 = vcmask 261120
      %v2087 = vsel %vm2086, %v1670, %v1735
      %v2088 = vsel %vm2086, %v1671, %v1737
      %v2089 = vsel %vm2086, %v1672, %v1739
      %v2090 = vsel %vm2086, %v1673, %v1741
      %v2091 = vsel %vm2086, %v1674, %v1743
      %v2092 = vsel %vm2086, %v1675, %v1745
      %v2093 = vsel %vm2086, %v1676, %v1747
      %v2094 = vsel %vm2086, %v1677, %v1749
      %v2095 = vsel %vm2086, %v1678, %v1751
      %v2096 = vsel %vm2086, %v1679, %v1753
      %v2097 = vsel %vm2086, %v1680, %v1755
      %v2098 = vsel %vm2086, %v1681, %v1757
      %v2099 = vsel %vm2086, %v1682, %v1759
      %v2100 = vsel %vm2086, %v1683, %v1761
      %v2101 = vsel %vm2086, %v1684, %v1763
      %v2102 = vsel %vm2086, %v1685, %v1765
      %v2103 = vsel %vm2086, %v1686, %v1767
      %v2104 = vsel %vm2086, %v1687, %v1769
      %v2105 = vsel %vm2086, %v1688, %v1771
      %v2106 = vsel %vm2086, %v1689, %v1773
      %v2107 = vsel %vm2086, %v1690, %v1775
      %v2108 = vsel %vm2086, %v1691, %v1777
      %v2109 = vsel %vm2086, %v1692, %v1779
      %v2110 = vsel %vm2086, %v1693, %v1781
      %v2111 = vsel %vm2086, %v1694, %v1783
      %v2112 = vsel %vm2086, %v1695, %v1785
      %v2113 = vsel %vm2086, %v1696, %v1787
      %v2114 = vsel %vm2086, %v1697, %v1789
      %v2115 = vsel %vm2086, %v1698, %v1791
      %v2116 = vsel %vm2086, %v1699, %v1793
      %v2117 = vsel %vm2086, %v1700, %v1795
      %v2118 = vsel %vm2086, %v1701, %v1797
      %vm2119 = vcmask 523264
      %v2120 = vsel %vm2119, %v2087, %v1863
      %v2121 = vsel %vm2119, %v2088, %v1865
      %v2122 = vsel %vm2119, %v2089, %v1867
      %v2123 = vsel %vm2119, %v2090, %v1869
      %v2124 = vsel %vm2119, %v2091, %v1871
      %v2125 = vsel %vm2119, %v2092, %v1873
      %v2126 = vsel %vm2119, %v2093, %v1875
      %v2127 = vsel %vm2119, %v2094, %v1877
      %v2128 = vsel %vm2119, %v2095, %v1879
      %v2129 = vsel %vm2119, %v2096, %v1881
      %v2130 = vsel %vm2119, %v2097, %v1883
      %v2131 = vsel %vm2119, %v2098, %v1885
      %v2132 = vsel %vm2119, %v2099, %v1887
      %v2133 = vsel %vm2119, %v2100, %v1889
      %v2134 = vsel %vm2119, %v2101, %v1891
      %v2135 = vsel %vm2119, %v2102, %v1893
      %v2136 = vsel %vm2119, %v2103, %v1895
      %v2137 = vsel %vm2119, %v2104, %v1897
      %v2138 = vsel %vm2119, %v2105, %v1899
      %v2139 = vsel %vm2119, %v2106, %v1901
      %v2140 = vsel %vm2119, %v2107, %v1903
      %v2141 = vsel %vm2119, %v2108, %v1905
      %v2142 = vsel %vm2119, %v2109, %v1907
      %v2143 = vsel %vm2119, %v2110, %v1909
      %v2144 = vsel %vm2119, %v2111, %v1911
      %v2145 = vsel %vm2119, %v2112, %v1913
      %v2146 = vsel %vm2119, %v2113, %v1915
      %v2147 = vsel %vm2119, %v2114, %v1917
      %v2148 = vsel %vm2119, %v2115, %v1919
      %v2149 = vsel %vm2119, %v2116, %v1921
      %v2150 = vsel %vm2119, %v2117, %v1923
      %v2151 = vsel %vm2119, %v2118, %v1925
      %vm2152 = vcmask 785408
      %v2153 = vsel %vm2152, %v2120, %v1991
      %v2154 = vsel %vm2152, %v2121, %v1993
      %v2155 = vsel %vm2152, %v2122, %v1995
      %v2156 = vsel %vm2152, %v2123, %v1997
      %v2157 = vsel %vm2152, %v2124, %v1999
      %v2158 = vsel %vm2152, %v2125, %v2001
      %v2159 = vsel %vm2152, %v2126, %v2003
      %v2160 = vsel %vm2152, %v2127, %v2005
      %v2161 = vsel %vm2152, %v2128, %v2007
      %v2162 = vsel %vm2152, %v2129, %v2009
      %v2163 = vsel %vm2152, %v2130, %v2011
      %v2164 = vsel %vm2152, %v2131, %v2013
      %v2165 = vsel %vm2152, %v2132, %v2015
      %v2166 = vsel %vm2152, %v2133, %v2017
      %v2167 = vsel %vm2152, %v2134, %v2019
      %v2168 = vsel %vm2152, %v2135, %v2021
      %v2169 = vsel %vm2152, %v2136, %v2023
      %v2170 = vsel %vm2152, %v2137, %v2025
      %v2171 = vsel %vm2152, %v2138, %v2027
      %v2172 = vsel %vm2152, %v2139, %v2029
      %v2173 = vsel %vm2152, %v2140, %v2031
      %v2174 = vsel %vm2152, %v2141, %v2033
      %v2175 = vsel %vm2152, %v2142, %v2035
      %v2176 = vsel %vm2152, %v2143, %v2037
      %v2177 = vsel %vm2152, %v2144, %v2039
      %v2178 = vsel %vm2152, %v2145, %v2041
      %v2179 = vsel %vm2152, %v2146, %v2043
      %v2180 = vsel %vm2152, %v2147, %v2045
      %v2181 = vsel %vm2152, %v2148, %v2047
      %v2182 = vsel %vm2152, %v2149, %v2049
      %v2183 = vsel %vm2152, %v2150, %v2051
      %v2184 = vsel %vm2152, %v2151, %v2053
      %v2185 = vpack.c.bf16 %v2154, %v2153
      %v2186 = vpack.c.bf16 %v2156, %v2155
      %v2187 = vpack.c.bf16 %v2158, %v2157
      %v2188 = vpack.c.bf16 %v2160, %v2159
      %v2189 = vpack.c.bf16 %v2162, %v2161
      %v2190 = vpack.c.bf16 %v2164, %v2163
      %v2191 = vpack.c.bf16 %v2166, %v2165
      %v2192 = vpack.c.bf16 %v2168, %v2167
      %v2193 = vpack.c.bf16 %v2170, %v2169
      %v2194 = vpack.c.bf16 %v2172, %v2171
      %v2195 = vpack.c.bf16 %v2174, %v2173
      %v2196 = vpack.c.bf16 %v2176, %v2175
      %v2197 = vpack.c.bf16 %v2178, %v2177
      %v2198 = vpack.c.bf16 %v2180, %v2179
      %v2199 = vpack.c.bf16 %v2182, %v2181
      %v2200 = vpack.c.bf16 %v2184, %v2183
      %v2201 = vld [vmem:[%s1] sm:$0xf]
      %v2202 = vld [vmem:[%s1 + $0x4] sm:$0xf]
      %v2203 = vld [vmem:[%s1 + $0x8] sm:$0xf]
      %v2204 = vld [vmem:[%s1 + $0xc] sm:$0xf]
      %v2205 = vld [vmem:[%s1 + $0x10] sm:$0xf]
      %v2206 = vld [vmem:[%s1 + $0x14] sm:$0xf]
      %v2207 = vld [vmem:[%s1 + $0x18] sm:$0xf]
      %v2208 = vld [vmem:[%s1 + $0x1c] sm:$0xf]
      %v2209 = vld [vmem:[%s1 + $0x20] sm:$0xf]
      %v2210 = vld [vmem:[%s1 + $0x24] sm:$0xf]
      %v2211 = vld [vmem:[%s1 + $0x28] sm:$0xf]
      %v2212 = vld [vmem:[%s1 + $0x2c] sm:$0xf]
      %v2213 = vld [vmem:[%s1 + $0x30] sm:$0xf]
      %v2214 = vld [vmem:[%s1 + $0x34] sm:$0xf]
      %v2215 = vld [vmem:[%s1 + $0x38] sm:$0xf]
      %v2216 = vld [vmem:[%s1 + $0x3c] sm:$0xf]
      %v2217 = vld [vmem:[%s2] sm:$0x1]
      %v2219 = vperm.slane %v2217, 0
      %v2237 = vunpack.c.l.b16 %v2201
      %v2238 = vunpack.c.l.b16 %v2202
      %v2239 = vunpack.c.l.b16 %v2203
      %v2240 = vunpack.c.l.b16 %v2204
      %v2241 = vunpack.c.l.b16 %v2205
      %v2242 = vunpack.c.l.b16 %v2206
      %v2243 = vunpack.c.l.b16 %v2207
      %v2244 = vunpack.c.l.b16 %v2208
      %v2245 = vunpack.c.l.b16 %v2209
      %v2246 = vunpack.c.l.b16 %v2210
      %v2247 = vunpack.c.l.b16 %v2211
      %v2248 = vunpack.c.l.b16 %v2212
      %v2249 = vunpack.c.l.b16 %v2213
      %v2250 = vunpack.c.l.b16 %v2214
      %v2251 = vunpack.c.l.b16 %v2215
      %v2252 = vunpack.c.l.b16 %v2216
      %v2253 = vpack.c.b16 %v2238, %v2237
      %v2254 = vpack.c.b16 %v2240, %v2239
      %v2255 = vpack.c.b16 %v2242, %v2241
      %v2256 = vpack.c.b16 %v2244, %v2243
      %v2257 = vpack.c.b16 %v2246, %v2245
      %v2258 = vpack.c.b16 %v2248, %v2247
      %v2259 = vpack.c.b16 %v2250, %v2249
      %v2260 = vpack.c.b16 %v2252, %v2251
      %2269 = vmatpush.bf16.msra.mxu0 %v2260
      %2270 = vmatpush.bf16.msra.mxu0 %v2259
      %2271 = vmatpush.bf16.msra.mxu0 %v2258
      %2272 = vmatpush.bf16.msra.mxu0 %v2257
      %2273 = vmatpush.bf16.msra.mxu0 %v2256
      %2274 = vmatpush.bf16.msra.mxu0 %v2255
      %2275 = vmatpush.bf16.msra.mxu0 %v2254
      %2276 = vmatpush.bf16.msra.mxu0 %v2253
      %2277 = vmatmul.bf16.gmra.mxu0 %v2185
      %v2278 = vpop.f32.mrf.mxu0
      %v2279 = vadd.f32 %v2219, %v2278
      %v2280 = vpop.f32.mrf.mxu0
      %v2281 = vadd.f32 %v2219, %v2280
      %2282 = vmatmul.bf16.gmra.mxu0 %v2186
      %v2283 = vpop.f32.mrf.mxu0
      %v2284 = vadd.f32 %v2219, %v2283
      %v2285 = vpop.f32.mrf.mxu0
      %v2286 = vadd.f32 %v2219, %v2285
      %2287 = vmatmul.bf16.gmra.mxu0 %v2187
      %v2288 = vpop.f32.mrf.mxu0
      %v2289 = vadd.f32 %v2219, %v2288
      %v2290 = vpop.f32.mrf.mxu0
      %v2291 = vadd.f32 %v2219, %v2290
      %2292 = vmatmul.bf16.gmra.mxu0 %v2188
      %v2293 = vpop.f32.mrf.mxu0
      %v2294 = vadd.f32 %v2219, %v2293
      %v2295 = vpop.f32.mrf.mxu0
      %v2296 = vadd.f32 %v2219, %v2295
      %2297 = vmatmul.bf16.gmra.mxu0 %v2189
      %v2298 = vpop.f32.mrf.mxu0
      %v2299 = vadd.f32 %v2219, %v2298
      %v2300 = vpop.f32.mrf.mxu0
      %v2301 = vadd.f32 %v2219, %v2300
      %2302 = vmatmul.bf16.gmra.mxu0 %v2190
      %v2303 = vpop.f32.mrf.mxu0
      %v2304 = vadd.f32 %v2219, %v2303
      %v2305 = vpop.f32.mrf.mxu0
      %v2306 = vadd.f32 %v2219, %v2305
      %2307 = vmatmul.bf16.gmra.mxu0 %v2191
      %v2308 = vpop.f32.mrf.mxu0
      %v2309 = vadd.f32 %v2219, %v2308
      %v2310 = vpop.f32.mrf.mxu0
      %v2311 = vadd.f32 %v2219, %v2310
      %2312 = vmatmul.bf16.gmra.mxu0 %v2192
      %v2313 = vpop.f32.mrf.mxu0
      %v2314 = vadd.f32 %v2219, %v2313
      %v2315 = vpop.f32.mrf.mxu0
      %v2316 = vadd.f32 %v2219, %v2315
      %2317 = vmatmul.bf16.gmra.mxu0 %v2193
      %v2318 = vpop.f32.mrf.mxu0
      %v2319 = vadd.f32 %v2219, %v2318
      %v2320 = vpop.f32.mrf.mxu0
      %v2321 = vadd.f32 %v2219, %v2320
      %2322 = vmatmul.bf16.gmra.mxu0 %v2194
      %v2323 = vpop.f32.mrf.mxu0
      %v2324 = vadd.f32 %v2219, %v2323
      %v2325 = vpop.f32.mrf.mxu0
      %v2326 = vadd.f32 %v2219, %v2325
      %2327 = vmatmul.bf16.gmra.mxu0 %v2195
      %v2328 = vpop.f32.mrf.mxu0
      %v2329 = vadd.f32 %v2219, %v2328
      %v2330 = vpop.f32.mrf.mxu0
      %v2331 = vadd.f32 %v2219, %v2330
      %2332 = vmatmul.bf16.gmra.mxu0 %v2196
      %v2333 = vpop.f32.mrf.mxu0
      %v2334 = vadd.f32 %v2219, %v2333
      %v2335 = vpop.f32.mrf.mxu0
      %v2336 = vadd.f32 %v2219, %v2335
      %2337 = vmatmul.bf16.gmra.mxu0 %v2197
      %v2338 = vpop.f32.mrf.mxu0
      %v2339 = vadd.f32 %v2219, %v2338
      %v2340 = vpop.f32.mrf.mxu0
      %v2341 = vadd.f32 %v2219, %v2340
      %2342 = vmatmul.bf16.gmra.mxu0 %v2198
      %v2343 = vpop.f32.mrf.mxu0
      %v2344 = vadd.f32 %v2219, %v2343
      %v2345 = vpop.f32.mrf.mxu0
      %v2346 = vadd.f32 %v2219, %v2345
      %2347 = vmatmul.bf16.gmra.mxu0 %v2199
      %v2348 = vpop.f32.mrf.mxu0
      %v2349 = vadd.f32 %v2219, %v2348
      %v2350 = vpop.f32.mrf.mxu0
      %v2351 = vadd.f32 %v2219, %v2350
      %2352 = vmatmul.bf16.gmra.mxu0 %v2200
      %v2353 = vpop.f32.mrf.mxu0
      %v2354 = vadd.f32 %v2219, %v2353
      %v2355 = vpop.f32.mrf.mxu0
      %v2356 = vadd.f32 %v2219, %v2355
      %2357 = vdwg.mxu0
      %vm2358 = vcmp.gt.f32.partialorder %v2279, 0.0
      %vm2359 = vcmp.gt.f32.partialorder %v2281, 0.0
      %vm2360 = vcmp.gt.f32.partialorder %v2284, 0.0
      %vm2361 = vcmp.gt.f32.partialorder %v2286, 0.0
      %vm2362 = vcmp.gt.f32.partialorder %v2289, 0.0
      %vm2363 = vcmp.gt.f32.partialorder %v2291, 0.0
      %vm2364 = vcmp.gt.f32.partialorder %v2294, 0.0
      %vm2365 = vcmp.gt.f32.partialorder %v2296, 0.0
      %vm2366 = vcmp.gt.f32.partialorder %v2299, 0.0
      %vm2367 = vcmp.gt.f32.partialorder %v2301, 0.0
      %vm2368 = vcmp.gt.f32.partialorder %v2304, 0.0
      %vm2369 = vcmp.gt.f32.partialorder %v2306, 0.0
      %vm2370 = vcmp.gt.f32.partialorder %v2309, 0.0
      %vm2371 = vcmp.gt.f32.partialorder %v2311, 0.0
      %vm2372 = vcmp.gt.f32.partialorder %v2314, 0.0
      %vm2373 = vcmp.gt.f32.partialorder %v2316, 0.0
      %vm2374 = vcmp.gt.f32.partialorder %v2319, 0.0
      %vm2375 = vcmp.gt.f32.partialorder %v2321, 0.0
      %vm2376 = vcmp.gt.f32.partialorder %v2324, 0.0
      %vm2377 = vcmp.gt.f32.partialorder %v2326, 0.0
      %vm2378 = vcmp.gt.f32.partialorder %v2329, 0.0
      %vm2379 = vcmp.gt.f32.partialorder %v2331, 0.0
      %vm2380 = vcmp.gt.f32.partialorder %v2334, 0.0
      %vm2381 = vcmp.gt.f32.partialorder %v2336, 0.0
      %vm2382 = vcmp.gt.f32.partialorder %v2339, 0.0
      %vm2383 = vcmp.gt.f32.partialorder %v2341, 0.0
      %vm2384 = vcmp.gt.f32.partialorder %v2344, 0.0
      %vm2385 = vcmp.gt.f32.partialorder %v2346, 0.0
      %vm2386 = vcmp.gt.f32.partialorder %v2349, 0.0
      %vm2387 = vcmp.gt.f32.partialorder %v2351, 0.0
      %vm2388 = vcmp.gt.f32.partialorder %v2354, 0.0
      %vm2389 = vcmp.gt.f32.partialorder %v2356, 0.0
      %v2390 = vmin.f32 %v2279, 0.0
      %v2391 = vmin.f32 %v2281, 0.0
      %v2392 = vmin.f32 %v2284, 0.0
      %v2393 = vmin.f32 %v2286, 0.0
      %v2394 = vmin.f32 %v2289, 0.0
      %v2395 = vmin.f32 %v2291, 0.0
      %v2396 = vmin.f32 %v2294, 0.0
      %v2397 = vmin.f32 %v2296, 0.0
      %v2398 = vmin.f32 %v2299, 0.0
      %v2399 = vmin.f32 %v2301, 0.0
      %v2400 = vmin.f32 %v2304, 0.0
      %v2401 = vmin.f32 %v2306, 0.0
      %v2402 = vmin.f32 %v2309, 0.0
      %v2403 = vmin.f32 %v2311, 0.0
      %v2404 = vmin.f32 %v2314, 0.0
      %v2405 = vmin.f32 %v2316, 0.0
      %v2406 = vmin.f32 %v2319, 0.0
      %v2407 = vmin.f32 %v2321, 0.0
      %v2408 = vmin.f32 %v2324, 0.0
      %v2409 = vmin.f32 %v2326, 0.0
      %v2410 = vmin.f32 %v2329, 0.0
      %v2411 = vmin.f32 %v2331, 0.0
      %v2412 = vmin.f32 %v2334, 0.0
      %v2413 = vmin.f32 %v2336, 0.0
      %v2414 = vmin.f32 %v2339, 0.0
      %v2415 = vmin.f32 %v2341, 0.0
      %v2416 = vmin.f32 %v2344, 0.0
      %v2417 = vmin.f32 %v2346, 0.0
      %v2418 = vmin.f32 %v2349, 0.0
      %v2419 = vmin.f32 %v2351, 0.0
      %v2420 = vmin.f32 %v2354, 0.0
      %v2421 = vmin.f32 %v2356, 0.0
      %v2422 = vmul.f32 %v2390, 1.442695
      %v2423 = vpow.pop %v2422
      %v2424 = vmul.f32 %v2391, 1.442695
      %v2425 = vpow.pop %v2424
      %v2426 = vmul.f32 %v2392, 1.442695
      %v2427 = vpow.pop %v2426
      %v2428 = vmul.f32 %v2393, 1.442695
      %v2429 = vpow.pop %v2428
      %v2430 = vmul.f32 %v2394, 1.442695
      %v2431 = vpow.pop %v2430
      %v2432 = vmul.f32 %v2395, 1.442695
      %v2433 = vpow.pop %v2432
      %v2434 = vmul.f32 %v2396, 1.442695
      %v2435 = vpow.pop %v2434
      %v2436 = vmul.f32 %v2397, 1.442695
      %v2437 = vpow.pop %v2436
      %v2438 = vmul.f32 %v2398, 1.442695
      %v2439 = vpow.pop %v2438
      %v2440 = vmul.f32 %v2399, 1.442695
      %v2441 = vpow.pop %v2440
      %v2442 = vmul.f32 %v2400, 1.442695
      %v2443 = vpow.pop %v2442
      %v2444 = vmul.f32 %v2401, 1.442695
      %v2445 = vpow.pop %v2444
      %v2446 = vmul.f32 %v2402, 1.442695
      %v2447 = vpow.pop %v2446
      %v2448 = vmul.f32 %v2403, 1.442695
      %v2449 = vpow.pop %v2448
      %v2450 = vmul.f32 %v2404, 1.442695
      %v2451 = vpow.pop %v2450
      %v2452 = vmul.f32 %v2405, 1.442695
      %v2453 = vpow.pop %v2452
      %v2454 = vmul.f32 %v2406, 1.442695
      %v2455 = vpow.pop %v2454
      %v2456 = vmul.f32 %v2407, 1.442695
      %v2457 = vpow.pop %v2456
      %v2458 = vmul.f32 %v2408, 1.442695
      %v2459 = vpow.pop %v2458
      %v2460 = vmul.f32 %v2409, 1.442695
      %v2461 = vpow.pop %v2460
      %v2462 = vmul.f32 %v2410, 1.442695
      %v2463 = vpow.pop %v2462
      %v2464 = vmul.f32 %v2411, 1.442695
      %v2465 = vpow.pop %v2464
      %v2466 = vmul.f32 %v2412, 1.442695
      %v2467 = vpow.pop %v2466
      %v2468 = vmul.f32 %v2413, 1.442695
      %v2469 = vpow.pop %v2468
      %v2470 = vmul.f32 %v2414, 1.442695
      %v2471 = vpow.pop %v2470
      %v2472 = vmul.f32 %v2415, 1.442695
      %v2473 = vpow.pop %v2472
      %v2474 = vmul.f32 %v2416, 1.442695
      %v2475 = vpow.pop %v2474
      %v2476 = vmul.f32 %v2417, 1.442695
      %v2477 = vpow.pop %v2476
      %v2478 = vmul.f32 %v2418, 1.442695
      %v2479 = vpow.pop %v2478
      %v2480 = vmul.f32 %v2419, 1.442695
      %v2481 = vpow.pop %v2480
      %v2482 = vmul.f32 %v2420, 1.442695
      %v2483 = vpow.pop %v2482
      %v2484 = vmul.f32 %v2421, 1.442695
      %v2485 = vpow.pop %v2484
      %v2486 = vsub.f32 %v2423, 1.0
      %v2487 = vsub.f32 %v2425, 1.0
      %v2488 = vsub.f32 %v2427, 1.0
      %v2489 = vsub.f32 %v2429, 1.0
      %v2490 = vsub.f32 %v2431, 1.0
      %v2491 = vsub.f32 %v2433, 1.0
      %v2492 = vsub.f32 %v2435, 1.0
      %v2493 = vsub.f32 %v2437, 1.0
      %v2494 = vsub.f32 %v2439, 1.0
      %v2495 = vsub.f32 %v2441, 1.0
      %v2496 = vsub.f32 %v2443, 1.0
      %v2497 = vsub.f32 %v2445, 1.0
      %v2498 = vsub.f32 %v2447, 1.0
      %v2499 = vsub.f32 %v2449, 1.0
      %v2500 = vsub.f32 %v2451, 1.0
      %v2501 = vsub.f32 %v2453, 1.0
      %v2502 = vsub.f32 %v2455, 1.0
      %v2503 = vsub.f32 %v2457, 1.0
      %v2504 = vsub.f32 %v2459, 1.0
      %v2505 = vsub.f32 %v2461, 1.0
      %v2506 = vsub.f32 %v2463, 1.0
      %v2507 = vsub.f32 %v2465, 1.0
      %v2508 = vsub.f32 %v2467, 1.0
      %v2509 = vsub.f32 %v2469, 1.0
      %v2510 = vsub.f32 %v2471, 1.0
      %v2511 = vsub.f32 %v2473, 1.0
      %v2512 = vsub.f32 %v2475, 1.0
      %v2513 = vsub.f32 %v2477, 1.0
      %v2514 = vsub.f32 %v2479, 1.0
      %v2515 = vsub.f32 %v2481, 1.0
      %v2516 = vsub.f32 %v2483, 1.0
      %v2517 = vsub.f32 %v2485, 1.0
      %v2518 = vsel %vm2358, %v2279, %v2486
      %v2519 = vsel %vm2359, %v2281, %v2487
      %v2520 = vsel %vm2360, %v2284, %v2488
      %v2521 = vsel %vm2361, %v2286, %v2489
      %v2522 = vsel %vm2362, %v2289, %v2490
      %v2523 = vsel %vm2363, %v2291, %v2491
      %v2524 = vsel %vm2364, %v2294, %v2492
      %v2525 = vsel %vm2365, %v2296, %v2493
      %v2526 = vsel %vm2366, %v2299, %v2494
      %v2527 = vsel %vm2367, %v2301, %v2495
      %v2528 = vsel %vm2368, %v2304, %v2496
      %v2529 = vsel %vm2369, %v2306, %v2497
      %v2530 = vsel %vm2370, %v2309, %v2498
      %v2531 = vsel %vm2371, %v2311, %v2499
      %v2532 = vsel %vm2372, %v2314, %v2500
      %v2533 = vsel %vm2373, %v2316, %v2501
      %v2534 = vsel %vm2374, %v2319, %v2502
      %v2535 = vsel %vm2375, %v2321, %v2503
      %v2536 = vsel %vm2376, %v2324, %v2504
      %v2537 = vsel %vm2377, %v2326, %v2505
      %v2538 = vsel %vm2378, %v2329, %v2506
      %v2539 = vsel %vm2379, %v2331, %v2507
      %v2540 = vsel %vm2380, %v2334, %v2508
      %v2541 = vsel %vm2381, %v2336, %v2509
      %v2542 = vsel %vm2382, %v2339, %v2510
      %v2543 = vsel %vm2383, %v2341, %v2511
      %v2544 = vsel %vm2384, %v2344, %v2512
      %v2545 = vsel %vm2385, %v2346, %v2513
      %v2546 = vsel %vm2386, %v2349, %v2514
      %v2547 = vsel %vm2387, %v2351, %v2515
      %v2548 = vsel %vm2388, %v2354, %v2516
      %v2549 = vsel %vm2389, %v2356, %v2517
      %v2550 = vrot.slane %v2518, 7
      %v2551 = vrot.slane %v2519, 7
      %v2552 = vrot.slane %v2520, 7
      %v2553 = vrot.slane %v2521, 7
      %v2554 = vrot.slane %v2522, 7
      %v2555 = vrot.slane %v2523, 7
      %v2556 = vrot.slane %v2524, 7
      %v2557 = vrot.slane %v2525, 7
      %v2558 = vrot.slane %v2526, 7
      %v2559 = vrot.slane %v2527, 7
      %v2560 = vrot.slane %v2528, 7
      %v2561 = vrot.slane %v2529, 7
      %v2562 = vrot.slane %v2530, 7
      %v2563 = vrot.slane %v2531, 7
      %v2564 = vrot.slane %v2532, 7
      %v2565 = vrot.slane %v2533, 7
      %v2566 = vrot.slane %v2534, 7
      %v2567 = vrot.slane %v2535, 7
      %v2568 = vrot.slane %v2536, 7
      %v2569 = vrot.slane %v2537, 7
      %v2570 = vrot.slane %v2538, 7
      %v2571 = vrot.slane %v2539, 7
      %v2572 = vrot.slane %v2540, 7
      %v2573 = vrot.slane %v2541, 7
      %v2574 = vrot.slane %v2542, 7
      %v2575 = vrot.slane %v2543, 7
      %v2576 = vrot.slane %v2544, 7
      %v2577 = vrot.slane %v2545, 7
      %v2578 = vrot.slane %v2546, 7
      %v2579 = vrot.slane %v2547, 7
      %v2580 = vrot.slane %v2548, 7
      %v2581 = vrot.slane %v2549, 7
      %v2582 = vsel %vm1573, %v2580, %v2581
      %v2583 = vsel %vm1573, %v2579, %v2580
      %v2584 = vsel %vm1573, %v2578, %v2579
      %v2585 = vsel %vm1573, %v2577, %v2578
      %v2586 = vsel %vm1573, %v2576, %v2577
      %v2587 = vsel %vm1573, %v2575, %v2576
      %v2588 = vsel %vm1573, %v2574, %v2575
      %v2589 = vsel %vm1573, %v2573, %v2574
      %v2590 = vsel %vm1573, %v2572, %v2573
      %v2591 = vsel %vm1573, %v2571, %v2572
      %v2592 = vsel %vm1573, %v2570, %v2571
      %v2593 = vsel %vm1573, %v2569, %v2570
      %v2594 = vsel %vm1573, %v2568, %v2569
      %v2595 = vsel %vm1573, %v2567, %v2568
      %v2596 = vsel %vm1573, %v2566, %v2567
      %v2597 = vsel %vm1573, %v2565, %v2566
      %v2598 = vsel %vm1573, %v2564, %v2565
      %v2599 = vsel %vm1573, %v2563, %v2564
      %v2600 = vsel %vm1573, %v2562, %v2563
      %v2601 = vsel %vm1573, %v2561, %v2562
      %v2602 = vsel %vm1573, %v2560, %v2561
      %v2603 = vsel %vm1573, %v2559, %v2560
      %v2604 = vsel %vm1573, %v2558, %v2559
      %v2605 = vsel %vm1573, %v2557, %v2558
      %v2606 = vsel %vm1573, %v2556, %v2557
      %v2607 = vsel %vm1573, %v2555, %v2556
      %v2608 = vsel %vm1573, %v2554, %v2555
      %v2609 = vsel %vm1573, %v2553, %v2554
      %v2610 = vsel %vm1573, %v2552, %v2553
      %v2611 = vsel %vm1573, %v2551, %v2552
      %v2612 = vsel %vm1573, %v2550, %v2551
      %v2613 = vsel %vm1573, %v2581, %v2550
      %v2614 = vmul.f32 %v2613, %v1157
      %v2615 = vmul.f32 %v2612, %v1158
      %v2616 = vmul.f32 %v2611, %v1159
      %v2617 = vmul.f32 %v2610, %v1160
      %v2618 = vmul.f32 %v2609, %v1161
      %v2619 = vmul.f32 %v2608, %v1162
      %v2620 = vmul.f32 %v2607, %v1163
      %v2621 = vmul.f32 %v2606, %v1164
      %v2622 = vmul.f32 %v2605, %v1165
      %v2623 = vmul.f32 %v2604, %v1166
      %v2624 = vmul.f32 %v2603, %v1167
      %v2625 = vmul.f32 %v2602, %v1168
      %v2626 = vmul.f32 %v2601, %v1169
      %v2627 = vmul.f32 %v2600, %v1170
      %v2628 = vmul.f32 %v2599, %v1171
      %v2629 = vmul.f32 %v2598, %v1172
      %v2630 = vmul.f32 %v2597, %v1173
      %v2631 = vmul.f32 %v2596, %v1174
      %v2632 = vmul.f32 %v2595, %v1175
      %v2633 = vmul.f32 %v2594, %v1176
      %v2634 = vmul.f32 %v2593, %v1177
      %v2635 = vmul.f32 %v2592, %v1178
      %v2636 = vmul.f32 %v2591, %v1179
      %v2637 = vmul.f32 %v2590, %v1180
      %v2638 = vmul.f32 %v2589, %v1181
      %v2639 = vmul.f32 %v2588, %v1182
      %v2640 = vmul.f32 %v2587, %v1183
      %v2641 = vmul.f32 %v2586, %v1184
      %v2642 = vmul.f32 %v2585, %v1185
      %v2643 = vmul.f32 %v2584, %v1186
      %v2644 = vmul.f32 %v2583, %v1187
      %v2645 = vmul.f32 %v2582, %v1188
      %v2646 = vmul.f32 %v2548, %v1221
      %v2647 = vmul.f32 %v2549, %v1222
      %v2648 = vmul.f32 %v2518, %v1223
      %v2649 = vmul.f32 %v2519, %v1224
      %v2650 = vmul.f32 %v2520, %v1225
      %v2651 = vmul.f32 %v2521, %v1226
      %v2652 = vmul.f32 %v2522, %v1227
      %v2653 = vmul.f32 %v2523, %v1228
      %v2654 = vmul.f32 %v2524, %v1229
      %v2655 = vmul.f32 %v2525, %v1230
      %v2656 = vmul.f32 %v2526, %v1231
      %v2657 = vmul.f32 %v2527, %v1232
      %v2658 = vmul.f32 %v2528, %v1233
      %v2659 = vmul.f32 %v2529, %v1234
      %v2660 = vmul.f32 %v2530, %v1235
      %v2661 = vmul.f32 %v2531, %v1236
      %v2662 = vmul.f32 %v2532, %v1237
      %v2663 = vmul.f32 %v2533, %v1238
      %v2664 = vmul.f32 %v2534, %v1239
      %v2665 = vmul.f32 %v2535, %v1240
      %v2666 = vmul.f32 %v2536, %v1241
      %v2667 = vmul.f32 %v2537, %v1242
      %v2668 = vmul.f32 %v2538, %v1243
      %v2669 = vmul.f32 %v2539, %v1244
      %v2670 = vmul.f32 %v2540, %v1245
      %v2671 = vmul.f32 %v2541, %v1246
      %v2672 = vmul.f32 %v2542, %v1247
      %v2673 = vmul.f32 %v2543, %v1248
      %v2674 = vmul.f32 %v2544, %v1249
      %v2675 = vmul.f32 %v2545, %v1250
      %v2676 = vmul.f32 %v2546, %v1251
      %v2677 = vmul.f32 %v2547, %v1252
      %v2678 = vmul.f32 %v2583, %v1317
      %v2679 = vmul.f32 %v2582, %v1318
      %v2680 = vmul.f32 %v2613, %v1319
      %v2681 = vmul.f32 %v2612, %v1320
      %v2682 = vmul.f32 %v2611, %v1321
      %v2683 = vmul.f32 %v2610, %v1322
      %v2684 = vmul.f32 %v2609, %v1323
      %v2685 = vmul.f32 %v2608, %v1324
      %v2686 = vmul.f32 %v2607, %v1325
      %v2687 = vmul.f32 %v2606, %v1326
      %v2688 = vmul.f32 %v2605, %v1327
      %v2689 = vmul.f32 %v2604, %v1328
      %v2690 = vmul.f32 %v2603, %v1329
      %v2691 = vmul.f32 %v2602, %v1330
      %v2692 = vmul.f32 %v2601, %v1331
      %v2693 = vmul.f32 %v2600, %v1332
      %v2694 = vmul.f32 %v2599, %v1333
      %v2695 = vmul.f32 %v2598, %v1334
      %v2696 = vmul.f32 %v2597, %v1335
      %v2697 = vmul.f32 %v2596, %v1336
      %v2698 = vmul.f32 %v2595, %v1337
      %v2699 = vmul.f32 %v2594, %v1338
      %v2700 = vmul.f32 %v2593, %v1339
      %v2701 = vmul.f32 %v2592, %v1340
      %v2702 = vmul.f32 %v2591, %v1341
      %v2703 = vmul.f32 %v2590, %v1342
      %v2704 = vmul.f32 %v2589, %v1343
      %v2705 = vmul.f32 %v2588, %v1344
      %v2706 = vmul.f32 %v2587, %v1345
      %v2707 = vmul.f32 %v2586, %v1346
      %v2708 = vmul.f32 %v2585, %v1347
      %v2709 = vmul.f32 %v2584, %v1348
      %2742 = vrot.lane.b32.xlu0 %v2646, 32
      %v2743 = vpop.permute.xlu0 %2742
      %2744 = vrot.lane.b32.xlu0 %v2647, 32
      %v2745 = vpop.permute.xlu0 %2744
      %2746 = vrot.lane.b32.xlu0 %v2648, 32
      %v2747 = vpop.permute.xlu0 %2746
      %2748 = vrot.lane.b32.xlu0 %v2649, 32
      %v2749 = vpop.permute.xlu0 %2748
      %2750 = vrot.lane.b32.xlu0 %v2650, 32
      %v2751 = vpop.permute.xlu0 %2750
      %2752 = vrot.lane.b32.xlu0 %v2651, 32
      %v2753 = vpop.permute.xlu0 %2752
      %2754 = vrot.lane.b32.xlu0 %v2652, 32
      %v2755 = vpop.permute.xlu0 %2754
      %2756 = vrot.lane.b32.xlu0 %v2653, 32
      %v2757 = vpop.permute.xlu0 %2756
      %2758 = vrot.lane.b32.xlu0 %v2654, 32
      %v2759 = vpop.permute.xlu0 %2758
      %2760 = vrot.lane.b32.xlu0 %v2655, 32
      %v2761 = vpop.permute.xlu0 %2760
      %2762 = vrot.lane.b32.xlu0 %v2656, 32
      %v2763 = vpop.permute.xlu0 %2762
      %2764 = vrot.lane.b32.xlu0 %v2657, 32
      %v2765 = vpop.permute.xlu0 %2764
      %2766 = vrot.lane.b32.xlu0 %v2658, 32
      %v2767 = vpop.permute.xlu0 %2766
      %2768 = vrot.lane.b32.xlu0 %v2659, 32
      %v2769 = vpop.permute.xlu0 %2768
      %2770 = vrot.lane.b32.xlu0 %v2660, 32
      %v2771 = vpop.permute.xlu0 %2770
      %2772 = vrot.lane.b32.xlu0 %v2661, 32
      %v2773 = vpop.permute.xlu0 %2772
      %2774 = vrot.lane.b32.xlu0 %v2662, 32
      %v2775 = vpop.permute.xlu0 %2774
      %2776 = vrot.lane.b32.xlu0 %v2663, 32
      %v2777 = vpop.permute.xlu0 %2776
      %2778 = vrot.lane.b32.xlu0 %v2664, 32
      %v2779 = vpop.permute.xlu0 %2778
      %2780 = vrot.lane.b32.xlu0 %v2665, 32
      %v2781 = vpop.permute.xlu0 %2780
      %2782 = vrot.lane.b32.xlu0 %v2666, 32
      %v2783 = vpop.permute.xlu0 %2782
      %2784 = vrot.lane.b32.xlu0 %v2667, 32
      %v2785 = vpop.permute.xlu0 %2784
      %2786 = vrot.lane.b32.xlu0 %v2668, 32
      %v2787 = vpop.permute.xlu0 %2786
      %2788 = vrot.lane.b32.xlu0 %v2669, 32
      %v2789 = vpop.permute.xlu0 %2788
      %2790 = vrot.lane.b32.xlu0 %v2670, 32
      %v2791 = vpop.permute.xlu0 %2790
      %2792 = vrot.lane.b32.xlu0 %v2671, 32
      %v2793 = vpop.permute.xlu0 %2792
      %2794 = vrot.lane.b32.xlu0 %v2672, 32
      %v2795 = vpop.permute.xlu0 %2794
      %2796 = vrot.lane.b32.xlu0 %v2673, 32
      %v2797 = vpop.permute.xlu0 %2796
      %2798 = vrot.lane.b32.xlu0 %v2674, 32
      %v2799 = vpop.permute.xlu0 %2798
      %2800 = vrot.lane.b32.xlu0 %v2675, 32
      %v2801 = vpop.permute.xlu0 %2800
      %2802 = vrot.lane.b32.xlu0 %v2676, 32
      %v2803 = vpop.permute.xlu0 %2802
      %2804 = vrot.lane.b32.xlu0 %v2677, 32
      %v2805 = vpop.permute.xlu0 %2804
      %2870 = vrot.lane.b32.xlu0 %v2614, 64
      %v2871 = vpop.permute.xlu0 %2870
      %2872 = vrot.lane.b32.xlu0 %v2615, 64
      %v2873 = vpop.permute.xlu0 %2872
      %2874 = vrot.lane.b32.xlu0 %v2616, 64
      %v2875 = vpop.permute.xlu0 %2874
      %2876 = vrot.lane.b32.xlu0 %v2617, 64
      %v2877 = vpop.permute.xlu0 %2876
      %2878 = vrot.lane.b32.xlu0 %v2618, 64
      %v2879 = vpop.permute.xlu0 %2878
      %2880 = vrot.lane.b32.xlu0 %v2619, 64
      %v2881 = vpop.permute.xlu0 %2880
      %2882 = vrot.lane.b32.xlu0 %v2620, 64
      %v2883 = vpop.permute.xlu0 %2882
      %2884 = vrot.lane.b32.xlu0 %v2621, 64
      %v2885 = vpop.permute.xlu0 %2884
      %2886 = vrot.lane.b32.xlu0 %v2622, 64
      %v2887 = vpop.permute.xlu0 %2886
      %2888 = vrot.lane.b32.xlu0 %v2623, 64
      %v2889 = vpop.permute.xlu0 %2888
      %2890 = vrot.lane.b32.xlu0 %v2624, 64
      %v2891 = vpop.permute.xlu0 %2890
      %2892 = vrot.lane.b32.xlu0 %v2625, 64
      %v2893 = vpop.permute.xlu0 %2892
      %2894 = vrot.lane.b32.xlu0 %v2626, 64
      %v2895 = vpop.permute.xlu0 %2894
      %2896 = vrot.lane.b32.xlu0 %v2627, 64
      %v2897 = vpop.permute.xlu0 %2896
      %2898 = vrot.lane.b32.xlu0 %v2628, 64
      %v2899 = vpop.permute.xlu0 %2898
      %2900 = vrot.lane.b32.xlu0 %v2629, 64
      %v2901 = vpop.permute.xlu0 %2900
      %2902 = vrot.lane.b32.xlu0 %v2630, 64
      %v2903 = vpop.permute.xlu0 %2902
      %2904 = vrot.lane.b32.xlu0 %v2631, 64
      %v2905 = vpop.permute.xlu0 %2904
      %2906 = vrot.lane.b32.xlu0 %v2632, 64
      %v2907 = vpop.permute.xlu0 %2906
      %2908 = vrot.lane.b32.xlu0 %v2633, 64
      %v2909 = vpop.permute.xlu0 %2908
      %2910 = vrot.lane.b32.xlu0 %v2634, 64
      %v2911 = vpop.permute.xlu0 %2910
      %2912 = vrot.lane.b32.xlu0 %v2635, 64
      %v2913 = vpop.permute.xlu0 %2912
      %2914 = vrot.lane.b32.xlu0 %v2636, 64
      %v2915 = vpop.permute.xlu0 %2914
      %2916 = vrot.lane.b32.xlu0 %v2637, 64
      %v2917 = vpop.permute.xlu0 %2916
      %2918 = vrot.lane.b32.xlu0 %v2638, 64
      %v2919 = vpop.permute.xlu0 %2918
      %2920 = vrot.lane.b32.xlu0 %v2639, 64
      %v2921 = vpop.permute.xlu0 %2920
      %2922 = vrot.lane.b32.xlu0 %v2640, 64
      %v2923 = vpop.permute.xlu0 %2922
      %2924 = vrot.lane.b32.xlu0 %v2641, 64
      %v2925 = vpop.permute.xlu0 %2924
      %2926 = vrot.lane.b32.xlu0 %v2642, 64
      %v2927 = vpop.permute.xlu0 %2926
      %2928 = vrot.lane.b32.xlu0 %v2643, 64
      %v2929 = vpop.permute.xlu0 %2928
      %2930 = vrot.lane.b32.xlu0 %v2644, 64
      %v2931 = vpop.permute.xlu0 %2930
      %2932 = vrot.lane.b32.xlu0 %v2645, 64
      %v2933 = vpop.permute.xlu0 %2932
      %2998 = vrot.lane.b32.xlu0 %v2518, 96
      %v2999 = vpop.permute.xlu0 %2998
      %3000 = vrot.lane.b32.xlu0 %v2519, 96
      %v3001 = vpop.permute.xlu0 %3000
      %3002 = vrot.lane.b32.xlu0 %v2520, 96
      %v3003 = vpop.permute.xlu0 %3002
      %3004 = vrot.lane.b32.xlu0 %v2521, 96
      %v3005 = vpop.permute.xlu0 %3004
      %3006 = vrot.lane.b32.xlu0 %v2522, 96
      %v3007 = vpop.permute.xlu0 %3006
      %3008 = vrot.lane.b32.xlu0 %v2523, 96
      %v3009 = vpop.permute.xlu0 %3008
      %3010 = vrot.lane.b32.xlu0 %v2524, 96
      %v3011 = vpop.permute.xlu0 %3010
      %3012 = vrot.lane.b32.xlu0 %v2525, 96
      %v3013 = vpop.permute.xlu0 %3012
      %3014 = vrot.lane.b32.xlu0 %v2526, 96
      %v3015 = vpop.permute.xlu0 %3014
      %3016 = vrot.lane.b32.xlu0 %v2527, 96
      %v3017 = vpop.permute.xlu0 %3016
      %3018 = vrot.lane.b32.xlu0 %v2528, 96
      %v3019 = vpop.permute.xlu0 %3018
      %3020 = vrot.lane.b32.xlu0 %v2529, 96
      %v3021 = vpop.permute.xlu0 %3020
      %3022 = vrot.lane.b32.xlu0 %v2530, 96
      %v3023 = vpop.permute.xlu0 %3022
      %3024 = vrot.lane.b32.xlu0 %v2531, 96
      %v3025 = vpop.permute.xlu0 %3024
      %3026 = vrot.lane.b32.xlu0 %v2532, 96
      %v3027 = vpop.permute.xlu0 %3026
      %3028 = vrot.lane.b32.xlu0 %v2533, 96
      %v3029 = vpop.permute.xlu0 %3028
      %3030 = vrot.lane.b32.xlu0 %v2534, 96
      %v3031 = vpop.permute.xlu0 %3030
      %3032 = vrot.lane.b32.xlu0 %v2535, 96
      %v3033 = vpop.permute.xlu0 %3032
      %3034 = vrot.lane.b32.xlu0 %v2536, 96
      %v3035 = vpop.permute.xlu0 %3034
      %3036 = vrot.lane.b32.xlu0 %v2537, 96
      %v3037 = vpop.permute.xlu0 %3036
      %3038 = vrot.lane.b32.xlu0 %v2538, 96
      %v3039 = vpop.permute.xlu0 %3038
      %3040 = vrot.lane.b32.xlu0 %v2539, 96
      %v3041 = vpop.permute.xlu0 %3040
      %3042 = vrot.lane.b32.xlu0 %v2540, 96
      %v3043 = vpop.permute.xlu0 %3042
      %3044 = vrot.lane.b32.xlu0 %v2541, 96
      %v3045 = vpop.permute.xlu0 %3044
      %3046 = vrot.lane.b32.xlu0 %v2542, 96
      %v3047 = vpop.permute.xlu0 %3046
      %3048 = vrot.lane.b32.xlu0 %v2543, 96
      %v3049 = vpop.permute.xlu0 %3048
      %3050 = vrot.lane.b32.xlu0 %v2544, 96
      %v3051 = vpop.permute.xlu0 %3050
      %3052 = vrot.lane.b32.xlu0 %v2545, 96
      %v3053 = vpop.permute.xlu0 %3052
      %3054 = vrot.lane.b32.xlu0 %v2546, 96
      %v3055 = vpop.permute.xlu0 %3054
      %3056 = vrot.lane.b32.xlu0 %v2547, 96
      %v3057 = vpop.permute.xlu0 %3056
      %3058 = vrot.lane.b32.xlu0 %v2548, 96
      %v3059 = vpop.permute.xlu0 %3058
      %3060 = vrot.lane.b32.xlu0 %v2549, 96
      %v3061 = vpop.permute.xlu0 %3060
      %v3094 = vsel %vm2086, %v2678, %v2743
      %v3095 = vsel %vm2086, %v2679, %v2745
      %v3096 = vsel %vm2086, %v2680, %v2747
      %v3097 = vsel %vm2086, %v2681, %v2749
      %v3098 = vsel %vm2086, %v2682, %v2751
      %v3099 = vsel %vm2086, %v2683, %v2753
      %v3100 = vsel %vm2086, %v2684, %v2755
      %v3101 = vsel %vm2086, %v2685, %v2757
      %v3102 = vsel %vm2086, %v2686, %v2759
      %v3103 = vsel %vm2086, %v2687, %v2761
      %v3104 = vsel %vm2086, %v2688, %v2763
      %v3105 = vsel %vm2086, %v2689, %v2765
      %v3106 = vsel %vm2086, %v2690, %v2767
      %v3107 = vsel %vm2086, %v2691, %v2769
      %v3108 = vsel %vm2086, %v2692, %v2771
      %v3109 = vsel %vm2086, %v2693, %v2773
      %v3110 = vsel %vm2086, %v2694, %v2775
      %v3111 = vsel %vm2086, %v2695, %v2777
      %v3112 = vsel %vm2086, %v2696, %v2779
      %v3113 = vsel %vm2086, %v2697, %v2781
      %v3114 = vsel %vm2086, %v2698, %v2783
      %v3115 = vsel %vm2086, %v2699, %v2785
      %v3116 = vsel %vm2086, %v2700, %v2787
      %v3117 = vsel %vm2086, %v2701, %v2789
      %v3118 = vsel %vm2086, %v2702, %v2791
      %v3119 = vsel %vm2086, %v2703, %v2793
      %v3120 = vsel %vm2086, %v2704, %v2795
      %v3121 = vsel %vm2086, %v2705, %v2797
      %v3122 = vsel %vm2086, %v2706, %v2799
      %v3123 = vsel %vm2086, %v2707, %v2801
      %v3124 = vsel %vm2086, %v2708, %v2803
      %v3125 = vsel %vm2086, %v2709, %v2805
      %v3126 = vsel %vm2119, %v3094, %v2871
      %v3127 = vsel %vm2119, %v3095, %v2873
      %v3128 = vsel %vm2119, %v3096, %v2875
      %v3129 = vsel %vm2119, %v3097, %v2877
      %v3130 = vsel %vm2119, %v3098, %v2879
      %v3131 = vsel %vm2119, %v3099, %v2881
      %v3132 = vsel %vm2119, %v3100, %v2883
      %v3133 = vsel %vm2119, %v3101, %v2885
      %v3134 = vsel %vm2119, %v3102, %v2887
      %v3135 = vsel %vm2119, %v3103, %v2889
      %v3136 = vsel %vm2119, %v3104, %v2891
      %v3137 = vsel %vm2119, %v3105, %v2893
      %v3138 = vsel %vm2119, %v3106, %v2895
      %v3139 = vsel %vm2119, %v3107, %v2897
      %v3140 = vsel %vm2119, %v3108, %v2899
      %v3141 = vsel %vm2119, %v3109, %v2901
      %v3142 = vsel %vm2119, %v3110, %v2903
      %v3143 = vsel %vm2119, %v3111, %v2905
      %v3144 = vsel %vm2119, %v3112, %v2907
      %v3145 = vsel %vm2119, %v3113, %v2909
      %v3146 = vsel %vm2119, %v3114, %v2911
      %v3147 = vsel %vm2119, %v3115, %v2913
      %v3148 = vsel %vm2119, %v3116, %v2915
      %v3149 = vsel %vm2119, %v3117, %v2917
      %v3150 = vsel %vm2119, %v3118, %v2919
      %v3151 = vsel %vm2119, %v3119, %v2921
      %v3152 = vsel %vm2119, %v3120, %v2923
      %v3153 = vsel %vm2119, %v3121, %v2925
      %v3154 = vsel %vm2119, %v3122, %v2927
      %v3155 = vsel %vm2119, %v3123, %v2929
      %v3156 = vsel %vm2119, %v3124, %v2931
      %v3157 = vsel %vm2119, %v3125, %v2933
      %v3158 = vsel %vm2152, %v3126, %v2999
      %v3159 = vsel %vm2152, %v3127, %v3001
      %v3160 = vsel %vm2152, %v3128, %v3003
      %v3161 = vsel %vm2152, %v3129, %v3005
      %v3162 = vsel %vm2152, %v3130, %v3007
      %v3163 = vsel %vm2152, %v3131, %v3009
      %v3164 = vsel %vm2152, %v3132, %v3011
      %v3165 = vsel %vm2152, %v3133, %v3013
      %v3166 = vsel %vm2152, %v3134, %v3015
      %v3167 = vsel %vm2152, %v3135, %v3017
      %v3168 = vsel %vm2152, %v3136, %v3019
      %v3169 = vsel %vm2152, %v3137, %v3021
      %v3170 = vsel %vm2152, %v3138, %v3023
      %v3171 = vsel %vm2152, %v3139, %v3025
      %v3172 = vsel %vm2152, %v3140, %v3027
      %v3173 = vsel %vm2152, %v3141, %v3029
      %v3174 = vsel %vm2152, %v3142, %v3031
      %v3175 = vsel %vm2152, %v3143, %v3033
      %v3176 = vsel %vm2152, %v3144, %v3035
      %v3177 = vsel %vm2152, %v3145, %v3037
      %v3178 = vsel %vm2152, %v3146, %v3039
      %v3179 = vsel %vm2152, %v3147, %v3041
      %v3180 = vsel %vm2152, %v3148, %v3043
      %v3181 = vsel %vm2152, %v3149, %v3045
      %v3182 = vsel %vm2152, %v3150, %v3047
      %v3183 = vsel %vm2152, %v3151, %v3049
      %v3184 = vsel %vm2152, %v3152, %v3051
      %v3185 = vsel %vm2152, %v3153, %v3053
      %v3186 = vsel %vm2152, %v3154, %v3055
      %v3187 = vsel %vm2152, %v3155, %v3057
      %v3188 = vsel %vm2152, %v3156, %v3059
      %v3189 = vsel %vm2152, %v3157, %v3061
      %v3190 = vpack.c.bf16 %v3159, %v3158
      %v3191 = vpack.c.bf16 %v3161, %v3160
      %v3192 = vpack.c.bf16 %v3163, %v3162
      %v3193 = vpack.c.bf16 %v3165, %v3164
      %v3194 = vpack.c.bf16 %v3167, %v3166
      %v3195 = vpack.c.bf16 %v3169, %v3168
      %v3196 = vpack.c.bf16 %v3171, %v3170
      %v3197 = vpack.c.bf16 %v3173, %v3172
      %v3198 = vpack.c.bf16 %v3175, %v3174
      %v3199 = vpack.c.bf16 %v3177, %v3176
      %v3200 = vpack.c.bf16 %v3179, %v3178
      %v3201 = vpack.c.bf16 %v3181, %v3180
      %v3202 = vpack.c.bf16 %v3183, %v3182
      %v3203 = vpack.c.bf16 %v3185, %v3184
      %v3204 = vpack.c.bf16 %v3187, %v3186
      %v3205 = vpack.c.bf16 %v3189, %v3188
      %v3206 = vld [vmem:[%s3] sm:$0xf]
      %v3207 = vld [vmem:[%s3 + $0x4] sm:$0xf]
      %v3208 = vld [vmem:[%s3 + $0x8] sm:$0xf]
      %v3209 = vld [vmem:[%s3 + $0xc] sm:$0xf]
      %v3210 = vld [vmem:[%s3 + $0x10] sm:$0xf]
      %v3211 = vld [vmem:[%s3 + $0x14] sm:$0xf]
      %v3212 = vld [vmem:[%s3 + $0x18] sm:$0xf]
      %v3213 = vld [vmem:[%s3 + $0x1c] sm:$0xf]
      %v3214 = vld [vmem:[%s3 + $0x20] sm:$0xf]
      %v3215 = vld [vmem:[%s3 + $0x24] sm:$0xf]
      %v3216 = vld [vmem:[%s3 + $0x28] sm:$0xf]
      %v3217 = vld [vmem:[%s3 + $0x2c] sm:$0xf]
      %v3218 = vld [vmem:[%s3 + $0x30] sm:$0xf]
      %v3219 = vld [vmem:[%s3 + $0x34] sm:$0xf]
      %v3220 = vld [vmem:[%s3 + $0x38] sm:$0xf]
      %v3221 = vld [vmem:[%s3 + $0x3c] sm:$0xf]
      %v3222 = vld [vmem:[%s4] sm:$0x1]
      %v3224 = vperm.slane %v3222, 0
      %v3242 = vunpack.c.l.b16 %v3206
      %v3243 = vunpack.c.l.b16 %v3207
      %v3244 = vunpack.c.l.b16 %v3208
      %v3245 = vunpack.c.l.b16 %v3209
      %v3246 = vunpack.c.l.b16 %v3210
      %v3247 = vunpack.c.l.b16 %v3211
      %v3248 = vunpack.c.l.b16 %v3212
      %v3249 = vunpack.c.l.b16 %v3213
      %v3250 = vunpack.c.l.b16 %v3214
      %v3251 = vunpack.c.l.b16 %v3215
      %v3252 = vunpack.c.l.b16 %v3216
      %v3253 = vunpack.c.l.b16 %v3217
      %v3254 = vunpack.c.l.b16 %v3218
      %v3255 = vunpack.c.l.b16 %v3219
      %v3256 = vunpack.c.l.b16 %v3220
      %v3257 = vunpack.c.l.b16 %v3221
      %v3258 = vpack.c.b16 %v3243, %v3242
      %v3259 = vpack.c.b16 %v3245, %v3244
      %v3260 = vpack.c.b16 %v3247, %v3246
      %v3261 = vpack.c.b16 %v3249, %v3248
      %v3262 = vpack.c.b16 %v3251, %v3250
      %v3263 = vpack.c.b16 %v3253, %v3252
      %v3264 = vpack.c.b16 %v3255, %v3254
      %v3265 = vpack.c.b16 %v3257, %v3256
      %3274 = vmatpush.bf16.msra.mxu0 %v3265
      %3275 = vmatpush.bf16.msra.mxu0 %v3264
      %3276 = vmatpush.bf16.msra.mxu0 %v3263
      %3277 = vmatpush.bf16.msra.mxu0 %v3262
      %3278 = vmatpush.bf16.msra.mxu0 %v3261
      %3279 = vmatpush.bf16.msra.mxu0 %v3260
      %3280 = vmatpush.bf16.msra.mxu0 %v3259
      %3281 = vmatpush.bf16.msra.mxu0 %v3258
      %3282 = vmatmul.bf16.gmra.mxu0 %v3190
      %v3283 = vpop.f32.mrf.mxu0
      %v3284 = vadd.f32 %v3224, %v3283
      %v3285 = vpop.f32.mrf.mxu0
      %v3286 = vadd.f32 %v3224, %v3285
      %3287 = vmatmul.bf16.gmra.mxu0 %v3191
      %v3288 = vpop.f32.mrf.mxu0
      %v3289 = vadd.f32 %v3224, %v3288
      %v3290 = vpop.f32.mrf.mxu0
      %v3291 = vadd.f32 %v3224, %v3290
      %3292 = vmatmul.bf16.gmra.mxu0 %v3192
      %v3293 = vpop.f32.mrf.mxu0
      %v3294 = vadd.f32 %v3224, %v3293
      %v3295 = vpop.f32.mrf.mxu0
      %v3296 = vadd.f32 %v3224, %v3295
      %3297 = vmatmul.bf16.gmra.mxu0 %v3193
      %v3298 = vpop.f32.mrf.mxu0
      %v3299 = vadd.f32 %v3224, %v3298
      %v3300 = vpop.f32.mrf.mxu0
      %v3301 = vadd.f32 %v3224, %v3300
      %3302 = vmatmul.bf16.gmra.mxu0 %v3194
      %v3303 = vpop.f32.mrf.mxu0
      %v3304 = vadd.f32 %v3224, %v3303
      %v3305 = vpop.f32.mrf.mxu0
      %v3306 = vadd.f32 %v3224, %v3305
      %3307 = vmatmul.bf16.gmra.mxu0 %v3195
      %v3308 = vpop.f32.mrf.mxu0
      %v3309 = vadd.f32 %v3224, %v3308
      %v3310 = vpop.f32.mrf.mxu0
      %v3311 = vadd.f32 %v3224, %v3310
      %3312 = vmatmul.bf16.gmra.mxu0 %v3196
      %v3313 = vpop.f32.mrf.mxu0
      %v3314 = vadd.f32 %v3224, %v3313
      %v3315 = vpop.f32.mrf.mxu0
      %v3316 = vadd.f32 %v3224, %v3315
      %3317 = vmatmul.bf16.gmra.mxu0 %v3197
      %v3318 = vpop.f32.mrf.mxu0
      %v3319 = vadd.f32 %v3224, %v3318
      %v3320 = vpop.f32.mrf.mxu0
      %v3321 = vadd.f32 %v3224, %v3320
      %3322 = vmatmul.bf16.gmra.mxu0 %v3198
      %v3323 = vpop.f32.mrf.mxu0
      %v3324 = vadd.f32 %v3224, %v3323
      %v3325 = vpop.f32.mrf.mxu0
      %v3326 = vadd.f32 %v3224, %v3325
      %3327 = vmatmul.bf16.gmra.mxu0 %v3199
      %v3328 = vpop.f32.mrf.mxu0
      %v3329 = vadd.f32 %v3224, %v3328
      %v3330 = vpop.f32.mrf.mxu0
      %v3331 = vadd.f32 %v3224, %v3330
      %3332 = vmatmul.bf16.gmra.mxu0 %v3200
      %v3333 = vpop.f32.mrf.mxu0
      %v3334 = vadd.f32 %v3224, %v3333
      %v3335 = vpop.f32.mrf.mxu0
      %v3336 = vadd.f32 %v3224, %v3335
      %3337 = vmatmul.bf16.gmra.mxu0 %v3201
      %v3338 = vpop.f32.mrf.mxu0
      %v3339 = vadd.f32 %v3224, %v3338
      %v3340 = vpop.f32.mrf.mxu0
      %v3341 = vadd.f32 %v3224, %v3340
      %3342 = vmatmul.bf16.gmra.mxu0 %v3202
      %v3343 = vpop.f32.mrf.mxu0
      %v3344 = vadd.f32 %v3224, %v3343
      %v3345 = vpop.f32.mrf.mxu0
      %v3346 = vadd.f32 %v3224, %v3345
      %3347 = vmatmul.bf16.gmra.mxu0 %v3203
      %v3348 = vpop.f32.mrf.mxu0
      %v3349 = vadd.f32 %v3224, %v3348
      %v3350 = vpop.f32.mrf.mxu0
      %v3351 = vadd.f32 %v3224, %v3350
      %3352 = vmatmul.bf16.gmra.mxu0 %v3204
      %v3353 = vpop.f32.mrf.mxu0
      %v3354 = vadd.f32 %v3224, %v3353
      %v3355 = vpop.f32.mrf.mxu0
      %v3356 = vadd.f32 %v3224, %v3355
      %3357 = vmatmul.bf16.gmra.mxu0 %v3205
      %v3358 = vpop.f32.mrf.mxu0
      %v3359 = vadd.f32 %v3224, %v3358
      %v3360 = vpop.f32.mrf.mxu0
      %v3361 = vadd.f32 %v3224, %v3360
      %3362 = vdwg.mxu0
      %v3363 = vsub.f32 0.0, %v3284
      %v3364 = vsub.f32 0.0, %v3286
      %v3365 = vsub.f32 0.0, %v3289
      %v3366 = vsub.f32 0.0, %v3291
      %v3367 = vsub.f32 0.0, %v3294
      %v3368 = vsub.f32 0.0, %v3296
      %v3369 = vsub.f32 0.0, %v3299
      %v3370 = vsub.f32 0.0, %v3301
      %v3371 = vsub.f32 0.0, %v3304
      %v3372 = vsub.f32 0.0, %v3306
      %v3373 = vsub.f32 0.0, %v3309
      %v3374 = vsub.f32 0.0, %v3311
      %v3375 = vsub.f32 0.0, %v3314
      %v3376 = vsub.f32 0.0, %v3316
      %v3377 = vsub.f32 0.0, %v3319
      %v3378 = vsub.f32 0.0, %v3321
      %v3379 = vsub.f32 0.0, %v3324
      %v3380 = vsub.f32 0.0, %v3326
      %v3381 = vsub.f32 0.0, %v3329
      %v3382 = vsub.f32 0.0, %v3331
      %v3383 = vsub.f32 0.0, %v3334
      %v3384 = vsub.f32 0.0, %v3336
      %v3385 = vsub.f32 0.0, %v3339
      %v3386 = vsub.f32 0.0, %v3341
      %v3387 = vsub.f32 0.0, %v3344
      %v3388 = vsub.f32 0.0, %v3346
      %v3389 = vsub.f32 0.0, %v3349
      %v3390 = vsub.f32 0.0, %v3351
      %v3391 = vsub.f32 0.0, %v3354
      %v3392 = vsub.f32 0.0, %v3356
      %v3393 = vsub.f32 0.0, %v3359
      %v3394 = vsub.f32 0.0, %v3361
      %v3395 = vmul.f32 %v3363, 1.442695
      %v3396 = vpow.pop %v3395
      %v3397 = vmul.f32 %v3364, 1.442695
      %v3398 = vpow.pop %v3397
      %v3399 = vmul.f32 %v3365, 1.442695
      %v3400 = vpow.pop %v3399
      %v3401 = vmul.f32 %v3366, 1.442695
      %v3402 = vpow.pop %v3401
      %v3403 = vmul.f32 %v3367, 1.442695
      %v3404 = vpow.pop %v3403
      %v3405 = vmul.f32 %v3368, 1.442695
      %v3406 = vpow.pop %v3405
      %v3407 = vmul.f32 %v3369, 1.442695
      %v3408 = vpow.pop %v3407
      %v3409 = vmul.f32 %v3370, 1.442695
      %v3410 = vpow.pop %v3409
      %v3411 = vmul.f32 %v3371, 1.442695
      %v3412 = vpow.pop %v3411
      %v3413 = vmul.f32 %v3372, 1.442695
      %v3414 = vpow.pop %v3413
      %v3415 = vmul.f32 %v3373, 1.442695
      %v3416 = vpow.pop %v3415
      %v3417 = vmul.f32 %v3374, 1.442695
      %v3418 = vpow.pop %v3417
      %v3419 = vmul.f32 %v3375, 1.442695
      %v3420 = vpow.pop %v3419
      %v3421 = vmul.f32 %v3376, 1.442695
      %v3422 = vpow.pop %v3421
      %v3423 = vmul.f32 %v3377, 1.442695
      %v3424 = vpow.pop %v3423
      %v3425 = vmul.f32 %v3378, 1.442695
      %v3426 = vpow.pop %v3425
      %v3427 = vmul.f32 %v3379, 1.442695
      %v3428 = vpow.pop %v3427
      %v3429 = vmul.f32 %v3380, 1.442695
      %v3430 = vpow.pop %v3429
      %v3431 = vmul.f32 %v3381, 1.442695
      %v3432 = vpow.pop %v3431
      %v3433 = vmul.f32 %v3382, 1.442695
      %v3434 = vpow.pop %v3433
      %v3435 = vmul.f32 %v3383, 1.442695
      %v3436 = vpow.pop %v3435
      %v3437 = vmul.f32 %v3384, 1.442695
      %v3438 = vpow.pop %v3437
      %v3439 = vmul.f32 %v3385, 1.442695
      %v3440 = vpow.pop %v3439
      %v3441 = vmul.f32 %v3386, 1.442695
      %v3442 = vpow.pop %v3441
      %v3443 = vmul.f32 %v3387, 1.442695
      %v3444 = vpow.pop %v3443
      %v3445 = vmul.f32 %v3388, 1.442695
      %v3446 = vpow.pop %v3445
      %v3447 = vmul.f32 %v3389, 1.442695
      %v3448 = vpow.pop %v3447
      %v3449 = vmul.f32 %v3390, 1.442695
      %v3450 = vpow.pop %v3449
      %v3451 = vmul.f32 %v3391, 1.442695
      %v3452 = vpow.pop %v3451
      %v3453 = vmul.f32 %v3392, 1.442695
      %v3454 = vpow.pop %v3453
      %v3455 = vmul.f32 %v3393, 1.442695
      %v3456 = vpow.pop %v3455
      %v3457 = vmul.f32 %v3394, 1.442695
      %v3458 = vpow.pop %v3457
      %v3459 = vadd.f32 %v3396, 1.0
      %v3460 = vadd.f32 %v3398, 1.0
      %v3461 = vadd.f32 %v3400, 1.0
      %v3462 = vadd.f32 %v3402, 1.0
      %v3463 = vadd.f32 %v3404, 1.0
      %v3464 = vadd.f32 %v3406, 1.0
      %v3465 = vadd.f32 %v3408, 1.0
      %v3466 = vadd.f32 %v3410, 1.0
      %v3467 = vadd.f32 %v3412, 1.0
      %v3468 = vadd.f32 %v3414, 1.0
      %v3469 = vadd.f32 %v3416, 1.0
      %v3470 = vadd.f32 %v3418, 1.0
      %v3471 = vadd.f32 %v3420, 1.0
      %v3472 = vadd.f32 %v3422, 1.0
      %v3473 = vadd.f32 %v3424, 1.0
      %v3474 = vadd.f32 %v3426, 1.0
      %v3475 = vadd.f32 %v3428, 1.0
      %v3476 = vadd.f32 %v3430, 1.0
      %v3477 = vadd.f32 %v3432, 1.0
      %v3478 = vadd.f32 %v3434, 1.0
      %v3479 = vadd.f32 %v3436, 1.0
      %v3480 = vadd.f32 %v3438, 1.0
      %v3481 = vadd.f32 %v3440, 1.0
      %v3482 = vadd.f32 %v3442, 1.0
      %v3483 = vadd.f32 %v3444, 1.0
      %v3484 = vadd.f32 %v3446, 1.0
      %v3485 = vadd.f32 %v3448, 1.0
      %v3486 = vadd.f32 %v3450, 1.0
      %v3487 = vadd.f32 %v3452, 1.0
      %v3488 = vadd.f32 %v3454, 1.0
      %v3489 = vadd.f32 %v3456, 1.0
      %v3490 = vadd.f32 %v3458, 1.0
      %v3491 = vrcp.pop %v3459
      %v3492 = vrcp.pop %v3460
      %v3493 = vrcp.pop %v3461
      %v3494 = vrcp.pop %v3462
      %v3495 = vrcp.pop %v3463
      %v3496 = vrcp.pop %v3464
      %v3497 = vrcp.pop %v3465
      %v3498 = vrcp.pop %v3466
      %v3499 = vrcp.pop %v3467
      %v3500 = vrcp.pop %v3468
      %v3501 = vrcp.pop %v3469
      %v3502 = vrcp.pop %v3470
      %v3503 = vrcp.pop %v3471
      %v3504 = vrcp.pop %v3472
      %v3505 = vrcp.pop %v3473
      %v3506 = vrcp.pop %v3474
      %v3507 = vrcp.pop %v3475
      %v3508 = vrcp.pop %v3476
      %v3509 = vrcp.pop %v3477
      %v3510 = vrcp.pop %v3478
      %v3511 = vrcp.pop %v3479
      %v3512 = vrcp.pop %v3480
      %v3513 = vrcp.pop %v3481
      %v3514 = vrcp.pop %v3482
      %v3515 = vrcp.pop %v3483
      %v3516 = vrcp.pop %v3484
      %v3517 = vrcp.pop %v3485
      %v3518 = vrcp.pop %v3486
      %v3519 = vrcp.pop %v3487
      %v3520 = vrcp.pop %v3488
      %v3521 = vrcp.pop %v3489
      %v3522 = vrcp.pop %v3490
      %3555 = vrot.lane.b32.xlu0 %v3491, 96
      %v3556 = vpop.permute.xlu0 %3555
      %3557 = vrot.lane.b32.xlu0 %v3492, 96
      %v3558 = vpop.permute.xlu0 %3557
      %3559 = vrot.lane.b32.xlu0 %v3493, 96
      %v3560 = vpop.permute.xlu0 %3559
      %3561 = vrot.lane.b32.xlu0 %v3494, 96
      %v3562 = vpop.permute.xlu0 %3561
      %3563 = vrot.lane.b32.xlu0 %v3495, 96
      %v3564 = vpop.permute.xlu0 %3563
      %3565 = vrot.lane.b32.xlu0 %v3496, 96
      %v3566 = vpop.permute.xlu0 %3565
      %3567 = vrot.lane.b32.xlu0 %v3497, 96
      %v3568 = vpop.permute.xlu0 %3567
      %3569 = vrot.lane.b32.xlu0 %v3498, 96
      %v3570 = vpop.permute.xlu0 %3569
      %3571 = vrot.lane.b32.xlu0 %v3499, 96
      %v3572 = vpop.permute.xlu0 %3571
      %3573 = vrot.lane.b32.xlu0 %v3500, 96
      %v3574 = vpop.permute.xlu0 %3573
      %3575 = vrot.lane.b32.xlu0 %v3501, 96
      %v3576 = vpop.permute.xlu0 %3575
      %3577 = vrot.lane.b32.xlu0 %v3502, 96
      %v3578 = vpop.permute.xlu0 %3577
      %3579 = vrot.lane.b32.xlu0 %v3503, 96
      %v3580 = vpop.permute.xlu0 %3579
      %3581 = vrot.lane.b32.xlu0 %v3504, 96
      %v3582 = vpop.permute.xlu0 %3581
      %3583 = vrot.lane.b32.xlu0 %v3505, 96
      %v3584 = vpop.permute.xlu0 %3583
      %3585 = vrot.lane.b32.xlu0 %v3506, 96
      %v3586 = vpop.permute.xlu0 %3585
      %3587 = vrot.lane.b32.xlu0 %v3507, 96
      %v3588 = vpop.permute.xlu0 %3587
      %3589 = vrot.lane.b32.xlu0 %v3508, 96
      %v3590 = vpop.permute.xlu0 %3589
      %3591 = vrot.lane.b32.xlu0 %v3509, 96
      %v3592 = vpop.permute.xlu0 %3591
      %3593 = vrot.lane.b32.xlu0 %v3510, 96
      %v3594 = vpop.permute.xlu0 %3593
      %3595 = vrot.lane.b32.xlu0 %v3511, 96
      %v3596 = vpop.permute.xlu0 %3595
      %3597 = vrot.lane.b32.xlu0 %v3512, 96
      %v3598 = vpop.permute.xlu0 %3597
      %3599 = vrot.lane.b32.xlu0 %v3513, 96
      %v3600 = vpop.permute.xlu0 %3599
      %3601 = vrot.lane.b32.xlu0 %v3514, 96
      %v3602 = vpop.permute.xlu0 %3601
      %3603 = vrot.lane.b32.xlu0 %v3515, 96
      %v3604 = vpop.permute.xlu0 %3603
      %3605 = vrot.lane.b32.xlu0 %v3516, 96
      %v3606 = vpop.permute.xlu0 %3605
      %3607 = vrot.lane.b32.xlu0 %v3517, 96
      %v3608 = vpop.permute.xlu0 %3607
      %3609 = vrot.lane.b32.xlu0 %v3518, 96
      %v3610 = vpop.permute.xlu0 %3609
      %3611 = vrot.lane.b32.xlu0 %v3519, 96
      %v3612 = vpop.permute.xlu0 %3611
      %3613 = vrot.lane.b32.xlu0 %v3520, 96
      %v3614 = vpop.permute.xlu0 %3613
      %3615 = vrot.lane.b32.xlu0 %v3521, 96
      %v3616 = vpop.permute.xlu0 %3615
      %3617 = vrot.lane.b32.xlu0 %v3522, 96
      %v3618 = vpop.permute.xlu0 %3617
      %v3651 = vmul.f32 %v3284, %v3556
      %v3652 = vmul.f32 %v3286, %v3558
      %v3653 = vmul.f32 %v3289, %v3560
      %v3654 = vmul.f32 %v3291, %v3562
      %v3655 = vmul.f32 %v3294, %v3564
      %v3656 = vmul.f32 %v3296, %v3566
      %v3657 = vmul.f32 %v3299, %v3568
      %v3658 = vmul.f32 %v3301, %v3570
      %v3659 = vmul.f32 %v3304, %v3572
      %v3660 = vmul.f32 %v3306, %v3574
      %v3661 = vmul.f32 %v3309, %v3576
      %v3662 = vmul.f32 %v3311, %v3578
      %v3663 = vmul.f32 %v3314, %v3580
      %v3664 = vmul.f32 %v3316, %v3582
      %v3665 = vmul.f32 %v3319, %v3584
      %v3666 = vmul.f32 %v3321, %v3586
      %v3667 = vmul.f32 %v3324, %v3588
      %v3668 = vmul.f32 %v3326, %v3590
      %v3669 = vmul.f32 %v3329, %v3592
      %v3670 = vmul.f32 %v3331, %v3594
      %v3671 = vmul.f32 %v3334, %v3596
      %v3672 = vmul.f32 %v3336, %v3598
      %v3673 = vmul.f32 %v3339, %v3600
      %v3674 = vmul.f32 %v3341, %v3602
      %v3675 = vmul.f32 %v3344, %v3604
      %v3676 = vmul.f32 %v3346, %v3606
      %v3677 = vmul.f32 %v3349, %v3608
      %v3678 = vmul.f32 %v3351, %v3610
      %v3679 = vmul.f32 %v3354, %v3612
      %v3680 = vmul.f32 %v3356, %v3614
      %v3681 = vmul.f32 %v3359, %v3616
      %v3682 = vmul.f32 %v3361, %v3618
      %v3683 = vadd.f32 %v1509, %v3651
      %v3684 = vadd.f32 %v1510, %v3652
      %v3685 = vadd.f32 %v1511, %v3653
      %v3686 = vadd.f32 %v1512, %v3654
      %v3687 = vadd.f32 %v1513, %v3655
      %v3688 = vadd.f32 %v1514, %v3656
      %v3689 = vadd.f32 %v1515, %v3657
      %v3690 = vadd.f32 %v1516, %v3658
      %v3691 = vadd.f32 %v1517, %v3659
      %v3692 = vadd.f32 %v1518, %v3660
      %v3693 = vadd.f32 %v1519, %v3661
      %v3694 = vadd.f32 %v1520, %v3662
      %v3695 = vadd.f32 %v1521, %v3663
      %v3696 = vadd.f32 %v1522, %v3664
      %v3697 = vadd.f32 %v1523, %v3665
      %v3698 = vadd.f32 %v1524, %v3666
      %v3699 = vadd.f32 %v1525, %v3667
      %v3700 = vadd.f32 %v1526, %v3668
      %v3701 = vadd.f32 %v1527, %v3669
      %v3702 = vadd.f32 %v1528, %v3670
      %v3703 = vadd.f32 %v1529, %v3671
      %v3704 = vadd.f32 %v1530, %v3672
      %v3705 = vadd.f32 %v1531, %v3673
      %v3706 = vadd.f32 %v1532, %v3674
      %v3707 = vadd.f32 %v1533, %v3675
      %v3708 = vadd.f32 %v1534, %v3676
      %v3709 = vadd.f32 %v1535, %v3677
      %v3710 = vadd.f32 %v1536, %v3678
      %v3711 = vadd.f32 %v1537, %v3679
      %v3712 = vadd.f32 %v1538, %v3680
      %v3713 = vadd.f32 %v1539, %v3681
      %v3714 = vadd.f32 %v1540, %v3682
      %3715 = vst.msk [vmem:[%s226] sm:$0xff] %vm2086, %v3683
      %3716 = vst.msk [vmem:[%s226 + $0x8] sm:$0xff] %vm2086, %v3684
      %3717 = vst.msk [vmem:[%s226 + $0x10] sm:$0xff] %vm2086, %v3685
      %3718 = vst.msk [vmem:[%s226 + $0x18] sm:$0xff] %vm2086, %v3686
      %3719 = vst.msk [vmem:[%s226 + $0x20] sm:$0xff] %vm2086, %v3687
      %3720 = vst.msk [vmem:[%s226 + $0x28] sm:$0xff] %vm2086, %v3688
      %3721 = vst.msk [vmem:[%s226 + $0x30] sm:$0xff] %vm2086, %v3689
      %3722 = vst.msk [vmem:[%s226 + $0x38] sm:$0xff] %vm2086, %v3690
      %3723 = vst.msk [vmem:[%s226 + $0x40] sm:$0xff] %vm2086, %v3691
      %3724 = vst.msk [vmem:[%s226 + $0x48] sm:$0xff] %vm2086, %v3692
      %3725 = vst.msk [vmem:[%s226 + $0x50] sm:$0xff] %vm2086, %v3693
      %3726 = vst.msk [vmem:[%s226 + $0x58] sm:$0xff] %vm2086, %v3694
      %3727 = vst.msk [vmem:[%s226 + $0x60] sm:$0xff] %vm2086, %v3695
      %3728 = vst.msk [vmem:[%s226 + $0x68] sm:$0xff] %vm2086, %v3696
      %3729 = vst.msk [vmem:[%s226 + $0x70] sm:$0xff] %vm2086, %v3697
      %3730 = vst.msk [vmem:[%s226 + $0x78] sm:$0xff] %vm2086, %v3698
      %3731 = vst.msk [vmem:[%s226 + $0x80] sm:$0xff] %vm2086, %v3699
      %3732 = vst.msk [vmem:[%s226 + $0x88] sm:$0xff] %vm2086, %v3700
      %3733 = vst.msk [vmem:[%s226 + $0x90] sm:$0xff] %vm2086, %v3701
      %3734 = vst.msk [vmem:[%s226 + $0x98] sm:$0xff] %vm2086, %v3702
      %3735 = vst.msk [vmem:[%s226 + $0xa0] sm:$0xff] %vm2086, %v3703
      %3736 = vst.msk [vmem:[%s226 + $0xa8] sm:$0xff] %vm2086, %v3704
      %3737 = vst.msk [vmem:[%s226 + $0xb0] sm:$0xff] %vm2086, %v3705
      %3738 = vst.msk [vmem:[%s226 + $0xb8] sm:$0xff] %vm2086, %v3706
      %3739 = vst.msk [vmem:[%s226 + $0xc0] sm:$0xff] %vm2086, %v3707
      %3740 = vst.msk [vmem:[%s226 + $0xc8] sm:$0xff] %vm2086, %v3708
      %3741 = vst.msk [vmem:[%s226 + $0xd0] sm:$0xff] %vm2086, %v3709
      %3742 = vst.msk [vmem:[%s226 + $0xd8] sm:$0xff] %vm2086, %v3710
      %3743 = vst.msk [vmem:[%s226 + $0xe0] sm:$0xff] %vm2086, %v3711
      %3744 = vst.msk [vmem:[%s226 + $0xe8] sm:$0xff] %vm2086, %v3712
      %3745 = vst.msk [vmem:[%s226 + $0xf0] sm:$0xff] %vm2086, %v3713
      %3746 = vst.msk [vmem:[%s226 + $0xf8] sm:$0xff] %vm2086, %v3714
      %s3747 = smul.u32 32, %s16
      %p3748 = scmp.lt.s32.totalorder %s3747, 63
      %s3749 = scalar_select %p3748, %s3747, 63
      %s3750 = smul.addr %s3749, 8
      %s3751 = scalar_lea.vmem %s5, %s3750
      // Predicated region
      $region41: #{tpu_custom_call.1} parent=39 // pred_check
        %p3752 = pneg %p144
      $region42: #{tpu_custom_call.1} parent=39 // pred_check_branch
        %3754 = sbr.rel (%p3752) target = $region44
      $region43: #{tpu_custom_call.1} parent=39 // pred_region
        %s3755 = smul.u32 32, %s16
      $region44: #{tpu_custom_call.1} parent=39 // pred_fallthru
        _
    $region40: #{tpu_custom_call.1} parent=5 // pred_fallthru
      _
    %p3756 = scmp.le.s32.totalorder 2, %s11
    // Predicated region
    $region45: #{tpu_custom_call.1} parent=5 // pred_check
      %p3757 = pneg %p3756
    $region46: #{tpu_custom_call.1} parent=5 // pred_check_branch
      %3759 = sbr.rel (%p3757) target = $region48
    $region47: #{tpu_custom_call.1} parent=5 // pred_region
      %s3760 = ssub.s32 %s11, 2
      // Predicated region
      $region49: #{tpu_custom_call.1} parent=47 // pred_check
        %p3761 = pneg %p150
      $region50: #{tpu_custom_call.1} parent=47 // pred_check_branch
        %3763 = sbr.rel (%p3761) target = $region52
      $region51: #{tpu_custom_call.1} parent=47 // pred_region
        %s3764 = smul.u32 32, %s17
        %p3765 = scmp.lt.s32.totalorder %s3764, 63
        %s3766 = scalar_select %p3765, %s3764, 63
        %s3767 = smul.addr %s3766, 8
        %s3768 = scalar_lea.vmem %s5, %s3767
      $region52: #{tpu_custom_call.1} parent=47 // pred_fallthru
        _
    $region48: #{tpu_custom_call.1} parent=5 // pred_fallthru
      _
  $region6: #{tpu_custom_call.1} parent=0 // loop_footer
    %s15 = sadd.s32 1, %s11
  $region7: #{tpu_custom_call.1} parent=0 // loop_footer_branch
    %10 = sbr.rel target = $region3
  $region8: #{tpu_custom_call.1} parent=0 // loop_exit
    _

</llo_original>
